<compile_context>
chip_gen: v7x
topology: tpu7x:2x2x1
jax: 0.10.0
libtpu: 0.0.40
codegen_flags: <defaults>
</compile_context>

<pallas_src>
import functools

import jax
import jax.numpy as jnp
from jax.experimental import pallas as pl
from jax.experimental.pallas import tpu as pltpu


def encoder_kernel(
    x_ref,       # (TM*N, 6)   f32  : TM point groups, channels-last
    w1_ref,      # (6, 128)    bf16 : first_conv[0] weight * BN1 scale
    t1_ref,      # (1, 128)    f32  : b1*s1 + t1        (folded BN1 shift)
    w23_ref,     # (128, 768)  bf16 : [w2 | (w2@w3p)*s2] (merged LHS-h matmuls)
    b2_ref,      # (1, 256)    f32  : first_conv[3] bias (applied after point-max)
    w3g_ref,     # (256, 512)  bf16 : second_conv[0] global half * s2
    b23_ref,     # (1, 512)    f32  : (b2@w3p + b3)*s2 + t2
    w4_ref,      # (512, Cp)   bf16 : second_conv[3] weight
    b4_ref,      # (1, Cp)     f32  : second_conv[3] bias (applied after point-max)
    out_ref,     # (TM, Cp)    f32
    *, tm, n,
):
    # Hoist parameter reads (each ref read exactly once).
    w1 = w1_ref[...]
    t1 = t1_ref[...]
    w23 = w23_ref[...]
    b2 = b2_ref[...]
    w3g = w3g_ref[...]
    b23 = b23_ref[...]
    w4 = w4_ref[...]
    b4 = b4_ref[...]

    # Cast input to bf16 right after the block load (input HBM traffic stays
    # a single f32 read in the wrapper).
    x = x_ref[...].astype(jnp.bfloat16)                                   # (TM*N, 6)

    # first_conv[0] + BN1 (folded) + ReLU
    h = jnp.maximum(
        jnp.dot(x, w1, preferred_element_type=jnp.float32) + t1, 0.0)     # (TM*N, 128)
    hb = h.astype(jnp.bfloat16)

    # Single fused matmul sharing LHS h:
    #   lanes [:256]  -> f_pre = h @ w2                (feeds the point-max)
    #   lanes [256:]  -> pp    = h @ ((w2 @ w3p) * s2) (per-point half of
    #                                                   second_conv[0], BN2-scaled)
    fused = jnp.dot(hb, w23, preferred_element_type=jnp.float32)          # (TM*N, 768)
    f_pre = fused[:, :256]
    pp = fused[:, 256:]

    # feature_global = max over points of (h@w2 + b2); bias moved past the max.
    f_g = jnp.max(f_pre.reshape(tm, n, 256), axis=1) + b2                 # (TM, 256)

    # second_conv[0] on concat([feature_global, feature]) + BN2 + ReLU, with
    # BN2 scale folded into the weights and all constant shifts in b23.
    g_row = jnp.dot(f_g.astype(jnp.bfloat16), w3g,
                    preferred_element_type=jnp.float32)                   # (TM, 512)
    h2 = jnp.maximum(
        pp.reshape(tm, n, 512) + g_row[:, None, :] + b23, 0.0)            # (TM, N, 512)

    # second_conv[3] + final point-max; bias b4 moved past the max.
    o = jnp.dot(h2.reshape(tm * n, 512).astype(jnp.bfloat16), w4,
                preferred_element_type=jnp.float32)                       # (TM*N, Cp)
    out_ref[...] = jnp.max(o.reshape(tm, n, o.shape[-1]), axis=1) + b4    # (TM, Cp)


def _round_up(v, m):
    return ((v + m - 1) // m) * m


def _choose_tm(m, tm_req):
    """Pick an effective tile (multiple of 8, sublane-aligned output block)."""
    tm = max(8, (tm_req // 8) * 8)
    tm = min(tm, _round_up(m, 8))
    # Prefer >= 2 grid steps when there is enough work (v7x megacore sharding).
    if _round_up(m, 8) >= 16 and pl.cdiv(m, tm) < 2:
        tm = max(8, _round_up(pl.cdiv(m, 2), 8))
    return tm


def fold_params(params):
    """Fold BN scales / shifts and w2 into composed weights (see header)."""
    s1, t1 = params["s1"], params["t1"]
    s2, t2 = params["s2"], params["t2"]

    w1f = (params["w1"] * s1).astype(jnp.bfloat16)                 # (6, 128)
    t1f = params["b1"] * s1 + t1                                   # (1, 128)

    w3 = params["w3"]
    w3g = w3[:256]                                                 # acts on feature_global
    w3p = w3[256:]                                                 # acts on per-point feature
    w23p = params["w2"] @ w3p                                      # (128, 512) f32 compose
    w23 = jnp.concatenate([params["w2"], w23p * s2],
                          axis=1).astype(jnp.bfloat16)             # (128, 768)
    w3g_f = (w3g * s2).astype(jnp.bfloat16)                        # (256, 512)
    b23 = (params["b2"] @ w3p + params["b3"]) * s2 + t2            # (1, 512)

    return {
        "w1f": w1f, "t1f": t1f,
        "w23": w23, "b2": params["b2"],
        "w3g": w3g_f, "b23": b23,
        "w4": params["w4"].astype(jnp.bfloat16), "b4": params["b4"],
    }


def encoder_forward(point_groups, params, *, tm=32):
    """point_groups: (B, G, N, 6) float32 -> (B, G, C) float32."""
    B, G, N, six = point_groups.shape
    assert six == 6
    M = B * G
    C = params["w4"].shape[1]
    C_pad = _round_up(C, 128)

    tm_eff = _choose_tm(M, tm)
    num_tiles = pl.cdiv(M, tm_eff)
    m_pad = num_tiles * tm_eff

    # Flatten groups; pad M up to a multiple of TM (pad groups are zeros,
    # their outputs are discarded below and never mix with real groups'
    # per-group point-max).
    x = point_groups.reshape(M, N, 6).astype(jnp.float32)
    if m_pad > M:
        x = jnp.concatenate(
            [x, jnp.zeros((m_pad - M, N, 6), jnp.float32)], axis=0)
    x = x.reshape(m_pad * N, 6)

    fp = fold_params(params)
    w4 = fp["w4"]
    b4 = fp["b4"]
    if C_pad > C:
        w4 = jnp.pad(w4, ((0, 0), (0, C_pad - C)))
        b4 = jnp.pad(b4, ((0, 0), (0, C_pad - C)))

    param_list = [
        fp["w1f"], fp["t1f"],
        fp["w23"], fp["b2"],
        fp["w3g"], fp["b23"],
        w4, b4,
    ]

    def full_spec(p):
        # Grid-invariant parameter: whole array, same block every step.
        # (Small enough that default double-buffering is harmless; single-
        #  buffering via pipeline_mode would only matter at very large Cp.)
        return pl.BlockSpec(p.shape, lambda i: (0, 0))

    in_specs = [pl.BlockSpec((tm_eff * N, 6), lambda i: (i, 0))]
    in_specs += [full_spec(p) for p in param_list]

    kernel = functools.partial(encoder_kernel, tm=tm_eff, n=N)

    out = pl.pallas_call(
        kernel,
        out_shape=jax.ShapeDtypeStruct((m_pad, C_pad), jnp.float32),
        grid_spec=pltpu.PrefetchScalarGridSpec(
            num_scalar_prefetch=0,
            grid=(num_tiles,),
            in_specs=in_specs,
            out_specs=pl.BlockSpec((tm_eff, C_pad), lambda i: (i, 0)),
        ),
        compiler_params=pltpu.CompilerParams(
            dimension_semantics=("parallel",),
            vmem_limit_bytes=48 * 1024 * 1024,
        ),
    )(x, *param_list)

    return out[:M, :C].reshape(B, G, C)


def init_params(key, encoder_channel):
    """Deterministic synthetic parameters matching the torch module shapes.

    Conv1d weights (out, in, 1) are stored transposed as (in, out) for
    channels-last matmuls.  BatchNorm (eval mode) is represented as
    scale = gamma / sqrt(var + eps), shift = beta - mean * scale.
    """
    eps = 1e-5
    ks = jax.random.split(key, 16)

    def w(k, cin, cout):
        return jax.random.normal(k, (cin, cout), jnp.float32) * 0.1

    def b(k, cout):
        return jax.random.normal(k, (1, cout), jnp.float32) * 0.1

    def bn(kg, kb, km, kv, c):
        gamma = 1.0 + 0.1 * jax.random.normal(kg, (1, c), jnp.float32)
        beta = 0.1 * jax.random.normal(kb, (1, c), jnp.float32)
        mean = 0.1 * jax.random.normal(km, (1, c), jnp.float32)
        var = jnp.abs(jax.random.normal(kv, (1, c), jnp.float32)) + 0.5
        scale = gamma / jnp.sqrt(var + eps)
        shift = beta - mean * scale
        return scale, shift

    s1, t1 = bn(ks[2], ks[3], ks[4], ks[5], 128)
    s2, t2 = bn(ks[10], ks[11], ks[12], ks[13], 512)

    return {
        "w1": w(ks[0], 6, 128),   "b1": b(ks[1], 128),
        "s1": s1,                 "t1": t1,
        "w2": w(ks[6], 128, 256), "b2": b(ks[7], 256),
        "w3": w(ks[8], 512, 512), "b3": b(ks[9], 512),
        "s2": s2,                 "t2": t2,
        "w4": w(ks[14], 512, encoder_channel),
        "b4": b(ks[15], encoder_channel),
    }


def encoder_reference(point_groups, params):
    """Pure-JAX reference, structured like the torch module (chained matmuls,
    unfolded BN), with the same bf16-matmul / f32-accumulate precision."""
    B, G, N, _ = point_groups.shape
    x = point_groups.reshape(B * G, N, 6).astype(jnp.bfloat16)
    w1 = params["w1"].astype(jnp.bfloat16)
    w2 = params["w2"].astype(jnp.bfloat16)
    w3 = params["w3"].astype(jnp.bfloat16)
    w4 = params["w4"].astype(jnp.bfloat16)

    h = jnp.einsum("mnc,cd->mnd", x, w1,
                   preferred_element_type=jnp.float32) + params["b1"]
    h = jnp.maximum(h * params["s1"] + params["t1"], 0.0)
    f = jnp.einsum("mnc,cd->mnd", h.astype(jnp.bfloat16), w2,
                   preferred_element_type=jnp.float32) + params["b2"]
    fg = jnp.max(f, axis=1, keepdims=True)
    z = jnp.concatenate([jnp.broadcast_to(fg, f.shape), f], axis=-1)
    h2 = jnp.einsum("mnc,cd->mnd", z.astype(jnp.bfloat16), w3,
                    preferred_element_type=jnp.float32) + params["b3"]
    h2 = jnp.maximum(h2 * params["s2"] + params["t2"], 0.0)
    o = jnp.einsum("mnc,cd->mnd", h2.astype(jnp.bfloat16), w4,
                   preferred_element_type=jnp.float32) + params["b4"]
    C = params["w4"].shape[1]
    return jnp.max(o, axis=1).reshape(B, G, C)


if __name__ == "__main__":
    B, G, N = 2, 4, 32
    encoder_channel = 128

    key = jax.random.PRNGKey(0)
    k_in, k_p = jax.random.split(key)
    point_groups = jax.random.normal(k_in, (B, G, N, 6), jnp.float32)
    params = init_params(k_p, encoder_channel)

    out = encoder_forward(point_groups, params, tm=32)
    out = jax.block_until_ready(out)

    ref = jax.block_until_ready(encoder_reference(point_groups, params))
    assert out.shape == (B, G, encoder_channel)
    # Slightly looser than the unfolded version: the composed/BN-scaled weights
    # (w2@w3p, w1*s1, w3*s2) are bf16-rounded once instead of chained, which
    # perturbs results by O(1e-3) relative vs the chained-matmul reference.
    assert jnp.allclose(out, ref, atol=2e-2, rtol=2e-2), "mismatch vs reference"

    print("KERNEL_OK")
</pallas_src>

<mosaic_0001>
module attributes {stable_mosaic.version = 11 : i64} {
  func.func @encoder_kernel(%arg0: i32, %arg1: memref<256x6xf32, #tpu.memory_space<vmem>>, %arg2: memref<6x128xbf16, #tpu.memory_space<vmem>>, %arg3: memref<1x128xf32, #tpu.memory_space<vmem>>, %arg4: memref<128x768xbf16, #tpu.memory_space<vmem>>, %arg5: memref<1x256xf32, #tpu.memory_space<vmem>>, %arg6: memref<256x512xbf16, #tpu.memory_space<vmem>>, %arg7: memref<1x512xf32, #tpu.memory_space<vmem>>, %arg8: memref<512x128xbf16, #tpu.memory_space<vmem>>, %arg9: memref<1x128xf32, #tpu.memory_space<vmem>>, %arg10: memref<8x128xf32, #tpu.memory_space<vmem>>) attributes {dimension_semantics = [#tpu.dimension_semantics<parallel>], iteration_bounds = array<i64: 1>, scalar_prefetch = 0 : i64, scratch_operands = 0 : i64, tpu.core_type = #tpu.core_type<tc>, window_params = [{transform_indices = @transform_0, window_bounds = array<i64: 256, 6>}, {pipeline_mode = #tpu.pipeline_mode<synchronous>, transform_indices = @transform_1, window_bounds = array<i64: 6, 128>}, {pipeline_mode = #tpu.pipeline_mode<synchronous>, transform_indices = @transform_2, window_bounds = array<i64: 1, 128>}, {pipeline_mode = #tpu.pipeline_mode<synchronous>, transform_indices = @transform_3, window_bounds = array<i64: 128, 768>}, {pipeline_mode = #tpu.pipeline_mode<synchronous>, transform_indices = @transform_4, window_bounds = array<i64: 1, 256>}, {pipeline_mode = #tpu.pipeline_mode<synchronous>, transform_indices = @transform_5, window_bounds = array<i64: 256, 512>}, {pipeline_mode = #tpu.pipeline_mode<synchronous>, transform_indices = @transform_6, window_bounds = array<i64: 1, 512>}, {pipeline_mode = #tpu.pipeline_mode<synchronous>, transform_indices = @transform_7, window_bounds = array<i64: 512, 128>}, {pipeline_mode = #tpu.pipeline_mode<synchronous>, transform_indices = @transform_8, window_bounds = array<i64: 1, 128>}, {transform_indices = @transform_9, window_bounds = array<i64: 8, 128>}]} {
    %c0 = arith.constant 0 : index
    %c0_0 = arith.constant 0 : index
    %0 = vector.load %arg2[%c0, %c0_0] : memref<6x128xbf16, #tpu.memory_space<vmem>>, vector<6x128xbf16>
    %c0_1 = arith.constant 0 : index
    %c0_2 = arith.constant 0 : index
    %1 = vector.load %arg3[%c0_1, %c0_2] : memref<1x128xf32, #tpu.memory_space<vmem>>, vector<1x128xf32>
    %c0_3 = arith.constant 0 : index
    %c0_4 = arith.constant 0 : index
    %2 = vector.load %arg4[%c0_3, %c0_4] : memref<128x768xbf16, #tpu.memory_space<vmem>>, vector<128x768xbf16>
    %c0_5 = arith.constant 0 : index
    %c0_6 = arith.constant 0 : index
    %3 = vector.load %arg5[%c0_5, %c0_6] : memref<1x256xf32, #tpu.memory_space<vmem>>, vector<1x256xf32>
    %c0_7 = arith.constant 0 : index
    %c0_8 = arith.constant 0 : index
    %4 = vector.load %arg6[%c0_7, %c0_8] : memref<256x512xbf16, #tpu.memory_space<vmem>>, vector<256x512xbf16>
    %c0_9 = arith.constant 0 : index
    %c0_10 = arith.constant 0 : index
    %5 = vector.load %arg7[%c0_9, %c0_10] : memref<1x512xf32, #tpu.memory_space<vmem>>, vector<1x512xf32>
    %c0_11 = arith.constant 0 : index
    %c0_12 = arith.constant 0 : index
    %6 = vector.load %arg8[%c0_11, %c0_12] : memref<512x128xbf16, #tpu.memory_space<vmem>>, vector<512x128xbf16>
    %c0_13 = arith.constant 0 : index
    %c0_14 = arith.constant 0 : index
    %7 = vector.load %arg9[%c0_13, %c0_14] : memref<1x128xf32, #tpu.memory_space<vmem>>, vector<1x128xf32>
    %c0_15 = arith.constant 0 : index
    %c0_16 = arith.constant 0 : index
    %8 = vector.load %arg1[%c0_15, %c0_16] : memref<256x6xf32, #tpu.memory_space<vmem>>, vector<256x6xf32>
    %9 = arith.truncf %8 : vector<256x6xf32> to vector<256x6xbf16>
    %cst = arith.constant dense<0.000000e+00> : vector<256x128xf32>
    %10 = tpu.matmul %9, %0, %cst {dimension_numbers = #tpu.dot_dimension_numbers<[1], [0], [0], [1], [0, 0, 1, 1], [], []>} : vector<256x6xbf16>, vector<6x128xbf16>, vector<256x128xf32> -> vector<256x128xf32>
    %11 = vector.broadcast %1 : vector<1x128xf32> to vector<256x128xf32>
    %12 = arith.addf %10, %11 : vector<256x128xf32>
    %cst_17 = arith.constant 0.000000e+00 : f32
    %13 = vector.broadcast %cst_17 : f32 to vector<256x128xf32>
    %14 = arith.maximumf %12, %13 : vector<256x128xf32>
    %15 = arith.truncf %14 : vector<256x128xf32> to vector<256x128xbf16>
    %cst_18 = arith.constant dense<0.000000e+00> : vector<256x768xf32>
    %16 = tpu.matmul %15, %2, %cst_18 {dimension_numbers = #tpu.dot_dimension_numbers<[1], [0], [0], [1], [0, 0, 1, 1], [], []>} : vector<256x128xbf16>, vector<128x768xbf16>, vector<256x768xf32> -> vector<256x768xf32>
    %17 = vector.extract_strided_slice %16 {offsets = [0, 0], sizes = [256, 256], strides = [1, 1]} : vector<256x768xf32> to vector<256x256xf32>
    %18 = vector.extract_strided_slice %16 {offsets = [0, 256], sizes = [256, 512], strides = [1, 1]} : vector<256x768xf32> to vector<256x512xf32>
    %19 = vector.shape_cast %17 : vector<256x256xf32> to vector<8x32x256xf32>
    %cst_19 = arith.constant dense<0xFF800000> : vector<8x256xf32>
    %20 = vector.multi_reduction <maximumf>, %19, %cst_19 [1] : vector<8x32x256xf32> to vector<8x256xf32>
    %21 = vector.broadcast %3 : vector<1x256xf32> to vector<8x256xf32>
    %22 = arith.addf %20, %21 : vector<8x256xf32>
    %23 = arith.truncf %22 : vector<8x256xf32> to vector<8x256xbf16>
    %cst_20 = arith.constant dense<0.000000e+00> : vector<8x512xf32>
    %24 = tpu.matmul %23, %4, %cst_20 {dimension_numbers = #tpu.dot_dimension_numbers<[1], [0], [0], [1], [0, 0, 1, 1], [], []>} : vector<8x256xbf16>, vector<256x512xbf16>, vector<8x512xf32> -> vector<8x512xf32>
    %25 = vector.shape_cast %18 : vector<256x512xf32> to vector<8x32x512xf32>
    %26 = vector.shape_cast %24 : vector<8x512xf32> to vector<8x1x512xf32>
    %27 = vector.broadcast %26 : vector<8x1x512xf32> to vector<8x32x512xf32>
    %28 = arith.addf %25, %27 : vector<8x32x512xf32>
    %29 = vector.shape_cast %5 : vector<1x512xf32> to vector<1x1x512xf32>
    %30 = vector.broadcast %29 : vector<1x1x512xf32> to vector<8x32x512xf32>
    %31 = arith.addf %28, %30 : vector<8x32x512xf32>
    %cst_21 = arith.constant 0.000000e+00 : f32
    %32 = vector.broadcast %cst_21 : f32 to vector<8x32x512xf32>
    %33 = arith.maximumf %31, %32 : vector<8x32x512xf32>
    %34 = vector.shape_cast %33 : vector<8x32x512xf32> to vector<256x512xf32>
    %35 = arith.truncf %34 : vector<256x512xf32> to vector<256x512xbf16>
    %cst_22 = arith.constant dense<0.000000e+00> : vector<256x128xf32>
    %36 = tpu.matmul %35, %6, %cst_22 {dimension_numbers = #tpu.dot_dimension_numbers<[1], [0], [0], [1], [0, 0, 1, 1], [], []>} : vector<256x512xbf16>, vector<512x128xbf16>, vector<256x128xf32> -> vector<256x128xf32>
    %37 = vector.shape_cast %36 : vector<256x128xf32> to vector<8x32x128xf32>
    %cst_23 = arith.constant dense<0xFF800000> : vector<8x128xf32>
    %38 = vector.multi_reduction <maximumf>, %37, %cst_23 [1] : vector<8x32x128xf32> to vector<8x128xf32>
    %39 = vector.broadcast %7 : vector<1x128xf32> to vector<8x128xf32>
    %40 = arith.addf %38, %39 : vector<8x128xf32>
    %c0_24 = arith.constant 0 : index
    %c0_25 = arith.constant 0 : index
    %41 = vector.load %arg10[%c0_24, %c0_25] : memref<8x128xf32, #tpu.memory_space<vmem>>, vector<8x128xf32>
    tpu.vector_store %arg10[%c0_24, %c0_25], %40 {strides = array<i32>} : memref<8x128xf32, #tpu.memory_space<vmem>>, vector<8x128xf32>,
    return
  }
  func.func @transform_0(%arg0: i32) -> (i32, i32) {
    %c0_i32 = arith.constant 0 : i32
    %c0_i32_0 = arith.constant 0 : i32
    return %arg0, %c0_i32 : i32, i32
  }
  func.func @transform_1(%arg0: i32) -> (i32, i32) {
    %c0_i32 = arith.constant 0 : i32
    %c0_i32_0 = arith.constant 0 : i32
    %c0_i32_1 = arith.constant 0 : i32
    return %c0_i32, %c0_i32_0 : i32, i32
  }
  func.func @transform_2(%arg0: i32) -> (i32, i32) {
    %c0_i32 = arith.constant 0 : i32
    %c0_i32_0 = arith.constant 0 : i32
    %c0_i32_1 = arith.constant 0 : i32
    return %c0_i32, %c0_i32_0 : i32, i32
  }
  func.func @transform_3(%arg0: i32) -> (i32, i32) {
    %c0_i32 = arith.constant 0 : i32
    %c0_i32_0 = arith.constant 0 : i32
    %c0_i32_1 = arith.constant 0 : i32
    return %c0_i32, %c0_i32_0 : i32, i32
  }
  func.func @transform_4(%arg0: i32) -> (i32, i32) {
    %c0_i32 = arith.constant 0 : i32
    %c0_i32_0 = arith.constant 0 : i32
    %c0_i32_1 = arith.constant 0 : i32
    return %c0_i32, %c0_i32_0 : i32, i32
  }
  func.func @transform_5(%arg0: i32) -> (i32, i32) {
    %c0_i32 = arith.constant 0 : i32
    %c0_i32_0 = arith.constant 0 : i32
    %c0_i32_1 = arith.constant 0 : i32
    return %c0_i32, %c0_i32_0 : i32, i32
  }
  func.func @transform_6(%arg0: i32) -> (i32, i32) {
    %c0_i32 = arith.constant 0 : i32
    %c0_i32_0 = arith.constant 0 : i32
    %c0_i32_1 = arith.constant 0 : i32
    return %c0_i32, %c0_i32_0 : i32, i32
  }
  func.func @transform_7(%arg0: i32) -> (i32, i32) {
    %c0_i32 = arith.constant 0 : i32
    %c0_i32_0 = arith.constant 0 : i32
    %c0_i32_1 = arith.constant 0 : i32
    return %c0_i32, %c0_i32_0 : i32, i32
  }
  func.func @transform_8(%arg0: i32) -> (i32, i32) {
    %c0_i32 = arith.constant 0 : i32
    %c0_i32_0 = arith.constant 0 : i32
    %c0_i32_1 = arith.constant 0 : i32
    return %c0_i32, %c0_i32_0 : i32, i32
  }
  func.func @transform_9(%arg0: i32) -> (i32, i32) {
    %c0_i32 = arith.constant 0 : i32
    %c0_i32_0 = arith.constant 0 : i32
    return %arg0, %c0_i32 : i32, i32
  }
}

</mosaic_0001>

<llo_original>
// kernel: tpu_custom_call.1
$region0: #{tpu_custom_call.1}
  #allocation0 [shape = 'u32[]', space=smem, size = 0x4, offset = 0x4, fixed_abs, tag = 'smem constant byte address 0x4 - core index']
  #allocation1 [shape = 'u32[144,128]{1,0:T(1,128)}', space=vmem, size = 0x12000, scoped, tag = 'internal scratch']
  %s0 = inlined_call_operand.vmem [shape: f32[256,6], index: 0, kind: input, shape index: {}]
  %s1 = inlined_call_operand.vmem [shape: bf16[6,128], index: 1, kind: input, shape index: {}]
  %s2 = inlined_call_operand.vmem [shape: f32[1,128], index: 2, kind: input, shape index: {}]
  %s3 = inlined_call_operand.hbm [shape: bf16[128,768], index: 3, kind: input, shape index: {}]
  %s4 = inlined_call_operand.vmem [shape: f32[1,256], index: 4, kind: input, shape index: {}]
  %s5 = inlined_call_operand.hbm [shape: bf16[256,512], index: 5, kind: input, shape index: {}]
  %s6 = inlined_call_operand.vmem [shape: f32[1,512], index: 6, kind: input, shape index: {}]
  %s7 = inlined_call_operand.vmem [shape: bf16[512,128], index: 7, kind: input, shape index: {}]
  %s8 = inlined_call_operand.vmem [shape: f32[1,128], index: 8, kind: input, shape index: {}]
  %s9 = inlined_call_operand.hbm [shape: f32[8,128], index: 9, kind: output, shape index: {}]
  %s10 = sld [smem:[#allocation0]]
  $region54: #{tpu_custom_call.1} parent=0
    _
  %s12 = ssub.s32 1, %s10
  %s13 = scalar_select 0, %s12, %s10
  $region1: #{tpu_custom_call.1} parent=0
    #allocation2 [shape = 'u8[196608]{0}', space=vmem, size = 0x30000, scoped, tag = 'input window, operand 3, single buffered']
    #allocation3 [shape = 's32[1]{0}', space=sflag, size = 0x4, scoped, tag = 'scoped memory for tpu_custom_call.1']
    #allocation4 [shape = 's32[1]{0}', space=sflag, size = 0x4, scoped, tag = 'scoped memory for tpu_custom_call.1']
    #allocation5 [shape = 'u8[262144]{0}', space=vmem, size = 0x40000, scoped, tag = 'input window, operand 5, single buffered']
    #allocation6 [shape = 's32[1]{0}', space=sflag, size = 0x4, scoped, tag = 'scoped memory for tpu_custom_call.1']
    #allocation7 [shape = 'u8[4096]{0}', space=vmem, size = 0x1000, scoped, tag = 'output window, operand 0, single buffered']
    %14 = vsyncpa [#allocation3], 0
    %15 = vsyncpa [#allocation6], 0
    %16 = vsyncpa [#allocation4], 0
    // Predicated region
    $region2: #{tpu_custom_call.1} parent=1 // pred_check
      _
    $region3: #{tpu_custom_call.1} parent=1 // pred_check_branch
      %18 = sbr.rel (0) target = $region5
    $region4: #{tpu_custom_call.1} parent=1 // pred_region
      _
    $region5: #{tpu_custom_call.1} parent=1 // pred_fallthru
      _
    // Predicated region
    $region6: #{tpu_custom_call.1} parent=1 // pred_check
      _
    $region7: #{tpu_custom_call.1} parent=1 // pred_check_branch
      %20 = sbr.rel (0) target = $region9
    $region8: #{tpu_custom_call.1} parent=1 // pred_region
      _
    $region9: #{tpu_custom_call.1} parent=1 // pred_fallthru
      _
    // Predicated region
    $region10: #{tpu_custom_call.1} parent=1 // pred_check
      _
    $region11: #{tpu_custom_call.1} parent=1 // pred_check_branch
      %22 = sbr.rel (0) target = $region13
    $region12: #{tpu_custom_call.1} parent=1 // pred_region
      _
    $region13: #{tpu_custom_call.1} parent=1 // pred_fallthru
      _
    // Predicated region
    $region14: #{tpu_custom_call.1} parent=1 // pred_check
      _
    $region15: #{tpu_custom_call.1} parent=1 // pred_check_branch
      %24 = sbr.rel (0) target = $region17
    $region16: #{tpu_custom_call.1} parent=1 // pred_region
      %s26 = ssub.s32 6144, 6144
      %27 = vsyncadd [#allocation3], %s26
      %s28 = sshll.u32 [#allocation2], 4
      %s29 = int_to_ptr.vmem [resolvable:$true] %s28
      %34 = dma.hbm_to_vmem [thread:$0]  %s3, 6144, %s29, [#allocation3], 384, 384, 24
    $region17: #{tpu_custom_call.1} parent=1 // pred_fallthru
      _
    // Predicated region
    $region18: #{tpu_custom_call.1} parent=1 // pred_check
      _
    $region19: #{tpu_custom_call.1} parent=1 // pred_check_branch
      %36 = sbr.rel (0) target = $region21
    $region20: #{tpu_custom_call.1} parent=1 // pred_region
      _
    $region21: #{tpu_custom_call.1} parent=1 // pred_fallthru
      _
    // Predicated region
    $region22: #{tpu_custom_call.1} parent=1 // pred_check
      _
    $region23: #{tpu_custom_call.1} parent=1 // pred_check_branch
      %38 = sbr.rel (0) target = $region25
    $region24: #{tpu_custom_call.1} parent=1 // pred_region
      %s40 = ssub.s32 8192, 8192
      %41 = vsyncadd [#allocation6], %s40
      %s42 = sshll.u32 [#allocation5], 4
      %s43 = int_to_ptr.vmem [resolvable:$true] %s42
      %48 = dma.hbm_to_vmem [thread:$0]  %s5, 8192, %s43, [#allocation6], 256, 256, 16
    $region25: #{tpu_custom_call.1} parent=1 // pred_fallthru
      _
    // Predicated region
    $region26: #{tpu_custom_call.1} parent=1 // pred_check
      _
    $region27: #{tpu_custom_call.1} parent=1 // pred_check_branch
      %50 = sbr.rel (0) target = $region29
    $region28: #{tpu_custom_call.1} parent=1 // pred_region
      _
    $region29: #{tpu_custom_call.1} parent=1 // pred_fallthru
      _
    // Predicated region
    $region30: #{tpu_custom_call.1} parent=1 // pred_check
      _
    $region31: #{tpu_custom_call.1} parent=1 // pred_check_branch
      %52 = sbr.rel (0) target = $region33
    $region32: #{tpu_custom_call.1} parent=1 // pred_region
      _
    $region33: #{tpu_custom_call.1} parent=1 // pred_fallthru
      _
    // Predicated region
    $region34: #{tpu_custom_call.1} parent=1 // pred_check
      _
    $region35: #{tpu_custom_call.1} parent=1 // pred_check_branch
      %54 = sbr.rel (0) target = $region37
    $region36: #{tpu_custom_call.1} parent=1 // pred_region
      _
    $region37: #{tpu_custom_call.1} parent=1 // pred_fallthru
      _
    // Predicated region
    $region38: #{tpu_custom_call.1} parent=1 // pred_check
      _
    $region39: #{tpu_custom_call.1} parent=1 // pred_check_branch
      %56 = sbr.rel (0) target = $region41
    $region40: #{tpu_custom_call.1} parent=1 // pred_region
      %57 = dma.done [#allocation3], 6144
    $region41: #{tpu_custom_call.1} parent=1 // pred_fallthru
      _
    // Predicated region
    $region42: #{tpu_custom_call.1} parent=1 // pred_check
      _
    $region43: #{tpu_custom_call.1} parent=1 // pred_check_branch
      %59 = sbr.rel (0) target = $region45
    $region44: #{tpu_custom_call.1} parent=1 // pred_region
      %60 = dma.done [#allocation6], 8192
    $region45: #{tpu_custom_call.1} parent=1 // pred_fallthru
      _
    %v62 = vld [vmem:[%s1] sm:$0x7]
    %v63 = vld [vmem:[%s2] sm:$0x1]
    %v64 = vld [vmem:[#allocation2] sm:$0xff]
    %v65 = vld [vmem:[#allocation2 + $0x8] sm:$0xff]
    %v66 = vld [vmem:[#allocation2 + $0x10] sm:$0xff]
    %v67 = vld [vmem:[#allocation2 + $0x18] sm:$0xff]
    %v68 = vld [vmem:[#allocation2 + $0x20] sm:$0xff]
    %v69 = vld [vmem:[#allocation2 + $0x28] sm:$0xff]
    %v70 = vld [vmem:[#allocation2 + $0x30] sm:$0xff]
    %v71 = vld [vmem:[#allocation2 + $0x38] sm:$0xff]
    %v72 = vld [vmem:[#allocation2 + $0x40] sm:$0xff]
    %v73 = vld [vmem:[#allocation2 + $0x48] sm:$0xff]
    %v74 = vld [vmem:[#allocation2 + $0x50] sm:$0xff]
    %v75 = vld [vmem:[#allocation2 + $0x58] sm:$0xff]
    %v76 = vld [vmem:[#allocation2 + $0x60] sm:$0xff]
    %v77 = vld [vmem:[#allocation2 + $0x68] sm:$0xff]
    %v78 = vld [vmem:[#allocation2 + $0x70] sm:$0xff]
    %v79 = vld [vmem:[#allocation2 + $0x78] sm:$0xff]
    %v80 = vld [vmem:[#allocation2 + $0x80] sm:$0xff]
    %v81 = vld [vmem:[#allocation2 + $0x88] sm:$0xff]
    %v82 = vld [vmem:[#allocation2 + $0x90] sm:$0xff]
    %v83 = vld [vmem:[#allocation2 + $0x98] sm:$0xff]
    %v84 = vld [vmem:[#allocation2 + $0xa0] sm:$0xff]
    %v85 = vld [vmem:[#allocation2 + $0xa8] sm:$0xff]
    %v86 = vld [vmem:[#allocation2 + $0xb0] sm:$0xff]
    %v87 = vld [vmem:[#allocation2 + $0xb8] sm:$0xff]
    %v88 = vld [vmem:[#allocation2 + $0xc0] sm:$0xff]
    %v89 = vld [vmem:[#allocation2 + $0xc8] sm:$0xff]
    %v90 = vld [vmem:[#allocation2 + $0xd0] sm:$0xff]
    %v91 = vld [vmem:[#allocation2 + $0xd8] sm:$0xff]
    %v92 = vld [vmem:[#allocation2 + $0xe0] sm:$0xff]
    %v93 = vld [vmem:[#allocation2 + $0xe8] sm:$0xff]
    %v94 = vld [vmem:[#allocation2 + $0xf0] sm:$0xff]
    %v95 = vld [vmem:[#allocation2 + $0xf8] sm:$0xff]
    %v96 = vld [vmem:[#allocation2 + $0x100] sm:$0xff]
    %v97 = vld [vmem:[#allocation2 + $0x108] sm:$0xff]
    %v98 = vld [vmem:[#allocation2 + $0x110] sm:$0xff]
    %v99 = vld [vmem:[#allocation2 + $0x118] sm:$0xff]
    %v100 = vld [vmem:[#allocation2 + $0x120] sm:$0xff]
    %v101 = vld [vmem:[#allocation2 + $0x128] sm:$0xff]
    %v102 = vld [vmem:[#allocation2 + $0x130] sm:$0xff]
    %v103 = vld [vmem:[#allocation2 + $0x138] sm:$0xff]
    %v104 = vld [vmem:[#allocation2 + $0x140] sm:$0xff]
    %v105 = vld [vmem:[#allocation2 + $0x148] sm:$0xff]
    %v106 = vld [vmem:[#allocation2 + $0x150] sm:$0xff]
    %v107 = vld [vmem:[#allocation2 + $0x158] sm:$0xff]
    %v108 = vld [vmem:[#allocation2 + $0x160] sm:$0xff]
    %v109 = vld [vmem:[#allocation2 + $0x168] sm:$0xff]
    %v110 = vld [vmem:[#allocation2 + $0x170] sm:$0xff]
    %v111 = vld [vmem:[#allocation2 + $0x178] sm:$0xff]
    %v112 = vld [vmem:[%s4] sm:$0x3]
    %v113 = vld [vmem:[#allocation5] sm:$0xff]
    %v114 = vld [vmem:[#allocation5 + $0x8] sm:$0xff]
    %v115 = vld [vmem:[#allocation5 + $0x10] sm:$0xff]
    %v116 = vld [vmem:[#allocation5 + $0x18] sm:$0xff]
    %v117 = vld [vmem:[#allocation5 + $0x20] sm:$0xff]
    %v118 = vld [vmem:[#allocation5 + $0x28] sm:$0xff]
    %v119 = vld [vmem:[#allocation5 + $0x30] sm:$0xff]
    %v120 = vld [vmem:[#allocation5 + $0x38] sm:$0xff]
    %v121 = vld [vmem:[#allocation5 + $0x40] sm:$0xff]
    %v122 = vld [vmem:[#allocation5 + $0x48] sm:$0xff]
    %v123 = vld [vmem:[#allocation5 + $0x50] sm:$0xff]
    %v124 = vld [vmem:[#allocation5 + $0x58] sm:$0xff]
    %v125 = vld [vmem:[#allocation5 + $0x60] sm:$0xff]
    %v126 = vld [vmem:[#allocation5 + $0x68] sm:$0xff]
    %v127 = vld [vmem:[#allocation5 + $0x70] sm:$0xff]
    %v128 = vld [vmem:[#allocation5 + $0x78] sm:$0xff]
    %v129 = vld [vmem:[#allocation5 + $0x80] sm:$0xff]
    %v130 = vld [vmem:[#allocation5 + $0x88] sm:$0xff]
    %v131 = vld [vmem:[#allocation5 + $0x90] sm:$0xff]
    %v132 = vld [vmem:[#allocation5 + $0x98] sm:$0xff]
    %v133 = vld [vmem:[#allocation5 + $0xa0] sm:$0xff]
    %v134 = vld [vmem:[#allocation5 + $0xa8] sm:$0xff]
    %v135 = vld [vmem:[#allocation5 + $0xb0] sm:$0xff]
    %v136 = vld [vmem:[#allocation5 + $0xb8] sm:$0xff]
    %v137 = vld [vmem:[#allocation5 + $0xc0] sm:$0xff]
    %v138 = vld [vmem:[#allocation5 + $0xc8] sm:$0xff]
    %v139 = vld [vmem:[#allocation5 + $0xd0] sm:$0xff]
    %v140 = vld [vmem:[#allocation5 + $0xd8] sm:$0xff]
    %v141 = vld [vmem:[#allocation5 + $0xe0] sm:$0xff]
    %v142 = vld [vmem:[#allocation5 + $0xe8] sm:$0xff]
    %v143 = vld [vmem:[#allocation5 + $0xf0] sm:$0xff]
    %v144 = vld [vmem:[#allocation5 + $0xf8] sm:$0xff]
    %v145 = vld [vmem:[#allocation5 + $0x100] sm:$0xff]
    %v146 = vld [vmem:[#allocation5 + $0x108] sm:$0xff]
    %v147 = vld [vmem:[#allocation5 + $0x110] sm:$0xff]
    %v148 = vld [vmem:[#allocation5 + $0x118] sm:$0xff]
    %v149 = vld [vmem:[#allocation5 + $0x120] sm:$0xff]
    %v150 = vld [vmem:[#allocation5 + $0x128] sm:$0xff]
    %v151 = vld [vmem:[#allocation5 + $0x130] sm:$0xff]
    %v152 = vld [vmem:[#allocation5 + $0x138] sm:$0xff]
    %v153 = vld [vmem:[#allocation5 + $0x140] sm:$0xff]
    %v154 = vld [vmem:[#allocation5 + $0x148] sm:$0xff]
    %v155 = vld [vmem:[#allocation5 + $0x150] sm:$0xff]
    %v156 = vld [vmem:[#allocation5 + $0x158] sm:$0xff]
    %v157 = vld [vmem:[#allocation5 + $0x160] sm:$0xff]
    %v158 = vld [vmem:[#allocation5 + $0x168] sm:$0xff]
    %v159 = vld [vmem:[#allocation5 + $0x170] sm:$0xff]
    %v160 = vld [vmem:[#allocation5 + $0x178] sm:$0xff]
    %v161 = vld [vmem:[#allocation5 + $0x180] sm:$0xff]
    %v162 = vld [vmem:[#allocation5 + $0x188] sm:$0xff]
    %v163 = vld [vmem:[#allocation5 + $0x190] sm:$0xff]
    %v164 = vld [vmem:[#allocation5 + $0x198] sm:$0xff]
    %v165 = vld [vmem:[#allocation5 + $0x1a0] sm:$0xff]
    %v166 = vld [vmem:[#allocation5 + $0x1a8] sm:$0xff]
    %v167 = vld [vmem:[#allocation5 + $0x1b0] sm:$0xff]
    %v168 = vld [vmem:[#allocation5 + $0x1b8] sm:$0xff]
    %v169 = vld [vmem:[#allocation5 + $0x1c0] sm:$0xff]
    %v170 = vld [vmem:[#allocation5 + $0x1c8] sm:$0xff]
    %v171 = vld [vmem:[#allocation5 + $0x1d0] sm:$0xff]
    %v172 = vld [vmem:[#allocation5 + $0x1d8] sm:$0xff]
    %v173 = vld [vmem:[#allocation5 + $0x1e0] sm:$0xff]
    %v174 = vld [vmem:[#allocation5 + $0x1e8] sm:$0xff]
    %v175 = vld [vmem:[#allocation5 + $0x1f0] sm:$0xff]
    %v176 = vld [vmem:[#allocation5 + $0x1f8] sm:$0xff]
    %v177 = vld [vmem:[%s6] sm:$0xf]
    %v178 = vld [vmem:[%s7] sm:$0xf]
    %v179 = vld [vmem:[%s7 + $0x4] sm:$0xf]
    %v180 = vld [vmem:[%s7 + $0x8] sm:$0xf]
    %v181 = vld [vmem:[%s7 + $0xc] sm:$0xf]
    %v182 = vld [vmem:[%s7 + $0x10] sm:$0xf]
    %v183 = vld [vmem:[%s7 + $0x14] sm:$0xf]
    %v184 = vld [vmem:[%s7 + $0x18] sm:$0xf]
    %v185 = vld [vmem:[%s7 + $0x1c] sm:$0xf]
    %v186 = vld [vmem:[%s7 + $0x20] sm:$0xf]
    %v187 = vld [vmem:[%s7 + $0x24] sm:$0xf]
    %v188 = vld [vmem:[%s7 + $0x28] sm:$0xf]
    %v189 = vld [vmem:[%s7 + $0x2c] sm:$0xf]
    %v190 = vld [vmem:[%s7 + $0x30] sm:$0xf]
    %v191 = vld [vmem:[%s7 + $0x34] sm:$0xf]
    %v192 = vld [vmem:[%s7 + $0x38] sm:$0xf]
    %v193 = vld [vmem:[%s7 + $0x3c] sm:$0xf]
    %v194 = vld [vmem:[%s7 + $0x40] sm:$0xf]
    %v195 = vld [vmem:[%s7 + $0x44] sm:$0xf]
    %v196 = vld [vmem:[%s7 + $0x48] sm:$0xf]
    %v197 = vld [vmem:[%s7 + $0x4c] sm:$0xf]
    %v198 = vld [vmem:[%s7 + $0x50] sm:$0xf]
    %v199 = vld [vmem:[%s7 + $0x54] sm:$0xf]
    %v200 = vld [vmem:[%s7 + $0x58] sm:$0xf]
    %v201 = vld [vmem:[%s7 + $0x5c] sm:$0xf]
    %v202 = vld [vmem:[%s7 + $0x60] sm:$0xf]
    %v203 = vld [vmem:[%s7 + $0x64] sm:$0xf]
    %v204 = vld [vmem:[%s7 + $0x68] sm:$0xf]
    %v205 = vld [vmem:[%s7 + $0x6c] sm:$0xf]
    %v206 = vld [vmem:[%s7 + $0x70] sm:$0xf]
    %v207 = vld [vmem:[%s7 + $0x74] sm:$0xf]
    %v208 = vld [vmem:[%s7 + $0x78] sm:$0xf]
    %v209 = vld [vmem:[%s7 + $0x7c] sm:$0xf]
    %v210 = vld [vmem:[%s7 + $0x80] sm:$0xf]
    %v211 = vld [vmem:[%s7 + $0x84] sm:$0xf]
    %v212 = vld [vmem:[%s7 + $0x88] sm:$0xf]
    %v213 = vld [vmem:[%s7 + $0x8c] sm:$0xf]
    %v214 = vld [vmem:[%s7 + $0x90] sm:$0xf]
    %v215 = vld [vmem:[%s7 + $0x94] sm:$0xf]
    %v216 = vld [vmem:[%s7 + $0x98] sm:$0xf]
    %v217 = vld [vmem:[%s7 + $0x9c] sm:$0xf]
    %v218 = vld [vmem:[%s7 + $0xa0] sm:$0xf]
    %v219 = vld [vmem:[%s7 + $0xa4] sm:$0xf]
    %v220 = vld [vmem:[%s7 + $0xa8] sm:$0xf]
    %v221 = vld [vmem:[%s7 + $0xac] sm:$0xf]
    %v222 = vld [vmem:[%s7 + $0xb0] sm:$0xf]
    %v223 = vld [vmem:[%s7 + $0xb4] sm:$0xf]
    %v224 = vld [vmem:[%s7 + $0xb8] sm:$0xf]
    %v225 = vld [vmem:[%s7 + $0xbc] sm:$0xf]
    %v226 = vld [vmem:[%s7 + $0xc0] sm:$0xf]
    %v227 = vld [vmem:[%s7 + $0xc4] sm:$0xf]
    %v228 = vld [vmem:[%s7 + $0xc8] sm:$0xf]
    %v229 = vld [vmem:[%s7 + $0xcc] sm:$0xf]
    %v230 = vld [vmem:[%s7 + $0xd0] sm:$0xf]
    %v231 = vld [vmem:[%s7 + $0xd4] sm:$0xf]
    %v232 = vld [vmem:[%s7 + $0xd8] sm:$0xf]
    %v233 = vld [vmem:[%s7 + $0xdc] sm:$0xf]
    %v234 = vld [vmem:[%s7 + $0xe0] sm:$0xf]
    %v235 = vld [vmem:[%s7 + $0xe4] sm:$0xf]
    %v236 = vld [vmem:[%s7 + $0xe8] sm:$0xf]
    %v237 = vld [vmem:[%s7 + $0xec] sm:$0xf]
    %v238 = vld [vmem:[%s7 + $0xf0] sm:$0xf]
    %v239 = vld [vmem:[%s7 + $0xf4] sm:$0xf]
    %v240 = vld [vmem:[%s7 + $0xf8] sm:$0xf]
    %v241 = vld [vmem:[%s7 + $0xfc] sm:$0xf]
    %v242 = vld [vmem:[%s8] sm:$0x1]
    %v243 = vld [vmem:[%s0] sm:$0xff]
    %v244 = vld [vmem:[%s0 + $0x8] sm:$0xff]
    %v245 = vld [vmem:[%s0 + $0x10] sm:$0xff]
    %v246 = vld [vmem:[%s0 + $0x18] sm:$0xff]
    %v247 = vld [vmem:[%s0 + $0x20] sm:$0xff]
    %v248 = vld [vmem:[%s0 + $0x28] sm:$0xff]
    %v249 = vld [vmem:[%s0 + $0x30] sm:$0xff]
    %v250 = vld [vmem:[%s0 + $0x38] sm:$0xff]
    %v251 = vld [vmem:[%s0 + $0x40] sm:$0xff]
    %v252 = vld [vmem:[%s0 + $0x48] sm:$0xff]
    %v253 = vld [vmem:[%s0 + $0x50] sm:$0xff]
    %v254 = vld [vmem:[%s0 + $0x58] sm:$0xff]
    %v255 = vld [vmem:[%s0 + $0x60] sm:$0xff]
    %v256 = vld [vmem:[%s0 + $0x68] sm:$0xff]
    %v257 = vld [vmem:[%s0 + $0x70] sm:$0xff]
    %v258 = vld [vmem:[%s0 + $0x78] sm:$0xff]
    %v259 = vld [vmem:[%s0 + $0x80] sm:$0xff]
    %v260 = vld [vmem:[%s0 + $0x88] sm:$0xff]
    %v261 = vld [vmem:[%s0 + $0x90] sm:$0xff]
    %v262 = vld [vmem:[%s0 + $0x98] sm:$0xff]
    %v263 = vld [vmem:[%s0 + $0xa0] sm:$0xff]
    %v264 = vld [vmem:[%s0 + $0xa8] sm:$0xff]
    %v265 = vld [vmem:[%s0 + $0xb0] sm:$0xff]
    %v266 = vld [vmem:[%s0 + $0xb8] sm:$0xff]
    %v267 = vld [vmem:[%s0 + $0xc0] sm:$0xff]
    %v268 = vld [vmem:[%s0 + $0xc8] sm:$0xff]
    %v269 = vld [vmem:[%s0 + $0xd0] sm:$0xff]
    %v270 = vld [vmem:[%s0 + $0xd8] sm:$0xff]
    %v271 = vld [vmem:[%s0 + $0xe0] sm:$0xff]
    %v272 = vld [vmem:[%s0 + $0xe8] sm:$0xff]
    %v273 = vld [vmem:[%s0 + $0xf0] sm:$0xff]
    %v274 = vld [vmem:[%s0 + $0xf8] sm:$0xff]
    %v275 = vpack.c.bf16 %v244, %v243
    %v276 = vpack.c.bf16 %v246, %v245
    %v277 = vpack.c.bf16 %v248, %v247
    %v278 = vpack.c.bf16 %v250, %v249
    %v279 = vpack.c.bf16 %v252, %v251
    %v280 = vpack.c.bf16 %v254, %v253
    %v281 = vpack.c.bf16 %v256, %v255
    %v282 = vpack.c.bf16 %v258, %v257
    %v283 = vpack.c.bf16 %v260, %v259
    %v284 = vpack.c.bf16 %v262, %v261
    %v285 = vpack.c.bf16 %v264, %v263
    %v286 = vpack.c.bf16 %v266, %v265
    %v287 = vpack.c.bf16 %v268, %v267
    %v288 = vpack.c.bf16 %v270, %v269
    %v289 = vpack.c.bf16 %v272, %v271
    %v290 = vpack.c.bf16 %v274, %v273
    %v292 = vlaneseq
    %v293 = vshrl.u32 %v292, 7
    %v294 = vsub.s32 0, %v293
    %v295 = vrot.slane %v63, %v294
    %vm297 = vcmask 48128
    %v299 = vsel %vm297, %v275, 0
    %v302 = vsel %vm297, %v276, 0
    %v305 = vsel %vm297, %v277, 0
    %v308 = vsel %vm297, %v278, 0
    %v311 = vsel %vm297, %v279, 0
    %v314 = vsel %vm297, %v280, 0
    %v317 = vsel %vm297, %v281, 0
    %v320 = vsel %vm297, %v282, 0
    %v323 = vsel %vm297, %v283, 0
    %v326 = vsel %vm297, %v284, 0
    %v329 = vsel %vm297, %v285, 0
    %v332 = vsel %vm297, %v286, 0
    %v335 = vsel %vm297, %v287, 0
    %v338 = vsel %vm297, %v288, 0
    %v341 = vsel %vm297, %v289, 0
    %v344 = vsel %vm297, %v290, 0
    %vm346 = vcmask 1042432
    %v348 = vsel %vm346, %v62, 0
    %350 = vmatprep.subr.bf16.mxu0 0
    %351 = vmatpush1.bf16.msra.mxu0 %v348
    %352 = vmatprep.subr.bf16.mxu0 0
    %353 = vmatpush1.bf16.msra.mxu0 0
    %354 = vmatprep.subr.bf16.mxu0 0
    %355 = vmatpush1.bf16.msra.mxu0 0
    %356 = vmatprep.subr.bf16.mxu0 0
    %357 = vmatpush1.bf16.msra.mxu0 0
    %358 = vmatprep.subr.bf16.mxu0 0
    %359 = vmatpush1.bf16.msra.mxu0 0
    %360 = vmatprep.subr.bf16.mxu0 0
    %361 = vmatpush1.bf16.msra.mxu0 0
    %362 = vmatprep.subr.bf16.mxu0 0
    %363 = vmatpush1.bf16.msra.mxu0 0
    %364 = vmatprep.subr.bf16.mxu0 0
    %365 = vmatpush1.bf16.msra.mxu0 0
    %366 = vmatprep.subr.bf16.mxu0 0
    %367 = vmatpush1.bf16.msra.mxu0 0
    %368 = vmatprep.subr.bf16.mxu0 0
    %369 = vmatpush1.bf16.msra.mxu0 0
    %370 = vmatprep.subr.bf16.mxu0 0
    %371 = vmatpush1.bf16.msra.mxu0 0
    %372 = vmatprep.subr.bf16.mxu0 0
    %373 = vmatpush1.bf16.msra.mxu0 0
    %374 = vmatprep.subr.bf16.mxu0 0
    %375 = vmatpush1.bf16.msra.mxu0 0
    %376 = vmatprep.subr.bf16.mxu0 0
    %377 = vmatpush1.bf16.msra.mxu0 0
    %378 = vmatprep.subr.bf16.mxu0 0
    %379 = vmatpush1.bf16.msra.mxu0 0
    %380 = vmatprep.subr.bf16.mxu0 0
    %381 = vmatpush1.bf16.msra.mxu0 0
    %382 = vmatprep.mubr.bf16.mxu0 0
    %383 = vmatmul.mubr.bf16.gmra.mrb[0].mxu0 %v299
    %v384 = vpop.f32.mrb[0].mxu0
    %v385 = vadd.f32 %v295, %v384
    %v386 = vpop.f32.mrb[0].mxu0
    %v387 = vpop.f32.mrb[0].mxu0
    %v388 = vadd.f32 %v295, %v387
    %v389 = vpop.f32.mrb[0].mxu0
    %390 = vmatprep.mubr.bf16.mxu0 0
    %391 = vmatmul.mubr.bf16.gmra.mrb[0].mxu0 %v302
    %v392 = vpop.f32.mrb[0].mxu0
    %v393 = vadd.f32 %v295, %v392
    %v394 = vpop.f32.mrb[0].mxu0
    %v395 = vpop.f32.mrb[0].mxu0
    %v396 = vadd.f32 %v295, %v395
    %v397 = vpop.f32.mrb[0].mxu0
    %398 = vmatprep.mubr.bf16.mxu0 0
    %399 = vmatmul.mubr.bf16.gmra.mrb[0].mxu0 %v305
    %v400 = vpop.f32.mrb[0].mxu0
    %v401 = vadd.f32 %v295, %v400
    %v402 = vpop.f32.mrb[0].mxu0
    %v403 = vpop.f32.mrb[0].mxu0
    %v404 = vadd.f32 %v295, %v403
    %v405 = vpop.f32.mrb[0].mxu0
    %406 = vmatprep.mubr.bf16.mxu0 0
    %407 = vmatmul.mubr.bf16.gmra.mrb[0].mxu0 %v308
    %v408 = vpop.f32.mrb[0].mxu0
    %v409 = vadd.f32 %v295, %v408
    %v410 = vpop.f32.mrb[0].mxu0
    %v411 = vpop.f32.mrb[0].mxu0
    %v412 = vadd.f32 %v295, %v411
    %v413 = vpop.f32.mrb[0].mxu0
    %414 = vmatprep.mubr.bf16.mxu0 0
    %415 = vmatmul.mubr.bf16.gmra.mrb[0].mxu0 %v311
    %v416 = vpop.f32.mrb[0].mxu0
    %v417 = vadd.f32 %v295, %v416
    %v418 = vpop.f32.mrb[0].mxu0
    %v419 = vpop.f32.mrb[0].mxu0
    %v420 = vadd.f32 %v295, %v419
    %v421 = vpop.f32.mrb[0].mxu0
    %422 = vmatprep.mubr.bf16.mxu0 0
    %423 = vmatmul.mubr.bf16.gmra.mrb[0].mxu0 %v314
    %v424 = vpop.f32.mrb[0].mxu0
    %v425 = vadd.f32 %v295, %v424
    %v426 = vpop.f32.mrb[0].mxu0
    %v427 = vpop.f32.mrb[0].mxu0
    %v428 = vadd.f32 %v295, %v427
    %v429 = vpop.f32.mrb[0].mxu0
    %430 = vmatprep.mubr.bf16.mxu0 0
    %431 = vmatmul.mubr.bf16.gmra.mrb[0].mxu0 %v317
    %v432 = vpop.f32.mrb[0].mxu0
    %v433 = vadd.f32 %v295, %v432
    %v434 = vpop.f32.mrb[0].mxu0
    %v435 = vpop.f32.mrb[0].mxu0
    %v436 = vadd.f32 %v295, %v435
    %v437 = vpop.f32.mrb[0].mxu0
    %438 = vmatprep.mubr.bf16.mxu0 0
    %439 = vmatmul.mubr.bf16.gmra.mrb[0].mxu0 %v320
    %v440 = vpop.f32.mrb[0].mxu0
    %v441 = vadd.f32 %v295, %v440
    %v442 = vpop.f32.mrb[0].mxu0
    %v443 = vpop.f32.mrb[0].mxu0
    %v444 = vadd.f32 %v295, %v443
    %v445 = vpop.f32.mrb[0].mxu0
    %446 = vmatprep.mubr.bf16.mxu0 0
    %447 = vmatmul.mubr.bf16.gmra.mrb[0].mxu0 %v323
    %v448 = vpop.f32.mrb[0].mxu0
    %v449 = vadd.f32 %v295, %v448
    %v450 = vpop.f32.mrb[0].mxu0
    %v451 = vpop.f32.mrb[0].mxu0
    %v452 = vadd.f32 %v295, %v451
    %v453 = vpop.f32.mrb[0].mxu0
    %454 = vmatprep.mubr.bf16.mxu0 0
    %455 = vmatmul.mubr.bf16.gmra.mrb[0].mxu0 %v326
    %v456 = vpop.f32.mrb[0].mxu0
    %v457 = vadd.f32 %v295, %v456
    %v458 = vpop.f32.mrb[0].mxu0
    %v459 = vpop.f32.mrb[0].mxu0
    %v460 = vadd.f32 %v295, %v459
    %v461 = vpop.f32.mrb[0].mxu0
    %462 = vmatprep.mubr.bf16.mxu0 0
    %463 = vmatmul.mubr.bf16.gmra.mrb[0].mxu0 %v329
    %v464 = vpop.f32.mrb[0].mxu0
    %v465 = vadd.f32 %v295, %v464
    %v466 = vpop.f32.mrb[0].mxu0
    %v467 = vpop.f32.mrb[0].mxu0
    %v468 = vadd.f32 %v295, %v467
    %v469 = vpop.f32.mrb[0].mxu0
    %470 = vmatprep.mubr.bf16.mxu0 0
    %471 = vmatmul.mubr.bf16.gmra.mrb[0].mxu0 %v332
    %v472 = vpop.f32.mrb[0].mxu0
    %v473 = vadd.f32 %v295, %v472
    %v474 = vpop.f32.mrb[0].mxu0
    %v475 = vpop.f32.mrb[0].mxu0
    %v476 = vadd.f32 %v295, %v475
    %v477 = vpop.f32.mrb[0].mxu0
    %478 = vmatprep.mubr.bf16.mxu0 0
    %479 = vmatmul.mubr.bf16.gmra.mrb[0].mxu0 %v335
    %v480 = vpop.f32.mrb[0].mxu0
    %v481 = vadd.f32 %v295, %v480
    %v482 = vpop.f32.mrb[0].mxu0
    %v483 = vpop.f32.mrb[0].mxu0
    %v484 = vadd.f32 %v295, %v483
    %v485 = vpop.f32.mrb[0].mxu0
    %486 = vmatprep.mubr.bf16.mxu0 0
    %487 = vmatmul.mubr.bf16.gmra.mrb[0].mxu0 %v338
    %v488 = vpop.f32.mrb[0].mxu0
    %v489 = vadd.f32 %v295, %v488
    %v490 = vpop.f32.mrb[0].mxu0
    %v491 = vpop.f32.mrb[0].mxu0
    %v492 = vadd.f32 %v295, %v491
    %v493 = vpop.f32.mrb[0].mxu0
    %494 = vmatprep.mubr.bf16.mxu0 0
    %495 = vmatmul.mubr.bf16.gmra.mrb[0].mxu0 %v341
    %v496 = vpop.f32.mrb[0].mxu0
    %v497 = vadd.f32 %v295, %v496
    %v498 = vpop.f32.mrb[0].mxu0
    %v499 = vpop.f32.mrb[0].mxu0
    %v500 = vadd.f32 %v295, %v499
    %v501 = vpop.f32.mrb[0].mxu0
    %502 = vmatprep.mubr.bf16.mxu0 0
    %503 = vmatmul.mubr.bf16.gmra.mrb[0].mxu0 %v344
    %v504 = vpop.f32.mrb[0].mxu0
    %v505 = vadd.f32 %v295, %v504
    %v506 = vpop.f32.mrb[0].mxu0
    %v507 = vpop.f32.mrb[0].mxu0
    %v508 = vadd.f32 %v295, %v507
    %v509 = vpop.f32.mrb[0].mxu0
    %510 = vdwg.mxu0
    %v511 = vmax.f32 %v385, 0.0
    %v512 = vmax.f32 %v388, 0.0
    %v513 = vmax.f32 %v393, 0.0
    %v514 = vmax.f32 %v396, 0.0
    %v515 = vmax.f32 %v401, 0.0
    %v516 = vmax.f32 %v404, 0.0
    %v517 = vmax.f32 %v409, 0.0
    %v518 = vmax.f32 %v412, 0.0
    %v519 = vmax.f32 %v417, 0.0
    %v520 = vmax.f32 %v420, 0.0
    %v521 = vmax.f32 %v425, 0.0
    %v522 = vmax.f32 %v428, 0.0
    %v523 = vmax.f32 %v433, 0.0
    %v524 = vmax.f32 %v436, 0.0
    %v525 = vmax.f32 %v441, 0.0
    %v526 = vmax.f32 %v444, 0.0
    %v527 = vmax.f32 %v449, 0.0
    %v528 = vmax.f32 %v452, 0.0
    %v529 = vmax.f32 %v457, 0.0
    %v530 = vmax.f32 %v460, 0.0
    %v531 = vmax.f32 %v465, 0.0
    %v532 = vmax.f32 %v468, 0.0
    %v533 = vmax.f32 %v473, 0.0
    %v534 = vmax.f32 %v476, 0.0
    %v535 = vmax.f32 %v481, 0.0
    %v536 = vmax.f32 %v484, 0.0
    %v537 = vmax.f32 %v489, 0.0
    %v538 = vmax.f32 %v492, 0.0
    %v539 = vmax.f32 %v497, 0.0
    %v540 = vmax.f32 %v500, 0.0
    %v541 = vmax.f32 %v505, 0.0
    %v542 = vmax.f32 %v508, 0.0
    %v543 = vpack.c.bf16 %v512, %v511
    %v544 = vpack.c.bf16 %v514, %v513
    %v545 = vpack.c.bf16 %v516, %v515
    %v546 = vpack.c.bf16 %v518, %v517
    %v547 = vpack.c.bf16 %v520, %v519
    %v548 = vpack.c.bf16 %v522, %v521
    %v549 = vpack.c.bf16 %v524, %v523
    %v550 = vpack.c.bf16 %v526, %v525
    %v551 = vpack.c.bf16 %v528, %v527
    %v552 = vpack.c.bf16 %v530, %v529
    %v553 = vpack.c.bf16 %v532, %v531
    %v554 = vpack.c.bf16 %v534, %v533
    %v555 = vpack.c.bf16 %v536, %v535
    %v556 = vpack.c.bf16 %v538, %v537
    %v557 = vpack.c.bf16 %v540, %v539
    %v558 = vpack.c.bf16 %v542, %v541
    %v607 = vunpack.c.l.b16 %v64
    %v608 = vunpack.c.h.b16 %v64
    %v609 = vunpack.c.l.b16 %v65
    %v610 = vunpack.c.h.b16 %v65
    %v611 = vunpack.c.l.b16 %v66
    %v612 = vunpack.c.h.b16 %v66
    %v613 = vunpack.c.l.b16 %v67
    %v614 = vunpack.c.h.b16 %v67
    %v615 = vunpack.c.l.b16 %v68
    %v616 = vunpack.c.h.b16 %v68
    %v617 = vunpack.c.l.b16 %v69
    %v618 = vunpack.c.h.b16 %v69
    %v619 = vunpack.c.l.b16 %v70
    %v620 = vunpack.c.h.b16 %v70
    %v621 = vunpack.c.l.b16 %v71
    %v622 = vunpack.c.h.b16 %v71
    %v623 = vunpack.c.l.b16 %v72
    %v624 = vunpack.c.h.b16 %v72
    %v625 = vunpack.c.l.b16 %v73
    %v626 = vunpack.c.h.b16 %v73
    %v627 = vunpack.c.l.b16 %v74
    %v628 = vunpack.c.h.b16 %v74
    %v629 = vunpack.c.l.b16 %v75
    %v630 = vunpack.c.h.b16 %v75
    %v631 = vunpack.c.l.b16 %v76
    %v632 = vunpack.c.h.b16 %v76
    %v633 = vunpack.c.l.b16 %v77
    %v634 = vunpack.c.h.b16 %v77
    %v635 = vunpack.c.l.b16 %v78
    %v636 = vunpack.c.h.b16 %v78
    %v637 = vunpack.c.l.b16 %v79
    %v638 = vunpack.c.h.b16 %v79
    %v639 = vunpack.c.l.b16 %v80
    %v640 = vunpack.c.h.b16 %v80
    %v641 = vunpack.c.l.b16 %v81
    %v642 = vunpack.c.h.b16 %v81
    %v643 = vunpack.c.l.b16 %v82
    %v644 = vunpack.c.h.b16 %v82
    %v645 = vunpack.c.l.b16 %v83
    %v646 = vunpack.c.h.b16 %v83
    %v647 = vunpack.c.l.b16 %v84
    %v648 = vunpack.c.h.b16 %v84
    %v649 = vunpack.c.l.b16 %v85
    %v650 = vunpack.c.h.b16 %v85
    %v651 = vunpack.c.l.b16 %v86
    %v652 = vunpack.c.h.b16 %v86
    %v653 = vunpack.c.l.b16 %v87
    %v654 = vunpack.c.h.b16 %v87
    %v655 = vunpack.c.l.b16 %v88
    %v656 = vunpack.c.h.b16 %v88
    %v657 = vunpack.c.l.b16 %v89
    %v658 = vunpack.c.h.b16 %v89
    %v659 = vunpack.c.l.b16 %v90
    %v660 = vunpack.c.h.b16 %v90
    %v661 = vunpack.c.l.b16 %v91
    %v662 = vunpack.c.h.b16 %v91
    %v663 = vunpack.c.l.b16 %v92
    %v664 = vunpack.c.h.b16 %v92
    %v665 = vunpack.c.l.b16 %v93
    %v666 = vunpack.c.h.b16 %v93
    %v667 = vunpack.c.l.b16 %v94
    %v668 = vunpack.c.h.b16 %v94
    %v669 = vunpack.c.l.b16 %v95
    %v670 = vunpack.c.h.b16 %v95
    %v671 = vunpack.c.l.b16 %v96
    %v672 = vunpack.c.h.b16 %v96
    %v673 = vunpack.c.l.b16 %v97
    %v674 = vunpack.c.h.b16 %v97
    %v675 = vunpack.c.l.b16 %v98
    %v676 = vunpack.c.h.b16 %v98
    %v677 = vunpack.c.l.b16 %v99
    %v678 = vunpack.c.h.b16 %v99
    %v679 = vunpack.c.l.b16 %v100
    %v680 = vunpack.c.h.b16 %v100
    %v681 = vunpack.c.l.b16 %v101
    %v682 = vunpack.c.h.b16 %v101
    %v683 = vunpack.c.l.b16 %v102
    %v684 = vunpack.c.h.b16 %v102
    %v685 = vunpack.c.l.b16 %v103
    %v686 = vunpack.c.h.b16 %v103
    %v687 = vunpack.c.l.b16 %v104
    %v688 = vunpack.c.h.b16 %v104
    %v689 = vunpack.c.l.b16 %v105
    %v690 = vunpack.c.h.b16 %v105
    %v691 = vunpack.c.l.b16 %v106
    %v692 = vunpack.c.h.b16 %v106
    %v693 = vunpack.c.l.b16 %v107
    %v694 = vunpack.c.h.b16 %v107
    %v695 = vunpack.c.l.b16 %v108
    %v696 = vunpack.c.h.b16 %v108
    %v697 = vunpack.c.l.b16 %v109
    %v698 = vunpack.c.h.b16 %v109
    %v699 = vunpack.c.l.b16 %v110
    %v700 = vunpack.c.h.b16 %v110
    %v701 = vunpack.c.l.b16 %v111
    %v702 = vunpack.c.h.b16 %v111
    %v703 = vpack.c.b16 %v613, %v607
    %v704 = vpack.c.b16 %v614, %v608
    %v705 = vpack.c.b16 %v615, %v609
    %v706 = vpack.c.b16 %v616, %v610
    %v707 = vpack.c.b16 %v617, %v611
    %v708 = vpack.c.b16 %v618, %v612
    %v709 = vpack.c.b16 %v625, %v619
    %v710 = vpack.c.b16 %v626, %v620
    %v711 = vpack.c.b16 %v627, %v621
    %v712 = vpack.c.b16 %v628, %v622
    %v713 = vpack.c.b16 %v629, %v623
    %v714 = vpack.c.b16 %v630, %v624
    %v715 = vpack.c.b16 %v637, %v631
    %v716 = vpack.c.b16 %v638, %v632
    %v717 = vpack.c.b16 %v639, %v633
    %v718 = vpack.c.b16 %v640, %v634
    %v719 = vpack.c.b16 %v641, %v635
    %v720 = vpack.c.b16 %v642, %v636
    %v721 = vpack.c.b16 %v649, %v643
    %v722 = vpack.c.b16 %v650, %v644
    %v723 = vpack.c.b16 %v651, %v645
    %v724 = vpack.c.b16 %v652, %v646
    %v725 = vpack.c.b16 %v653, %v647
    %v726 = vpack.c.b16 %v654, %v648
    %v727 = vpack.c.b16 %v661, %v655
    %v728 = vpack.c.b16 %v662, %v656
    %v729 = vpack.c.b16 %v663, %v657
    %v730 = vpack.c.b16 %v664, %v658
    %v731 = vpack.c.b16 %v665, %v659
    %v732 = vpack.c.b16 %v666, %v660
    %v733 = vpack.c.b16 %v673, %v667
    %v734 = vpack.c.b16 %v674, %v668
    %v735 = vpack.c.b16 %v675, %v669
    %v736 = vpack.c.b16 %v676, %v670
    %v737 = vpack.c.b16 %v677, %v671
    %v738 = vpack.c.b16 %v678, %v672
    %v739 = vpack.c.b16 %v685, %v679
    %v740 = vpack.c.b16 %v686, %v680
    %v741 = vpack.c.b16 %v687, %v681
    %v742 = vpack.c.b16 %v688, %v682
    %v743 = vpack.c.b16 %v689, %v683
    %v744 = vpack.c.b16 %v690, %v684
    %v745 = vpack.c.b16 %v697, %v691
    %v746 = vpack.c.b16 %v698, %v692
    %v747 = vpack.c.b16 %v699, %v693
    %v748 = vpack.c.b16 %v700, %v694
    %v749 = vpack.c.b16 %v701, %v695
    %v750 = vpack.c.b16 %v702, %v696
    %799 = vmatprep.subr.bf16.mxu0 %v704
    %800 = vmatpush1.bf16.msra.mxu0 %v703
    %801 = vmatprep.subr.bf16.mxu0 %v710
    %802 = vmatpush1.bf16.msra.mxu0 %v709
    %803 = vmatprep.subr.bf16.mxu0 %v716
    %804 = vmatpush1.bf16.msra.mxu0 %v715
    %805 = vmatprep.subr.bf16.mxu0 %v722
    %806 = vmatpush1.bf16.msra.mxu0 %v721
    %807 = vmatprep.subr.bf16.mxu0 %v728
    %808 = vmatpush1.bf16.msra.mxu0 %v727
    %809 = vmatprep.subr.bf16.mxu0 %v734
    %810 = vmatpush1.bf16.msra.mxu0 %v733
    %811 = vmatprep.subr.bf16.mxu0 %v740
    %812 = vmatpush1.bf16.msra.mxu0 %v739
    %813 = vmatprep.subr.bf16.mxu0 %v746
    %814 = vmatpush1.bf16.msra.mxu0 %v745
    %815 = vmatprep.subr.bf16.mxu0 0
    %816 = vmatpush1.bf16.msra.mxu0 0
    %817 = vmatprep.subr.bf16.mxu0 0
    %818 = vmatpush1.bf16.msra.mxu0 0
    %819 = vmatprep.subr.bf16.mxu0 0
    %820 = vmatpush1.bf16.msra.mxu0 0
    %821 = vmatprep.subr.bf16.mxu0 0
    %822 = vmatpush1.bf16.msra.mxu0 0
    %823 = vmatprep.subr.bf16.mxu0 0
    %824 = vmatpush1.bf16.msra.mxu0 0
    %825 = vmatprep.subr.bf16.mxu0 0
    %826 = vmatpush1.bf16.msra.mxu0 0
    %827 = vmatprep.subr.bf16.mxu0 0
    %828 = vmatpush1.bf16.msra.mxu0 0
    %829 = vmatprep.subr.bf16.mxu0 0
    %830 = vmatpush1.bf16.msra.mxu0 0
    %831 = vmatprep.mubr.bf16.mxu0 0
    %832 = vmatmul.mubr.bf16.gmra.mrb[0].mxu0 %v543
    %v833 = vpop.f32.mrb[0].mxu0
    %v834 = vadd.f32 0.0, %v833
    %v835 = vpop.f32.mrb[0].mxu0
    %v836 = vadd.f32 0.0, %v835
    %v837 = vpop.f32.mrb[0].mxu0
    %v838 = vadd.f32 0.0, %v837
    %v839 = vpop.f32.mrb[0].mxu0
    %v840 = vadd.f32 0.0, %v839
    %841 = vmatprep.mubr.bf16.mxu0 0
    %842 = vmatmul.mubr.bf16.gmra.mrb[0].mxu0 %v544
    %v843 = vpop.f32.mrb[0].mxu0
    %v844 = vadd.f32 0.0, %v843
    %v845 = vpop.f32.mrb[0].mxu0
    %v846 = vadd.f32 0.0, %v845
    %v847 = vpop.f32.mrb[0].mxu0
    %v848 = vadd.f32 0.0, %v847
    %v849 = vpop.f32.mrb[0].mxu0
    %v850 = vadd.f32 0.0, %v849
    %851 = vmatprep.mubr.bf16.mxu0 0
    %852 = vmatmul.mubr.bf16.gmra.mrb[0].mxu0 %v545
    %v853 = vpop.f32.mrb[0].mxu0
    %v854 = vadd.f32 0.0, %v853
    %v855 = vpop.f32.mrb[0].mxu0
    %v856 = vadd.f32 0.0, %v855
    %v857 = vpop.f32.mrb[0].mxu0
    %v858 = vadd.f32 0.0, %v857
    %v859 = vpop.f32.mrb[0].mxu0
    %v860 = vadd.f32 0.0, %v859
    %861 = vmatprep.mubr.bf16.mxu0 0
    %862 = vmatmul.mubr.bf16.gmra.mrb[0].mxu0 %v546
    %v863 = vpop.f32.mrb[0].mxu0
    %v864 = vadd.f32 0.0, %v863
    %v865 = vpop.f32.mrb[0].mxu0
    %v866 = vadd.f32 0.0, %v865
    %v867 = vpop.f32.mrb[0].mxu0
    %v868 = vadd.f32 0.0, %v867
    %v869 = vpop.f32.mrb[0].mxu0
    %v870 = vadd.f32 0.0, %v869
    %871 = vmatprep.mubr.bf16.mxu0 0
    %872 = vmatmul.mubr.bf16.gmra.mrb[0].mxu0 %v547
    %v873 = vpop.f32.mrb[0].mxu0
    %v874 = vadd.f32 0.0, %v873
    %v875 = vpop.f32.mrb[0].mxu0
    %v876 = vadd.f32 0.0, %v875
    %v877 = vpop.f32.mrb[0].mxu0
    %v878 = vadd.f32 0.0, %v877
    %v879 = vpop.f32.mrb[0].mxu0
    %v880 = vadd.f32 0.0, %v879
    %881 = vmatprep.mubr.bf16.mxu0 0
    %882 = vmatmul.mubr.bf16.gmra.mrb[0].mxu0 %v548
    %v883 = vpop.f32.mrb[0].mxu0
    %v884 = vadd.f32 0.0, %v883
    %v885 = vpop.f32.mrb[0].mxu0
    %v886 = vadd.f32 0.0, %v885
    %v887 = vpop.f32.mrb[0].mxu0
    %v888 = vadd.f32 0.0, %v887
    %v889 = vpop.f32.mrb[0].mxu0
    %v890 = vadd.f32 0.0, %v889
    %891 = vmatprep.mubr.bf16.mxu0 0
    %892 = vmatmul.mubr.bf16.gmra.mrb[0].mxu0 %v549
    %v893 = vpop.f32.mrb[0].mxu0
    %v894 = vadd.f32 0.0, %v893
    %v895 = vpop.f32.mrb[0].mxu0
    %v896 = vadd.f32 0.0, %v895
    %v897 = vpop.f32.mrb[0].mxu0
    %v898 = vadd.f32 0.0, %v897
    %v899 = vpop.f32.mrb[0].mxu0
    %v900 = vadd.f32 0.0, %v899
    %901 = vmatprep.mubr.bf16.mxu0 0
    %902 = vmatmul.mubr.bf16.gmra.mrb[0].mxu0 %v550
    %v903 = vpop.f32.mrb[0].mxu0
    %v904 = vadd.f32 0.0, %v903
    %v905 = vpop.f32.mrb[0].mxu0
    %v906 = vadd.f32 0.0, %v905
    %v907 = vpop.f32.mrb[0].mxu0
    %v908 = vadd.f32 0.0, %v907
    %v909 = vpop.f32.mrb[0].mxu0
    %v910 = vadd.f32 0.0, %v909
    %911 = vmatprep.mubr.bf16.mxu0 0
    %912 = vmatmul.mubr.bf16.gmra.mrb[0].mxu0 %v551
    %v913 = vpop.f32.mrb[0].mxu0
    %v914 = vadd.f32 0.0, %v913
    %v915 = vpop.f32.mrb[0].mxu0
    %v916 = vadd.f32 0.0, %v915
    %v917 = vpop.f32.mrb[0].mxu0
    %v918 = vadd.f32 0.0, %v917
    %v919 = vpop.f32.mrb[0].mxu0
    %v920 = vadd.f32 0.0, %v919
    %921 = vmatprep.mubr.bf16.mxu0 0
    %922 = vmatmul.mubr.bf16.gmra.mrb[0].mxu0 %v552
    %v923 = vpop.f32.mrb[0].mxu0
    %v924 = vadd.f32 0.0, %v923
    %v925 = vpop.f32.mrb[0].mxu0
    %v926 = vadd.f32 0.0, %v925
    %v927 = vpop.f32.mrb[0].mxu0
    %v928 = vadd.f32 0.0, %v927
    %v929 = vpop.f32.mrb[0].mxu0
    %v930 = vadd.f32 0.0, %v929
    %931 = vmatprep.mubr.bf16.mxu0 0
    %932 = vmatmul.mubr.bf16.gmra.mrb[0].mxu0 %v553
    %v933 = vpop.f32.mrb[0].mxu0
    %v934 = vadd.f32 0.0, %v933
    %v935 = vpop.f32.mrb[0].mxu0
    %v936 = vadd.f32 0.0, %v935
    %v937 = vpop.f32.mrb[0].mxu0
    %v938 = vadd.f32 0.0, %v937
    %v939 = vpop.f32.mrb[0].mxu0
    %v940 = vadd.f32 0.0, %v939
    %941 = vmatprep.mubr.bf16.mxu0 0
    %942 = vmatmul.mubr.bf16.gmra.mrb[0].mxu0 %v554
    %v943 = vpop.f32.mrb[0].mxu0
    %v944 = vadd.f32 0.0, %v943
    %v945 = vpop.f32.mrb[0].mxu0
    %v946 = vadd.f32 0.0, %v945
    %v947 = vpop.f32.mrb[0].mxu0
    %v948 = vadd.f32 0.0, %v947
    %v949 = vpop.f32.mrb[0].mxu0
    %v950 = vadd.f32 0.0, %v949
    %951 = vmatprep.mubr.bf16.mxu0 0
    %952 = vmatmul.mubr.bf16.gmra.mrb[0].mxu0 %v555
    %v953 = vpop.f32.mrb[0].mxu0
    %v954 = vadd.f32 0.0, %v953
    %v955 = vpop.f32.mrb[0].mxu0
    %v956 = vadd.f32 0.0, %v955
    %v957 = vpop.f32.mrb[0].mxu0
    %v958 = vadd.f32 0.0, %v957
    %v959 = vpop.f32.mrb[0].mxu0
    %v960 = vadd.f32 0.0, %v959
    %961 = vmatprep.mubr.bf16.mxu0 0
    %962 = vmatmul.mubr.bf16.gmra.mrb[0].mxu0 %v556
    %v963 = vpop.f32.mrb[0].mxu0
    %v964 = vadd.f32 0.0, %v963
    %v965 = vpop.f32.mrb[0].mxu0
    %v966 = vadd.f32 0.0, %v965
    %v967 = vpop.f32.mrb[0].mxu0
    %v968 = vadd.f32 0.0, %v967
    %v969 = vpop.f32.mrb[0].mxu0
    %v970 = vadd.f32 0.0, %v969
    %971 = vmatprep.mubr.bf16.mxu0 0
    %972 = vmatmul.mubr.bf16.gmra.mrb[0].mxu0 %v557
    %v973 = vpop.f32.mrb[0].mxu0
    %v974 = vadd.f32 0.0, %v973
    %v975 = vpop.f32.mrb[0].mxu0
    %v976 = vadd.f32 0.0, %v975
    %v977 = vpop.f32.mrb[0].mxu0
    %v978 = vadd.f32 0.0, %v977
    %v979 = vpop.f32.mrb[0].mxu0
    %v980 = vadd.f32 0.0, %v979
    %981 = vmatprep.mubr.bf16.mxu0 0
    %982 = vmatmul.mubr.bf16.gmra.mrb[0].mxu0 %v558
    %v983 = vpop.f32.mrb[0].mxu0
    %v984 = vadd.f32 0.0, %v983
    %v985 = vpop.f32.mrb[0].mxu0
    %v986 = vadd.f32 0.0, %v985
    %v987 = vpop.f32.mrb[0].mxu0
    %v988 = vadd.f32 0.0, %v987
    %v989 = vpop.f32.mrb[0].mxu0
    %v990 = vadd.f32 0.0, %v989
    %991 = vdwg.mxu0
    %992 = vmatprep.subr.bf16.mxu0 %v706
    %993 = vmatpush1.bf16.msra.mxu0 %v705
    %994 = vmatprep.subr.bf16.mxu0 %v712
    %995 = vmatpush1.bf16.msra.mxu0 %v711
    %996 = vmatprep.subr.bf16.mxu0 %v718
    %997 = vmatpush1.bf16.msra.mxu0 %v717
    %998 = vmatprep.subr.bf16.mxu0 %v724
    %999 = vmatpush1.bf16.msra.mxu0 %v723
    %1000 = vmatprep.subr.bf16.mxu0 %v730
    %1001 = vmatpush1.bf16.msra.mxu0 %v729
    %1002 = vmatprep.subr.bf16.mxu0 %v736
    %1003 = vmatpush1.bf16.msra.mxu0 %v735
    %1004 = vmatprep.subr.bf16.mxu0 %v742
    %1005 = vmatpush1.bf16.msra.mxu0 %v741
    %1006 = vmatprep.subr.bf16.mxu0 %v748
    %1007 = vmatpush1.bf16.msra.mxu0 %v747
    %1008 = vmatprep.subr.bf16.mxu0 0
    %1009 = vmatpush1.bf16.msra.mxu0 0
    %1010 = vmatprep.subr.bf16.mxu0 0
    %1011 = vmatpush1.bf16.msra.mxu0 0
    %1012 = vmatprep.subr.bf16.mxu0 0
    %1013 = vmatpush1.bf16.msra.mxu0 0
    %1014 = vmatprep.subr.bf16.mxu0 0
    %1015 = vmatpush1.bf16.msra.mxu0 0
    %1016 = vmatprep.subr.bf16.mxu0 0
    %1017 = vmatpush1.bf16.msra.mxu0 0
    %1018 = vmatprep.subr.bf16.mxu0 0
    %1019 = vmatpush1.bf16.msra.mxu0 0
    %1020 = vmatprep.subr.bf16.mxu0 0
    %1021 = vmatpush1.bf16.msra.mxu0 0
    %1022 = vmatprep.subr.bf16.mxu0 0
    %1023 = vmatpush1.bf16.msra.mxu0 0
    %1024 = vmatprep.mubr.bf16.mxu0 0
    %1025 = vmatmul.mubr.bf16.gmra.mrb[0].mxu0 %v543
    %v1026 = vpop.f32.mrb[0].mxu0
    %v1027 = vadd.f32 0.0, %v1026
    %v1028 = vpop.f32.mrb[0].mxu0
    %v1029 = vadd.f32 0.0, %v1028
    %v1030 = vpop.f32.mrb[0].mxu0
    %v1031 = vadd.f32 0.0, %v1030
    %v1032 = vpop.f32.mrb[0].mxu0
    %v1033 = vadd.f32 0.0, %v1032
    %1034 = vmatprep.mubr.bf16.mxu0 0
    %1035 = vmatmul.mubr.bf16.gmra.mrb[0].mxu0 %v544
    %v1036 = vpop.f32.mrb[0].mxu0
    %v1037 = vadd.f32 0.0, %v1036
    %v1038 = vpop.f32.mrb[0].mxu0
    %v1039 = vadd.f32 0.0, %v1038
    %v1040 = vpop.f32.mrb[0].mxu0
    %v1041 = vadd.f32 0.0, %v1040
    %v1042 = vpop.f32.mrb[0].mxu0
    %v1043 = vadd.f32 0.0, %v1042
    %1044 = vmatprep.mubr.bf16.mxu0 0
    %1045 = vmatmul.mubr.bf16.gmra.mrb[0].mxu0 %v545
    %v1046 = vpop.f32.mrb[0].mxu0
    %v1047 = vadd.f32 0.0, %v1046
    %v1048 = vpop.f32.mrb[0].mxu0
    %v1049 = vadd.f32 0.0, %v1048
    %v1050 = vpop.f32.mrb[0].mxu0
    %v1051 = vadd.f32 0.0, %v1050
    %v1052 = vpop.f32.mrb[0].mxu0
    %v1053 = vadd.f32 0.0, %v1052
    %1054 = vmatprep.mubr.bf16.mxu0 0
    %1055 = vmatmul.mubr.bf16.gmra.mrb[0].mxu0 %v546
    %v1056 = vpop.f32.mrb[0].mxu0
    %v1057 = vadd.f32 0.0, %v1056
    %v1058 = vpop.f32.mrb[0].mxu0
    %v1059 = vadd.f32 0.0, %v1058
    %v1060 = vpop.f32.mrb[0].mxu0
    %v1061 = vadd.f32 0.0, %v1060
    %v1062 = vpop.f32.mrb[0].mxu0
    %v1063 = vadd.f32 0.0, %v1062
    %1064 = vmatprep.mubr.bf16.mxu0 0
    %1065 = vmatmul.mubr.bf16.gmra.mrb[0].mxu0 %v547
    %v1066 = vpop.f32.mrb[0].mxu0
    %v1067 = vadd.f32 0.0, %v1066
    %v1068 = vpop.f32.mrb[0].mxu0
    %v1069 = vadd.f32 0.0, %v1068
    %v1070 = vpop.f32.mrb[0].mxu0
    %v1071 = vadd.f32 0.0, %v1070
    %v1072 = vpop.f32.mrb[0].mxu0
    %v1073 = vadd.f32 0.0, %v1072
    %1074 = vmatprep.mubr.bf16.mxu0 0
    %1075 = vmatmul.mubr.bf16.gmra.mrb[0].mxu0 %v548
    %v1076 = vpop.f32.mrb[0].mxu0
    %v1077 = vadd.f32 0.0, %v1076
    %v1078 = vpop.f32.mrb[0].mxu0
    %v1079 = vadd.f32 0.0, %v1078
    %v1080 = vpop.f32.mrb[0].mxu0
    %v1081 = vadd.f32 0.0, %v1080
    %v1082 = vpop.f32.mrb[0].mxu0
    %v1083 = vadd.f32 0.0, %v1082
    %1084 = vmatprep.mubr.bf16.mxu0 0
    %1085 = vmatmul.mubr.bf16.gmra.mrb[0].mxu0 %v549
    %v1086 = vpop.f32.mrb[0].mxu0
    %v1087 = vadd.f32 0.0, %v1086
    %v1088 = vpop.f32.mrb[0].mxu0
    %v1089 = vadd.f32 0.0, %v1088
    %v1090 = vpop.f32.mrb[0].mxu0
    %v1091 = vadd.f32 0.0, %v1090
    %v1092 = vpop.f32.mrb[0].mxu0
    %v1093 = vadd.f32 0.0, %v1092
    %1094 = vmatprep.mubr.bf16.mxu0 0
    %1095 = vmatmul.mubr.bf16.gmra.mrb[0].mxu0 %v550
    %v1096 = vpop.f32.mrb[0].mxu0
    %v1097 = vadd.f32 0.0, %v1096
    %v1098 = vpop.f32.mrb[0].mxu0
    %v1099 = vadd.f32 0.0, %v1098
    %v1100 = vpop.f32.mrb[0].mxu0
    %v1101 = vadd.f32 0.0, %v1100
    %v1102 = vpop.f32.mrb[0].mxu0
    %v1103 = vadd.f32 0.0, %v1102
    %1104 = vmatprep.mubr.bf16.mxu0 0
    %1105 = vmatmul.mubr.bf16.gmra.mrb[0].mxu0 %v551
    %v1106 = vpop.f32.mrb[0].mxu0
    %v1107 = vadd.f32 0.0, %v1106
    %v1108 = vpop.f32.mrb[0].mxu0
    %v1109 = vadd.f32 0.0, %v1108
    %v1110 = vpop.f32.mrb[0].mxu0
    %v1111 = vadd.f32 0.0, %v1110
    %v1112 = vpop.f32.mrb[0].mxu0
    %v1113 = vadd.f32 0.0, %v1112
    %1114 = vmatprep.mubr.bf16.mxu0 0
    %1115 = vmatmul.mubr.bf16.gmra.mrb[0].mxu0 %v552
    %v1116 = vpop.f32.mrb[0].mxu0
    %v1117 = vadd.f32 0.0, %v1116
    %v1118 = vpop.f32.mrb[0].mxu0
    %v1119 = vadd.f32 0.0, %v1118
    %v1120 = vpop.f32.mrb[0].mxu0
    %v1121 = vadd.f32 0.0, %v1120
    %v1122 = vpop.f32.mrb[0].mxu0
    %v1123 = vadd.f32 0.0, %v1122
    %1124 = vmatprep.mubr.bf16.mxu0 0
    %1125 = vmatmul.mubr.bf16.gmra.mrb[0].mxu0 %v553
    %v1126 = vpop.f32.mrb[0].mxu0
    %v1127 = vadd.f32 0.0, %v1126
    %v1128 = vpop.f32.mrb[0].mxu0
    %v1129 = vadd.f32 0.0, %v1128
    %v1130 = vpop.f32.mrb[0].mxu0
    %v1131 = vadd.f32 0.0, %v1130
    %v1132 = vpop.f32.mrb[0].mxu0
    %v1133 = vadd.f32 0.0, %v1132
    %1134 = vmatprep.mubr.bf16.mxu0 0
    %1135 = vmatmul.mubr.bf16.gmra.mrb[0].mxu0 %v554
    %v1136 = vpop.f32.mrb[0].mxu0
    %v1137 = vadd.f32 0.0, %v1136
    %v1138 = vpop.f32.mrb[0].mxu0
    %v1139 = vadd.f32 0.0, %v1138
    %v1140 = vpop.f32.mrb[0].mxu0
    %v1141 = vadd.f32 0.0, %v1140
    %v1142 = vpop.f32.mrb[0].mxu0
    %v1143 = vadd.f32 0.0, %v1142
    %1144 = vmatprep.mubr.bf16.mxu0 0
    %1145 = vmatmul.mubr.bf16.gmra.mrb[0].mxu0 %v555
    %v1146 = vpop.f32.mrb[0].mxu0
    %v1147 = vadd.f32 0.0, %v1146
    %v1148 = vpop.f32.mrb[0].mxu0
    %v1149 = vadd.f32 0.0, %v1148
    %v1150 = vpop.f32.mrb[0].mxu0
    %v1151 = vadd.f32 0.0, %v1150
    %v1152 = vpop.f32.mrb[0].mxu0
    %v1153 = vadd.f32 0.0, %v1152
    %1154 = vmatprep.mubr.bf16.mxu0 0
    %1155 = vmatmul.mubr.bf16.gmra.mrb[0].mxu0 %v556
    %v1156 = vpop.f32.mrb[0].mxu0
    %v1157 = vadd.f32 0.0, %v1156
    %v1158 = vpop.f32.mrb[0].mxu0
    %v1159 = vadd.f32 0.0, %v1158
    %v1160 = vpop.f32.mrb[0].mxu0
    %v1161 = vadd.f32 0.0, %v1160
    %v1162 = vpop.f32.mrb[0].mxu0
    %v1163 = vadd.f32 0.0, %v1162
    %1164 = vmatprep.mubr.bf16.mxu0 0
    %1165 = vmatmul.mubr.bf16.gmra.mrb[0].mxu0 %v557
    %v1166 = vpop.f32.mrb[0].mxu0
    %v1167 = vadd.f32 0.0, %v1166
    %v1168 = vpop.f32.mrb[0].mxu0
    %v1169 = vadd.f32 0.0, %v1168
    %v1170 = vpop.f32.mrb[0].mxu0
    %v1171 = vadd.f32 0.0, %v1170
    %v1172 = vpop.f32.mrb[0].mxu0
    %v1173 = vadd.f32 0.0, %v1172
    %1174 = vmatprep.mubr.bf16.mxu0 0
    %1175 = vmatmul.mubr.bf16.gmra.mrb[0].mxu0 %v558
    %v1176 = vpop.f32.mrb[0].mxu0
    %v1177 = vadd.f32 0.0, %v1176
    %v1178 = vpop.f32.mrb[0].mxu0
    %v1179 = vadd.f32 0.0, %v1178
    %v1180 = vpop.f32.mrb[0].mxu0
    %v1181 = vadd.f32 0.0, %v1180
    %v1182 = vpop.f32.mrb[0].mxu0
    %v1183 = vadd.f32 0.0, %v1182
    %1184 = vdwg.mxu0
    %1185 = vmatprep.subr.bf16.mxu0 %v708
    %1186 = vmatpush1.bf16.msra.mxu0 %v707
    %1187 = vmatprep.subr.bf16.mxu0 %v714
    %1188 = vmatpush1.bf16.msra.mxu0 %v713
    %1189 = vmatprep.subr.bf16.mxu0 %v720
    %1190 = vmatpush1.bf16.msra.mxu0 %v719
    %1191 = vmatprep.subr.bf16.mxu0 %v726
    %1192 = vmatpush1.bf16.msra.mxu0 %v725
    %1193 = vmatprep.subr.bf16.mxu0 %v732
    %1194 = vmatpush1.bf16.msra.mxu0 %v731
    %1195 = vmatprep.subr.bf16.mxu0 %v738
    %1196 = vmatpush1.bf16.msra.mxu0 %v737
    %1197 = vmatprep.subr.bf16.mxu0 %v744
    %1198 = vmatpush1.bf16.msra.mxu0 %v743
    %1199 = vmatprep.subr.bf16.mxu0 %v750
    %1200 = vmatpush1.bf16.msra.mxu0 %v749
    %1201 = vmatprep.subr.bf16.mxu0 0
    %1202 = vmatpush1.bf16.msra.mxu0 0
    %1203 = vmatprep.subr.bf16.mxu0 0
    %1204 = vmatpush1.bf16.msra.mxu0 0
    %1205 = vmatprep.subr.bf16.mxu0 0
    %1206 = vmatpush1.bf16.msra.mxu0 0
    %1207 = vmatprep.subr.bf16.mxu0 0
    %1208 = vmatpush1.bf16.msra.mxu0 0
    %1209 = vmatprep.subr.bf16.mxu0 0
    %1210 = vmatpush1.bf16.msra.mxu0 0
    %1211 = vmatprep.subr.bf16.mxu0 0
    %1212 = vmatpush1.bf16.msra.mxu0 0
    %1213 = vmatprep.subr.bf16.mxu0 0
    %1214 = vmatpush1.bf16.msra.mxu0 0
    %1215 = vmatprep.subr.bf16.mxu0 0
    %1216 = vmatpush1.bf16.msra.mxu0 0
    %1217 = vmatprep.mubr.bf16.mxu0 0
    %1218 = vmatmul.mubr.bf16.gmra.mrb[0].mxu0 %v543
    %v1219 = vpop.f32.mrb[0].mxu0
    %v1220 = vadd.f32 0.0, %v1219
    %v1221 = vpop.f32.mrb[0].mxu0
    %v1222 = vadd.f32 0.0, %v1221
    %v1223 = vpop.f32.mrb[0].mxu0
    %v1224 = vadd.f32 0.0, %v1223
    %v1225 = vpop.f32.mrb[0].mxu0
    %v1226 = vadd.f32 0.0, %v1225
    %1227 = vmatprep.mubr.bf16.mxu0 0
    %1228 = vmatmul.mubr.bf16.gmra.mrb[0].mxu0 %v544
    %v1229 = vpop.f32.mrb[0].mxu0
    %v1230 = vadd.f32 0.0, %v1229
    %v1231 = vpop.f32.mrb[0].mxu0
    %v1232 = vadd.f32 0.0, %v1231
    %v1233 = vpop.f32.mrb[0].mxu0
    %v1234 = vadd.f32 0.0, %v1233
    %v1235 = vpop.f32.mrb[0].mxu0
    %v1236 = vadd.f32 0.0, %v1235
    %1237 = vmatprep.mubr.bf16.mxu0 0
    %1238 = vmatmul.mubr.bf16.gmra.mrb[0].mxu0 %v545
    %v1239 = vpop.f32.mrb[0].mxu0
    %v1240 = vadd.f32 0.0, %v1239
    %v1241 = vpop.f32.mrb[0].mxu0
    %v1242 = vadd.f32 0.0, %v1241
    %v1243 = vpop.f32.mrb[0].mxu0
    %v1244 = vadd.f32 0.0, %v1243
    %v1245 = vpop.f32.mrb[0].mxu0
    %v1246 = vadd.f32 0.0, %v1245
    %1247 = vmatprep.mubr.bf16.mxu0 0
    %1248 = vmatmul.mubr.bf16.gmra.mrb[0].mxu0 %v546
    %v1249 = vpop.f32.mrb[0].mxu0
    %v1250 = vadd.f32 0.0, %v1249
    %v1251 = vpop.f32.mrb[0].mxu0
    %v1252 = vadd.f32 0.0, %v1251
    %v1253 = vpop.f32.mrb[0].mxu0
    %v1254 = vadd.f32 0.0, %v1253
    %v1255 = vpop.f32.mrb[0].mxu0
    %v1256 = vadd.f32 0.0, %v1255
    %1257 = vmatprep.mubr.bf16.mxu0 0
    %1258 = vmatmul.mubr.bf16.gmra.mrb[0].mxu0 %v547
    %v1259 = vpop.f32.mrb[0].mxu0
    %v1260 = vadd.f32 0.0, %v1259
    %v1261 = vpop.f32.mrb[0].mxu0
    %v1262 = vadd.f32 0.0, %v1261
    %v1263 = vpop.f32.mrb[0].mxu0
    %v1264 = vadd.f32 0.0, %v1263
    %v1265 = vpop.f32.mrb[0].mxu0
    %v1266 = vadd.f32 0.0, %v1265
    %1267 = vmatprep.mubr.bf16.mxu0 0
    %1268 = vmatmul.mubr.bf16.gmra.mrb[0].mxu0 %v548
    %v1269 = vpop.f32.mrb[0].mxu0
    %v1270 = vadd.f32 0.0, %v1269
    %v1271 = vpop.f32.mrb[0].mxu0
    %v1272 = vadd.f32 0.0, %v1271
    %v1273 = vpop.f32.mrb[0].mxu0
    %v1274 = vadd.f32 0.0, %v1273
    %v1275 = vpop.f32.mrb[0].mxu0
    %v1276 = vadd.f32 0.0, %v1275
    %1277 = vmatprep.mubr.bf16.mxu0 0
    %1278 = vmatmul.mubr.bf16.gmra.mrb[0].mxu0 %v549
    %v1279 = vpop.f32.mrb[0].mxu0
    %v1280 = vadd.f32 0.0, %v1279
    %v1281 = vpop.f32.mrb[0].mxu0
    %v1282 = vadd.f32 0.0, %v1281
    %v1283 = vpop.f32.mrb[0].mxu0
    %v1284 = vadd.f32 0.0, %v1283
    %v1285 = vpop.f32.mrb[0].mxu0
    %v1286 = vadd.f32 0.0, %v1285
    %1287 = vmatprep.mubr.bf16.mxu0 0
    %1288 = vmatmul.mubr.bf16.gmra.mrb[0].mxu0 %v550
    %v1289 = vpop.f32.mrb[0].mxu0
    %v1290 = vadd.f32 0.0, %v1289
    %v1291 = vpop.f32.mrb[0].mxu0
    %v1292 = vadd.f32 0.0, %v1291
    %v1293 = vpop.f32.mrb[0].mxu0
    %v1294 = vadd.f32 0.0, %v1293
    %v1295 = vpop.f32.mrb[0].mxu0
    %v1296 = vadd.f32 0.0, %v1295
    %1297 = vmatprep.mubr.bf16.mxu0 0
    %1298 = vmatmul.mubr.bf16.gmra.mrb[0].mxu0 %v551
    %v1299 = vpop.f32.mrb[0].mxu0
    %v1300 = vadd.f32 0.0, %v1299
    %v1301 = vpop.f32.mrb[0].mxu0
    %v1302 = vadd.f32 0.0, %v1301
    %v1303 = vpop.f32.mrb[0].mxu0
    %v1304 = vadd.f32 0.0, %v1303
    %v1305 = vpop.f32.mrb[0].mxu0
    %v1306 = vadd.f32 0.0, %v1305
    %1307 = vmatprep.mubr.bf16.mxu0 0
    %1308 = vmatmul.mubr.bf16.gmra.mrb[0].mxu0 %v552
    %v1309 = vpop.f32.mrb[0].mxu0
    %v1310 = vadd.f32 0.0, %v1309
    %v1311 = vpop.f32.mrb[0].mxu0
    %v1312 = vadd.f32 0.0, %v1311
    %v1313 = vpop.f32.mrb[0].mxu0
    %v1314 = vadd.f32 0.0, %v1313
    %v1315 = vpop.f32.mrb[0].mxu0
    %v1316 = vadd.f32 0.0, %v1315
    %1317 = vmatprep.mubr.bf16.mxu0 0
    %1318 = vmatmul.mubr.bf16.gmra.mrb[0].mxu0 %v553
    %v1319 = vpop.f32.mrb[0].mxu0
    %v1320 = vadd.f32 0.0, %v1319
    %v1321 = vpop.f32.mrb[0].mxu0
    %v1322 = vadd.f32 0.0, %v1321
    %v1323 = vpop.f32.mrb[0].mxu0
    %v1324 = vadd.f32 0.0, %v1323
    %v1325 = vpop.f32.mrb[0].mxu0
    %v1326 = vadd.f32 0.0, %v1325
    %1327 = vmatprep.mubr.bf16.mxu0 0
    %1328 = vmatmul.mubr.bf16.gmra.mrb[0].mxu0 %v554
    %v1329 = vpop.f32.mrb[0].mxu0
    %v1330 = vadd.f32 0.0, %v1329
    %v1331 = vpop.f32.mrb[0].mxu0
    %v1332 = vadd.f32 0.0, %v1331
    %v1333 = vpop.f32.mrb[0].mxu0
    %v1334 = vadd.f32 0.0, %v1333
    %v1335 = vpop.f32.mrb[0].mxu0
    %v1336 = vadd.f32 0.0, %v1335
    %1337 = vmatprep.mubr.bf16.mxu0 0
    %1338 = vmatmul.mubr.bf16.gmra.mrb[0].mxu0 %v555
    %v1339 = vpop.f32.mrb[0].mxu0
    %v1340 = vadd.f32 0.0, %v1339
    %v1341 = vpop.f32.mrb[0].mxu0
    %v1342 = vadd.f32 0.0, %v1341
    %v1343 = vpop.f32.mrb[0].mxu0
    %v1344 = vadd.f32 0.0, %v1343
    %v1345 = vpop.f32.mrb[0].mxu0
    %v1346 = vadd.f32 0.0, %v1345
    %1347 = vmatprep.mubr.bf16.mxu0 0
    %1348 = vmatmul.mubr.bf16.gmra.mrb[0].mxu0 %v556
    %v1349 = vpop.f32.mrb[0].mxu0
    %v1350 = vadd.f32 0.0, %v1349
    %v1351 = vpop.f32.mrb[0].mxu0
    %v1352 = vadd.f32 0.0, %v1351
    %v1353 = vpop.f32.mrb[0].mxu0
    %v1354 = vadd.f32 0.0, %v1353
    %v1355 = vpop.f32.mrb[0].mxu0
    %v1356 = vadd.f32 0.0, %v1355
    %1357 = vmatprep.mubr.bf16.mxu0 0
    %1358 = vmatmul.mubr.bf16.gmra.mrb[0].mxu0 %v557
    %v1359 = vpop.f32.mrb[0].mxu0
    %v1360 = vadd.f32 0.0, %v1359
    %v1361 = vpop.f32.mrb[0].mxu0
    %v1362 = vadd.f32 0.0, %v1361
    %v1363 = vpop.f32.mrb[0].mxu0
    %v1364 = vadd.f32 0.0, %v1363
    %v1365 = vpop.f32.mrb[0].mxu0
    %v1366 = vadd.f32 0.0, %v1365
    %1367 = vmatprep.mubr.bf16.mxu0 0
    %1368 = vmatmul.mubr.bf16.gmra.mrb[0].mxu0 %v558
    %v1369 = vpop.f32.mrb[0].mxu0
    %v1370 = vadd.f32 0.0, %v1369
    %v1371 = vpop.f32.mrb[0].mxu0
    %v1372 = vadd.f32 0.0, %v1371
    %v1373 = vpop.f32.mrb[0].mxu0
    %v1374 = vadd.f32 0.0, %v1373
    %v1375 = vpop.f32.mrb[0].mxu0
    %v1376 = vadd.f32 0.0, %v1375
    %1377 = vdwg.mxu0
    %v1378 = vmax.f32 %v834, %v838
    %v1379 = vmax.f32 %v1378, %v844
    %v1380 = vmax.f32 %v1379, %v848
    %v1381 = vrot.slane %v1380, 4
    %v1382 = vmax.f32 %v1380, %v1381
    %v1383 = vrot.slane %v1382, 2
    %v1384 = vmax.f32 %v1382, %v1383
    %v1385 = vrot.slane %v1384, 1
    %v1386 = vmax.f32 %v1384, %v1385
    %v1387 = vmax.f32 %v836, %v840
    %v1388 = vmax.f32 %v1387, %v846
    %v1389 = vmax.f32 %v1388, %v850
    %v1390 = vrot.slane %v1389, 4
    %v1391 = vmax.f32 %v1389, %v1390
    %v1392 = vrot.slane %v1391, 2
    %v1393 = vmax.f32 %v1391, %v1392
    %v1394 = vrot.slane %v1393, 1
    %v1395 = vmax.f32 %v1393, %v1394
    %v1396 = vmax.f32 %v854, %v858
    %v1397 = vmax.f32 %v1396, %v864
    %v1398 = vmax.f32 %v1397, %v868
    %v1399 = vrot.slane %v1398, 4
    %v1400 = vmax.f32 %v1398, %v1399
    %v1401 = vrot.slane %v1400, 2
    %v1402 = vmax.f32 %v1400, %v1401
    %v1403 = vrot.slane %v1402, 1
    %v1404 = vmax.f32 %v1402, %v1403
    %v1405 = vmax.f32 %v856, %v860
    %v1406 = vmax.f32 %v1405, %v866
    %v1407 = vmax.f32 %v1406, %v870
    %v1408 = vrot.slane %v1407, 4
    %v1409 = vmax.f32 %v1407, %v1408
    %v1410 = vrot.slane %v1409, 2
    %v1411 = vmax.f32 %v1409, %v1410
    %v1412 = vrot.slane %v1411, 1
    %v1413 = vmax.f32 %v1411, %v1412
    %v1414 = vmax.f32 %v874, %v878
    %v1415 = vmax.f32 %v1414, %v884
    %v1416 = vmax.f32 %v1415, %v888
    %v1417 = vrot.slane %v1416, 4
    %v1418 = vmax.f32 %v1416, %v1417
    %v1419 = vrot.slane %v1418, 2
    %v1420 = vmax.f32 %v1418, %v1419
    %v1421 = vrot.slane %v1420, 1
    %v1422 = vmax.f32 %v1420, %v1421
    %v1423 = vmax.f32 %v876, %v880
    %v1424 = vmax.f32 %v1423, %v886
    %v1425 = vmax.f32 %v1424, %v890
    %v1426 = vrot.slane %v1425, 4
    %v1427 = vmax.f32 %v1425, %v1426
    %v1428 = vrot.slane %v1427, 2
    %v1429 = vmax.f32 %v1427, %v1428
    %v1430 = vrot.slane %v1429, 1
    %v1431 = vmax.f32 %v1429, %v1430
    %v1432 = vmax.f32 %v894, %v898
    %v1433 = vmax.f32 %v1432, %v904
    %v1434 = vmax.f32 %v1433, %v908
    %v1435 = vrot.slane %v1434, 4
    %v1436 = vmax.f32 %v1434, %v1435
    %v1437 = vrot.slane %v1436, 2
    %v1438 = vmax.f32 %v1436, %v1437
    %v1439 = vrot.slane %v1438, 1
    %v1440 = vmax.f32 %v1438, %v1439
    %v1441 = vmax.f32 %v896, %v900
    %v1442 = vmax.f32 %v1441, %v906
    %v1443 = vmax.f32 %v1442, %v910
    %v1444 = vrot.slane %v1443, 4
    %v1445 = vmax.f32 %v1443, %v1444
    %v1446 = vrot.slane %v1445, 2
    %v1447 = vmax.f32 %v1445, %v1446
    %v1448 = vrot.slane %v1447, 1
    %v1449 = vmax.f32 %v1447, %v1448
    %v1450 = vmax.f32 %v914, %v918
    %v1451 = vmax.f32 %v1450, %v924
    %v1452 = vmax.f32 %v1451, %v928
    %v1453 = vrot.slane %v1452, 4
    %v1454 = vmax.f32 %v1452, %v1453
    %v1455 = vrot.slane %v1454, 2
    %v1456 = vmax.f32 %v1454, %v1455
    %v1457 = vrot.slane %v1456, 1
    %v1458 = vmax.f32 %v1456, %v1457
    %v1459 = vmax.f32 %v916, %v920
    %v1460 = vmax.f32 %v1459, %v926
    %v1461 = vmax.f32 %v1460, %v930
    %v1462 = vrot.slane %v1461, 4
    %v1463 = vmax.f32 %v1461, %v1462
    %v1464 = vrot.slane %v1463, 2
    %v1465 = vmax.f32 %v1463, %v1464
    %v1466 = vrot.slane %v1465, 1
    %v1467 = vmax.f32 %v1465, %v1466
    %v1468 = vmax.f32 %v934, %v938
    %v1469 = vmax.f32 %v1468, %v944
    %v1470 = vmax.f32 %v1469, %v948
    %v1471 = vrot.slane %v1470, 4
    %v1472 = vmax.f32 %v1470, %v1471
    %v1473 = vrot.slane %v1472, 2
    %v1474 = vmax.f32 %v1472, %v1473
    %v1475 = vrot.slane %v1474, 1
    %v1476 = vmax.f32 %v1474, %v1475
    %v1477 = vmax.f32 %v936, %v940
    %v1478 = vmax.f32 %v1477, %v946
    %v1479 = vmax.f32 %v1478, %v950
    %v1480 = vrot.slane %v1479, 4
    %v1481 = vmax.f32 %v1479, %v1480
    %v1482 = vrot.slane %v1481, 2
    %v1483 = vmax.f32 %v1481, %v1482
    %v1484 = vrot.slane %v1483, 1
    %v1485 = vmax.f32 %v1483, %v1484
    %v1486 = vmax.f32 %v954, %v958
    %v1487 = vmax.f32 %v1486, %v964
    %v1488 = vmax.f32 %v1487, %v968
    %v1489 = vrot.slane %v1488, 4
    %v1490 = vmax.f32 %v1488, %v1489
    %v1491 = vrot.slane %v1490, 2
    %v1492 = vmax.f32 %v1490, %v1491
    %v1493 = vrot.slane %v1492, 1
    %v1494 = vmax.f32 %v1492, %v1493
    %v1495 = vmax.f32 %v956, %v960
    %v1496 = vmax.f32 %v1495, %v966
    %v1497 = vmax.f32 %v1496, %v970
    %v1498 = vrot.slane %v1497, 4
    %v1499 = vmax.f32 %v1497, %v1498
    %v1500 = vrot.slane %v1499, 2
    %v1501 = vmax.f32 %v1499, %v1500
    %v1502 = vrot.slane %v1501, 1
    %v1503 = vmax.f32 %v1501, %v1502
    %v1504 = vmax.f32 %v974, %v978
    %v1505 = vmax.f32 %v1504, %v984
    %v1506 = vmax.f32 %v1505, %v988
    %v1507 = vrot.slane %v1506, 4
    %v1508 = vmax.f32 %v1506, %v1507
    %v1509 = vrot.slane %v1508, 2
    %v1510 = vmax.f32 %v1508, %v1509
    %v1511 = vrot.slane %v1510, 1
    %v1512 = vmax.f32 %v1510, %v1511
    %v1513 = vmax.f32 %v976, %v980
    %v1514 = vmax.f32 %v1513, %v986
    %v1515 = vmax.f32 %v1514, %v990
    %v1516 = vrot.slane %v1515, 4
    %v1517 = vmax.f32 %v1515, %v1516
    %v1518 = vrot.slane %v1517, 2
    %v1519 = vmax.f32 %v1517, %v1518
    %v1520 = vrot.slane %v1519, 1
    %v1521 = vmax.f32 %v1519, %v1520
    %v1523 = vlaneseq
    %v1524 = vshrl.u32 %v1523, 7
    %v1525 = vsub.s32 0, %v1524
    %v1526 = vrot.slane %v112, %v1525
    %v1527 = vlaneseq
    %v1528 = vshrl.u32 %v1527, 7
    %v1529 = vsub.s32 1, %v1528
    %v1530 = vrot.slane %v112, %v1529
    %v1533 = vadd.f32 %v1386, %v1526
    %v1534 = vadd.f32 %v1395, %v1530
    %v1535 = vadd.f32 %v1404, %v1526
    %v1536 = vadd.f32 %v1413, %v1530
    %v1537 = vadd.f32 %v1422, %v1526
    %v1538 = vadd.f32 %v1431, %v1530
    %v1539 = vadd.f32 %v1440, %v1526
    %v1540 = vadd.f32 %v1449, %v1530
    %v1541 = vadd.f32 %v1458, %v1526
    %v1542 = vadd.f32 %v1467, %v1530
    %v1543 = vadd.f32 %v1476, %v1526
    %v1544 = vadd.f32 %v1485, %v1530
    %v1545 = vadd.f32 %v1494, %v1526
    %v1546 = vadd.f32 %v1503, %v1530
    %v1547 = vadd.f32 %v1512, %v1526
    %v1548 = vadd.f32 %v1521, %v1530
    %v1549 = vpack.c.bf16 %v1533, %v1533
    %v1550 = vpack.c.bf16 %v1534, %v1534
    %v1551 = vpack.c.bf16 %v1535, %v1535
    %v1552 = vpack.c.bf16 %v1536, %v1536
    %v1553 = vpack.c.bf16 %v1537, %v1537
    %v1554 = vpack.c.bf16 %v1538, %v1538
    %v1555 = vpack.c.bf16 %v1539, %v1539
    %v1556 = vpack.c.bf16 %v1540, %v1540
    %v1557 = vpack.c.bf16 %v1541, %v1541
    %v1558 = vpack.c.bf16 %v1542, %v1542
    %v1559 = vpack.c.bf16 %v1543, %v1543
    %v1560 = vpack.c.bf16 %v1544, %v1544
    %v1561 = vpack.c.bf16 %v1545, %v1545
    %v1562 = vpack.c.bf16 %v1546, %v1546
    %v1563 = vpack.c.bf16 %v1547, %v1547
    %v1564 = vpack.c.bf16 %v1548, %v1548
    %v1581 = vunpack.c.l.b16 %v1549
    %v1582 = vunpack.c.l.b16 %v1550
    %v1583 = vunpack.c.l.b16 %v1551
    %v1584 = vunpack.c.l.b16 %v1552
    %v1585 = vunpack.c.l.b16 %v1553
    %v1586 = vunpack.c.l.b16 %v1554
    %v1587 = vunpack.c.l.b16 %v1555
    %v1588 = vunpack.c.l.b16 %v1556
    %v1589 = vunpack.c.l.b16 %v1557
    %v1590 = vunpack.c.l.b16 %v1558
    %v1591 = vunpack.c.l.b16 %v1559
    %v1592 = vunpack.c.l.b16 %v1560
    %v1593 = vunpack.c.l.b16 %v1561
    %v1594 = vunpack.c.l.b16 %v1562
    %v1595 = vunpack.c.l.b16 %v1563
    %v1596 = vunpack.c.l.b16 %v1564
    %v1597 = vrot.slane %v1583, 7
    %vm1598 = vcmask 1041409
    %v1599 = vsel %vm1598, %v1597, %v1581
    %v1600 = vrot.slane %v1585, 6
    %vm1601 = vcmask 1042434
    %v1602 = vsel %vm1601, %v1600, %v1599
    %v1603 = vrot.slane %v1587, 5
    %vm1604 = vcmask 1043459
    %v1605 = vsel %vm1604, %v1603, %v1602
    %v1606 = vrot.slane %v1589, 4
    %vm1607 = vcmask 1044484
    %v1608 = vsel %vm1607, %v1606, %v1605
    %v1609 = vrot.slane %v1591, 3
    %vm1610 = vcmask 1045509
    %v1611 = vsel %vm1610, %v1609, %v1608
    %v1612 = vrot.slane %v1593, 2
    %vm1613 = vcmask 1046534
    %v1614 = vsel %vm1613, %v1612, %v1611
    %v1615 = vrot.slane %v1595, 1
    %vm1616 = vcmask 1047559
    %v1617 = vsel %vm1616, %v1615, %v1614
    %v1618 = vrot.slane %v1584, 7
    %v1619 = vsel %vm1598, %v1618, %v1582
    %v1620 = vrot.slane %v1586, 6
    %v1621 = vsel %vm1601, %v1620, %v1619
    %v1622 = vrot.slane %v1588, 5
    %v1623 = vsel %vm1604, %v1622, %v1621
    %v1624 = vrot.slane %v1590, 4
    %v1625 = vsel %vm1607, %v1624, %v1623
    %v1626 = vrot.slane %v1592, 3
    %v1627 = vsel %vm1610, %v1626, %v1625
    %v1628 = vrot.slane %v1594, 2
    %v1629 = vsel %vm1613, %v1628, %v1627
    %v1630 = vrot.slane %v1596, 1
    %v1631 = vsel %vm1616, %v1630, %v1629
    %v1632 = vpack.c.b16 %v1617, %v1617
    %v1633 = vpack.c.b16 %v1631, %v1631
    %v1700 = vunpack.c.l.b16 %v113
    %v1701 = vunpack.c.h.b16 %v113
    %v1702 = vunpack.c.l.b16 %v114
    %v1703 = vunpack.c.h.b16 %v114
    %v1704 = vunpack.c.l.b16 %v115
    %v1705 = vunpack.c.h.b16 %v115
    %v1706 = vunpack.c.l.b16 %v116
    %v1707 = vunpack.c.h.b16 %v116
    %v1708 = vunpack.c.l.b16 %v117
    %v1709 = vunpack.c.h.b16 %v117
    %v1710 = vunpack.c.l.b16 %v118
    %v1711 = vunpack.c.h.b16 %v118
    %v1712 = vunpack.c.l.b16 %v119
    %v1713 = vunpack.c.h.b16 %v119
    %v1714 = vunpack.c.l.b16 %v120
    %v1715 = vunpack.c.h.b16 %v120
    %v1716 = vunpack.c.l.b16 %v121
    %v1717 = vunpack.c.h.b16 %v121
    %v1718 = vunpack.c.l.b16 %v122
    %v1719 = vunpack.c.h.b16 %v122
    %v1720 = vunpack.c.l.b16 %v123
    %v1721 = vunpack.c.h.b16 %v123
    %v1722 = vunpack.c.l.b16 %v124
    %v1723 = vunpack.c.h.b16 %v124
    %v1724 = vunpack.c.l.b16 %v125
    %v1725 = vunpack.c.h.b16 %v125
    %v1726 = vunpack.c.l.b16 %v126
    %v1727 = vunpack.c.h.b16 %v126
    %v1728 = vunpack.c.l.b16 %v127
    %v1729 = vunpack.c.h.b16 %v127
    %v1730 = vunpack.c.l.b16 %v128
    %v1731 = vunpack.c.h.b16 %v128
    %v1732 = vunpack.c.l.b16 %v129
    %v1733 = vunpack.c.h.b16 %v129
    %v1734 = vunpack.c.l.b16 %v130
    %v1735 = vunpack.c.h.b16 %v130
    %v1736 = vunpack.c.l.b16 %v131
    %v1737 = vunpack.c.h.b16 %v131
    %v1738 = vunpack.c.l.b16 %v132
    %v1739 = vunpack.c.h.b16 %v132
    %v1740 = vunpack.c.l.b16 %v133
    %v1741 = vunpack.c.h.b16 %v133
    %v1742 = vunpack.c.l.b16 %v134
    %v1743 = vunpack.c.h.b16 %v134
    %v1744 = vunpack.c.l.b16 %v135
    %v1745 = vunpack.c.h.b16 %v135
    %v1746 = vunpack.c.l.b16 %v136
    %v1747 = vunpack.c.h.b16 %v136
    %v1748 = vunpack.c.l.b16 %v137
    %v1749 = vunpack.c.h.b16 %v137
    %v1750 = vunpack.c.l.b16 %v138
    %v1751 = vunpack.c.h.b16 %v138
    %v1752 = vunpack.c.l.b16 %v139
    %v1753 = vunpack.c.h.b16 %v139
    %v1754 = vunpack.c.l.b16 %v140
    %v1755 = vunpack.c.h.b16 %v140
    %v1756 = vunpack.c.l.b16 %v141
    %v1757 = vunpack.c.h.b16 %v141
    %v1758 = vunpack.c.l.b16 %v142
    %v1759 = vunpack.c.h.b16 %v142
    %v1760 = vunpack.c.l.b16 %v143
    %v1761 = vunpack.c.h.b16 %v143
    %v1762 = vunpack.c.l.b16 %v144
    %v1763 = vunpack.c.h.b16 %v144
    %v1764 = vunpack.c.l.b16 %v145
    %v1765 = vunpack.c.h.b16 %v145
    %v1766 = vunpack.c.l.b16 %v146
    %v1767 = vunpack.c.h.b16 %v146
    %v1768 = vunpack.c.l.b16 %v147
    %v1769 = vunpack.c.h.b16 %v147
    %v1770 = vunpack.c.l.b16 %v148
    %v1771 = vunpack.c.h.b16 %v148
    %v1772 = vunpack.c.l.b16 %v149
    %v1773 = vunpack.c.h.b16 %v149
    %v1774 = vunpack.c.l.b16 %v150
    %v1775 = vunpack.c.h.b16 %v150
    %v1776 = vunpack.c.l.b16 %v151
    %v1777 = vunpack.c.h.b16 %v151
    %v1778 = vunpack.c.l.b16 %v152
    %v1779 = vunpack.c.h.b16 %v152
    %v1780 = vunpack.c.l.b16 %v153
    %v1781 = vunpack.c.h.b16 %v153
    %v1782 = vunpack.c.l.b16 %v154
    %v1783 = vunpack.c.h.b16 %v154
    %v1784 = vunpack.c.l.b16 %v155
    %v1785 = vunpack.c.h.b16 %v155
    %v1786 = vunpack.c.l.b16 %v156
    %v1787 = vunpack.c.h.b16 %v156
    %v1788 = vunpack.c.l.b16 %v157
    %v1789 = vunpack.c.h.b16 %v157
    %v1790 = vunpack.c.l.b16 %v158
    %v1791 = vunpack.c.h.b16 %v158
    %v1792 = vunpack.c.l.b16 %v159
    %v1793 = vunpack.c.h.b16 %v159
    %v1794 = vunpack.c.l.b16 %v160
    %v1795 = vunpack.c.h.b16 %v160
    %v1796 = vunpack.c.l.b16 %v161
    %v1797 = vunpack.c.h.b16 %v161
    %v1798 = vunpack.c.l.b16 %v162
    %v1799 = vunpack.c.h.b16 %v162
    %v1800 = vunpack.c.l.b16 %v163
    %v1801 = vunpack.c.h.b16 %v163
    %v1802 = vunpack.c.l.b16 %v164
    %v1803 = vunpack.c.h.b16 %v164
    %v1804 = vunpack.c.l.b16 %v165
    %v1805 = vunpack.c.h.b16 %v165
    %v1806 = vunpack.c.l.b16 %v166
    %v1807 = vunpack.c.h.b16 %v166
    %v1808 = vunpack.c.l.b16 %v167
    %v1809 = vunpack.c.h.b16 %v167
    %v1810 = vunpack.c.l.b16 %v168
    %v1811 = vunpack.c.h.b16 %v168
    %v1812 = vunpack.c.l.b16 %v169
    %v1813 = vunpack.c.h.b16 %v169
    %v1814 = vunpack.c.l.b16 %v170
    %v1815 = vunpack.c.h.b16 %v170
    %v1816 = vunpack.c.l.b16 %v171
    %v1817 = vunpack.c.h.b16 %v171
    %v1818 = vunpack.c.l.b16 %v172
    %v1819 = vunpack.c.h.b16 %v172
    %v1820 = vunpack.c.l.b16 %v173
    %v1821 = vunpack.c.h.b16 %v173
    %v1822 = vunpack.c.l.b16 %v174
    %v1823 = vunpack.c.h.b16 %v174
    %v1824 = vunpack.c.l.b16 %v175
    %v1825 = vunpack.c.h.b16 %v175
    %v1826 = vunpack.c.l.b16 %v176
    %v1827 = vunpack.c.h.b16 %v176
    %v1828 = vpack.c.b16 %v1704, %v1700
    %v1829 = vpack.c.b16 %v1705, %v1701
    %v1830 = vpack.c.b16 %v1706, %v1702
    %v1831 = vpack.c.b16 %v1707, %v1703
    %v1832 = vpack.c.b16 %v1712, %v1708
    %v1833 = vpack.c.b16 %v1713, %v1709
    %v1834 = vpack.c.b16 %v1714, %v1710
    %v1835 = vpack.c.b16 %v1715, %v1711
    %v1836 = vpack.c.b16 %v1720, %v1716
    %v1837 = vpack.c.b16 %v1721, %v1717
    %v1838 = vpack.c.b16 %v1722, %v1718
    %v1839 = vpack.c.b16 %v1723, %v1719
    %v1840 = vpack.c.b16 %v1728, %v1724
    %v1841 = vpack.c.b16 %v1729, %v1725
    %v1842 = vpack.c.b16 %v1730, %v1726
    %v1843 = vpack.c.b16 %v1731, %v1727
    %v1844 = vpack.c.b16 %v1736, %v1732
    %v1845 = vpack.c.b16 %v1737, %v1733
    %v1846 = vpack.c.b16 %v1738, %v1734
    %v1847 = vpack.c.b16 %v1739, %v1735
    %v1848 = vpack.c.b16 %v1744, %v1740
    %v1849 = vpack.c.b16 %v1745, %v1741
    %v1850 = vpack.c.b16 %v1746, %v1742
    %v1851 = vpack.c.b16 %v1747, %v1743
    %v1852 = vpack.c.b16 %v1752, %v1748
    %v1853 = vpack.c.b16 %v1753, %v1749
    %v1854 = vpack.c.b16 %v1754, %v1750
    %v1855 = vpack.c.b16 %v1755, %v1751
    %v1856 = vpack.c.b16 %v1760, %v1756
    %v1857 = vpack.c.b16 %v1761, %v1757
    %v1858 = vpack.c.b16 %v1762, %v1758
    %v1859 = vpack.c.b16 %v1763, %v1759
    %v1860 = vpack.c.b16 %v1768, %v1764
    %v1861 = vpack.c.b16 %v1769, %v1765
    %v1862 = vpack.c.b16 %v1770, %v1766
    %v1863 = vpack.c.b16 %v1771, %v1767
    %v1864 = vpack.c.b16 %v1776, %v1772
    %v1865 = vpack.c.b16 %v1777, %v1773
    %v1866 = vpack.c.b16 %v1778, %v1774
    %v1867 = vpack.c.b16 %v1779, %v1775
    %v1868 = vpack.c.b16 %v1784, %v1780
    %v1869 = vpack.c.b16 %v1785, %v1781
    %v1870 = vpack.c.b16 %v1786, %v1782
    %v1871 = vpack.c.b16 %v1787, %v1783
    %v1872 = vpack.c.b16 %v1792, %v1788
    %v1873 = vpack.c.b16 %v1793, %v1789
    %v1874 = vpack.c.b16 %v1794, %v1790
    %v1875 = vpack.c.b16 %v1795, %v1791
    %v1876 = vpack.c.b16 %v1800, %v1796
    %v1877 = vpack.c.b16 %v1801, %v1797
    %v1878 = vpack.c.b16 %v1802, %v1798
    %v1879 = vpack.c.b16 %v1803, %v1799
    %v1880 = vpack.c.b16 %v1808, %v1804
    %v1881 = vpack.c.b16 %v1809, %v1805
    %v1882 = vpack.c.b16 %v1810, %v1806
    %v1883 = vpack.c.b16 %v1811, %v1807
    %v1884 = vpack.c.b16 %v1816, %v1812
    %v1885 = vpack.c.b16 %v1817, %v1813
    %v1886 = vpack.c.b16 %v1818, %v1814
    %v1887 = vpack.c.b16 %v1819, %v1815
    %v1888 = vpack.c.b16 %v1824, %v1820
    %v1889 = vpack.c.b16 %v1825, %v1821
    %v1890 = vpack.c.b16 %v1826, %v1822
    %v1891 = vpack.c.b16 %v1827, %v1823
    %1956 = vmatprep.subr.bf16.mxu0 %v1829
    %1957 = vmatpush1.bf16.msra.mxu0 %v1828
    %1958 = vmatprep.subr.bf16.mxu0 %v1833
    %1959 = vmatpush1.bf16.msra.mxu0 %v1832
    %1960 = vmatprep.subr.bf16.mxu0 %v1837
    %1961 = vmatpush1.bf16.msra.mxu0 %v1836
    %1962 = vmatprep.subr.bf16.mxu0 %v1841
    %1963 = vmatpush1.bf16.msra.mxu0 %v1840
    %1964 = vmatprep.subr.bf16.mxu0 %v1845
    %1965 = vmatpush1.bf16.msra.mxu0 %v1844
    %1966 = vmatprep.subr.bf16.mxu0 %v1849
    %1967 = vmatpush1.bf16.msra.mxu0 %v1848
    %1968 = vmatprep.subr.bf16.mxu0 %v1853
    %1969 = vmatpush1.bf16.msra.mxu0 %v1852
    %1970 = vmatprep.subr.bf16.mxu0 %v1857
    %1971 = vmatpush1.bf16.msra.mxu0 %v1856
    %1972 = vmatprep.subr.bf16.mxu0 %v1861
    %1973 = vmatpush1.bf16.msra.mxu0 %v1860
    %1974 = vmatprep.subr.bf16.mxu0 %v1865
    %1975 = vmatpush1.bf16.msra.mxu0 %v1864
    %1976 = vmatprep.subr.bf16.mxu0 %v1869
    %1977 = vmatpush1.bf16.msra.mxu0 %v1868
    %1978 = vmatprep.subr.bf16.mxu0 %v1873
    %1979 = vmatpush1.bf16.msra.mxu0 %v1872
    %1980 = vmatprep.subr.bf16.mxu0 %v1877
    %1981 = vmatpush1.bf16.msra.mxu0 %v1876
    %1982 = vmatprep.subr.bf16.mxu0 %v1881
    %1983 = vmatpush1.bf16.msra.mxu0 %v1880
    %1984 = vmatprep.subr.bf16.mxu0 %v1885
    %1985 = vmatpush1.bf16.msra.mxu0 %v1884
    %1986 = vmatprep.subr.bf16.mxu0 %v1889
    %1987 = vmatpush1.bf16.msra.mxu0 %v1888
    %1988 = vmatprep.mubr.bf16.mxu0 %v1633
    %1989 = vmatmul.mubr.bf16.gmra.mrb[0].mxu0 %v1632
    %v1990 = vpop.f32.mrb[0].mxu0
    %v1991 = vadd.f32 0.0, %v1990
    %v1992 = vpop.f32.mrb[0].mxu0
    %v1993 = vadd.f32 0.0, %v1992
    %v1994 = vpop.f32.mrb[0].mxu0
    %v1995 = vpop.f32.mrb[0].mxu0
    %1996 = vdwg.mxu0
    %1997 = vmatprep.subr.bf16.mxu0 %v1831
    %1998 = vmatpush1.bf16.msra.mxu0 %v1830
    %1999 = vmatprep.subr.bf16.mxu0 %v1835
    %2000 = vmatpush1.bf16.msra.mxu0 %v1834
    %2001 = vmatprep.subr.bf16.mxu0 %v1839
    %2002 = vmatpush1.bf16.msra.mxu0 %v1838
    %2003 = vmatprep.subr.bf16.mxu0 %v1843
    %2004 = vmatpush1.bf16.msra.mxu0 %v1842
    %2005 = vmatprep.subr.bf16.mxu0 %v1847
    %2006 = vmatpush1.bf16.msra.mxu0 %v1846
    %2007 = vmatprep.subr.bf16.mxu0 %v1851
    %2008 = vmatpush1.bf16.msra.mxu0 %v1850
    %2009 = vmatprep.subr.bf16.mxu0 %v1855
    %2010 = vmatpush1.bf16.msra.mxu0 %v1854
    %2011 = vmatprep.subr.bf16.mxu0 %v1859
    %2012 = vmatpush1.bf16.msra.mxu0 %v1858
    %2013 = vmatprep.subr.bf16.mxu0 %v1863
    %2014 = vmatpush1.bf16.msra.mxu0 %v1862
    %2015 = vmatprep.subr.bf16.mxu0 %v1867
    %2016 = vmatpush1.bf16.msra.mxu0 %v1866
    %2017 = vmatprep.subr.bf16.mxu0 %v1871
    %2018 = vmatpush1.bf16.msra.mxu0 %v1870
    %2019 = vmatprep.subr.bf16.mxu0 %v1875
    %2020 = vmatpush1.bf16.msra.mxu0 %v1874
    %2021 = vmatprep.subr.bf16.mxu0 %v1879
    %2022 = vmatpush1.bf16.msra.mxu0 %v1878
    %2023 = vmatprep.subr.bf16.mxu0 %v1883
    %2024 = vmatpush1.bf16.msra.mxu0 %v1882
    %2025 = vmatprep.subr.bf16.mxu0 %v1887
    %2026 = vmatpush1.bf16.msra.mxu0 %v1886
    %2027 = vmatprep.subr.bf16.mxu0 %v1891
    %2028 = vmatpush1.bf16.msra.mxu0 %v1890
    %2029 = vmatprep.mubr.bf16.mxu0 %v1633
    %2030 = vmatmul.mubr.bf16.gmra.mrb[0].mxu0 %v1632
    %v2031 = vpop.f32.mrb[0].mxu0
    %v2032 = vadd.f32 0.0, %v2031
    %v2033 = vpop.f32.mrb[0].mxu0
    %v2034 = vadd.f32 0.0, %v2033
    %v2035 = vpop.f32.mrb[0].mxu0
    %v2036 = vpop.f32.mrb[0].mxu0
    %2037 = vdwg.mxu0
    %v2042 = vcombine.low %v1991, %v1993
    %v2043 = vcombine.high %v1991, %v1993
    %v2044 = vcombine.low %v2032, %v2034
    %v2045 = vcombine.high %v2032, %v2034
    %v2047 = vunpack.c.l.s4 1966171168
    %v2048 = vunpack.c.0.s8 %v2047
    %v2049 = vlaneseq
    %v2050 = vshrl.u32 %v2049, 7
    %v2051 = vsub.s32 %v2048, %v2050
    %v2052 = vrot.slane %v2042, %v2051
    %v2054 = vunpack.c.l.s4 1966171168
    %v2055 = vunpack.c.0.s8 %v2054
    %v2056 = vlaneseq
    %v2057 = vshrl.u32 %v2056, 7
    %v2058 = vsub.s32 %v2055, %v2057
    %v2059 = vrot.slane %v2043, %v2058
    %v2061 = vunpack.c.l.s4 1966171168
    %v2062 = vunpack.c.0.s8 %v2061
    %v2063 = vlaneseq
    %v2064 = vshrl.u32 %v2063, 7
    %v2065 = vsub.s32 %v2062, %v2064
    %v2066 = vrot.slane %v2044, %v2065
    %v2068 = vunpack.c.l.s4 1966171168
    %v2069 = vunpack.c.0.s8 %v2068
    %v2070 = vlaneseq
    %v2071 = vshrl.u32 %v2070, 7
    %v2072 = vsub.s32 %v2069, %v2071
    %v2073 = vrot.slane %v2045, %v2072
    %v2074 = vcombine.low %v2052, %v2066
    %v2075 = vcombine.high %v2052, %v2066
    %v2076 = vcombine.low %v2059, %v2073
    %v2077 = vcombine.high %v2059, %v2073
    %v2079 = vunpack.c.l.s4 1966171168
    %v2080 = vunpack.c.0.s8 %v2079
    %v2081 = vlaneseq
    %v2082 = vshrl.u32 %v2081, 7
    %v2083 = vsub.s32 %v2080, %v2082
    %v2084 = vrot.slane %v2074, %v2083
    %v2086 = vunpack.c.l.s4 1966171168
    %v2087 = vunpack.c.0.s8 %v2086
    %v2088 = vlaneseq
    %v2089 = vshrl.u32 %v2088, 7
    %v2090 = vsub.s32 %v2087, %v2089
    %v2091 = vrot.slane %v2076, %v2090
    %v2093 = vunpack.c.l.s4 1966171168
    %v2094 = vunpack.c.0.s8 %v2093
    %v2095 = vlaneseq
    %v2096 = vshrl.u32 %v2095, 7
    %v2097 = vsub.s32 %v2094, %v2096
    %v2098 = vrot.slane %v2075, %v2097
    %v2100 = vunpack.c.l.s4 1966171168
    %v2101 = vunpack.c.0.s8 %v2100
    %v2102 = vlaneseq
    %v2103 = vshrl.u32 %v2102, 7
    %v2104 = vsub.s32 %v2101, %v2103
    %v2105 = vrot.slane %v2077, %v2104
    %v2106 = vcombine.high %v2084, %v2084
    %v2107 = vcombine.high %v2091, %v2091
    %v2108 = vcombine.high %v2098, %v2098
    %v2109 = vcombine.high %v2105, %v2105
    %v2110 = vlaneseq
    %v2111 = vshrl.u32 %v2110, 7
    %v2112 = vsub.s32 0, %v2111
    %v2113 = vrot.slane %v2084, %v2112
    %v2114 = vlaneseq
    %v2115 = vshrl.u32 %v2114, 7
    %v2116 = vsub.s32 1, %v2115
    %v2117 = vrot.slane %v2084, %v2116
    %v2118 = vlaneseq
    %v2119 = vshrl.u32 %v2118, 7
    %v2120 = vsub.s32 2, %v2119
    %v2121 = vrot.slane %v2084, %v2120
    %v2122 = vlaneseq
    %v2123 = vshrl.u32 %v2122, 7
    %v2124 = vsub.s32 3, %v2123
    %v2125 = vrot.slane %v2084, %v2124
    %v2126 = vlaneseq
    %v2127 = vshrl.u32 %v2126, 7
    %v2128 = vsub.s32 0, %v2127
    %v2129 = vrot.slane %v2098, %v2128
    %v2130 = vlaneseq
    %v2131 = vshrl.u32 %v2130, 7
    %v2132 = vsub.s32 1, %v2131
    %v2133 = vrot.slane %v2098, %v2132
    %v2134 = vlaneseq
    %v2135 = vshrl.u32 %v2134, 7
    %v2136 = vsub.s32 2, %v2135
    %v2137 = vrot.slane %v2098, %v2136
    %v2138 = vlaneseq
    %v2139 = vshrl.u32 %v2138, 7
    %v2140 = vsub.s32 3, %v2139
    %v2141 = vrot.slane %v2098, %v2140
    %v2142 = vlaneseq
    %v2143 = vshrl.u32 %v2142, 7
    %v2144 = vsub.s32 0, %v2143
    %v2145 = vrot.slane %v2106, %v2144
    %v2146 = vlaneseq
    %v2147 = vshrl.u32 %v2146, 7
    %v2148 = vsub.s32 1, %v2147
    %v2149 = vrot.slane %v2106, %v2148
    %v2150 = vlaneseq
    %v2151 = vshrl.u32 %v2150, 7
    %v2152 = vsub.s32 2, %v2151
    %v2153 = vrot.slane %v2106, %v2152
    %v2154 = vlaneseq
    %v2155 = vshrl.u32 %v2154, 7
    %v2156 = vsub.s32 3, %v2155
    %v2157 = vrot.slane %v2106, %v2156
    %v2158 = vlaneseq
    %v2159 = vshrl.u32 %v2158, 7
    %v2160 = vsub.s32 0, %v2159
    %v2161 = vrot.slane %v2108, %v2160
    %v2162 = vlaneseq
    %v2163 = vshrl.u32 %v2162, 7
    %v2164 = vsub.s32 1, %v2163
    %v2165 = vrot.slane %v2108, %v2164
    %v2166 = vlaneseq
    %v2167 = vshrl.u32 %v2166, 7
    %v2168 = vsub.s32 2, %v2167
    %v2169 = vrot.slane %v2108, %v2168
    %v2170 = vlaneseq
    %v2171 = vshrl.u32 %v2170, 7
    %v2172 = vsub.s32 3, %v2171
    %v2173 = vrot.slane %v2108, %v2172
    %v2174 = vlaneseq
    %v2175 = vshrl.u32 %v2174, 7
    %v2176 = vsub.s32 0, %v2175
    %v2177 = vrot.slane %v2091, %v2176
    %v2178 = vlaneseq
    %v2179 = vshrl.u32 %v2178, 7
    %v2180 = vsub.s32 1, %v2179
    %v2181 = vrot.slane %v2091, %v2180
    %v2182 = vlaneseq
    %v2183 = vshrl.u32 %v2182, 7
    %v2184 = vsub.s32 2, %v2183
    %v2185 = vrot.slane %v2091, %v2184
    %v2186 = vlaneseq
    %v2187 = vshrl.u32 %v2186, 7
    %v2188 = vsub.s32 3, %v2187
    %v2189 = vrot.slane %v2091, %v2188
    %v2190 = vlaneseq
    %v2191 = vshrl.u32 %v2190, 7
    %v2192 = vsub.s32 0, %v2191
    %v2193 = vrot.slane %v2105, %v2192
    %v2194 = vlaneseq
    %v2195 = vshrl.u32 %v2194, 7
    %v2196 = vsub.s32 1, %v2195
    %v2197 = vrot.slane %v2105, %v2196
    %v2198 = vlaneseq
    %v2199 = vshrl.u32 %v2198, 7
    %v2200 = vsub.s32 2, %v2199
    %v2201 = vrot.slane %v2105, %v2200
    %v2202 = vlaneseq
    %v2203 = vshrl.u32 %v2202, 7
    %v2204 = vsub.s32 3, %v2203
    %v2205 = vrot.slane %v2105, %v2204
    %v2206 = vlaneseq
    %v2207 = vshrl.u32 %v2206, 7
    %v2208 = vsub.s32 0, %v2207
    %v2209 = vrot.slane %v2107, %v2208
    %v2210 = vlaneseq
    %v2211 = vshrl.u32 %v2210, 7
    %v2212 = vsub.s32 1, %v2211
    %v2213 = vrot.slane %v2107, %v2212
    %v2214 = vlaneseq
    %v2215 = vshrl.u32 %v2214, 7
    %v2216 = vsub.s32 2, %v2215
    %v2217 = vrot.slane %v2107, %v2216
    %v2218 = vlaneseq
    %v2219 = vshrl.u32 %v2218, 7
    %v2220 = vsub.s32 3, %v2219
    %v2221 = vrot.slane %v2107, %v2220
    %v2222 = vlaneseq
    %v2223 = vshrl.u32 %v2222, 7
    %v2224 = vsub.s32 0, %v2223
    %v2225 = vrot.slane %v2109, %v2224
    %v2226 = vlaneseq
    %v2227 = vshrl.u32 %v2226, 7
    %v2228 = vsub.s32 1, %v2227
    %v2229 = vrot.slane %v2109, %v2228
    %v2230 = vlaneseq
    %v2231 = vshrl.u32 %v2230, 7
    %v2232 = vsub.s32 2, %v2231
    %v2233 = vrot.slane %v2109, %v2232
    %v2234 = vlaneseq
    %v2235 = vshrl.u32 %v2234, 7
    %v2236 = vsub.s32 3, %v2235
    %v2237 = vrot.slane %v2109, %v2236
    %v2270 = vadd.f32 %v1027, %v2113
    %v2271 = vadd.f32 %v1029, %v2117
    %v2272 = vadd.f32 %v1220, %v2121
    %v2273 = vadd.f32 %v1222, %v2125
    %v2274 = vadd.f32 %v1031, %v2113
    %v2275 = vadd.f32 %v1033, %v2117
    %v2276 = vadd.f32 %v1224, %v2121
    %v2277 = vadd.f32 %v1226, %v2125
    %v2278 = vadd.f32 %v1037, %v2113
    %v2279 = vadd.f32 %v1039, %v2117
    %v2280 = vadd.f32 %v1230, %v2121
    %v2281 = vadd.f32 %v1232, %v2125
    %v2282 = vadd.f32 %v1041, %v2113
    %v2283 = vadd.f32 %v1043, %v2117
    %v2284 = vadd.f32 %v1234, %v2121
    %v2285 = vadd.f32 %v1236, %v2125
    %v2286 = vadd.f32 %v1047, %v2129
    %v2287 = vadd.f32 %v1049, %v2133
    %v2288 = vadd.f32 %v1240, %v2137
    %v2289 = vadd.f32 %v1242, %v2141
    %v2290 = vadd.f32 %v1051, %v2129
    %v2291 = vadd.f32 %v1053, %v2133
    %v2292 = vadd.f32 %v1244, %v2137
    %v2293 = vadd.f32 %v1246, %v2141
    %v2294 = vadd.f32 %v1057, %v2129
    %v2295 = vadd.f32 %v1059, %v2133
    %v2296 = vadd.f32 %v1250, %v2137
    %v2297 = vadd.f32 %v1252, %v2141
    %v2298 = vadd.f32 %v1061, %v2129
    %v2299 = vadd.f32 %v1063, %v2133
    %v2300 = vadd.f32 %v1254, %v2137
    %v2301 = vadd.f32 %v1256, %v2141
    %v2302 = vadd.f32 %v1067, %v2145
    %v2303 = vadd.f32 %v1069, %v2149
    %v2304 = vadd.f32 %v1260, %v2153
    %v2305 = vadd.f32 %v1262, %v2157
    %v2306 = vadd.f32 %v1071, %v2145
    %v2307 = vadd.f32 %v1073, %v2149
    %v2308 = vadd.f32 %v1264, %v2153
    %v2309 = vadd.f32 %v1266, %v2157
    %v2310 = vadd.f32 %v1077, %v2145
    %v2311 = vadd.f32 %v1079, %v2149
    %v2312 = vadd.f32 %v1270, %v2153
    %v2313 = vadd.f32 %v1272, %v2157
    %v2314 = vadd.f32 %v1081, %v2145
    %v2315 = vadd.f32 %v1083, %v2149
    %v2316 = vadd.f32 %v1274, %v2153
    %v2317 = vadd.f32 %v1276, %v2157
    %v2318 = vadd.f32 %v1087, %v2161
    %v2319 = vadd.f32 %v1089, %v2165
    %v2320 = vadd.f32 %v1280, %v2169
    %v2321 = vadd.f32 %v1282, %v2173
    %v2322 = vadd.f32 %v1091, %v2161
    %v2323 = vadd.f32 %v1093, %v2165
    %v2324 = vadd.f32 %v1284, %v2169
    %v2325 = vadd.f32 %v1286, %v2173
    %v2326 = vadd.f32 %v1097, %v2161
    %v2327 = vadd.f32 %v1099, %v2165
    %v2328 = vadd.f32 %v1290, %v2169
    %v2329 = vadd.f32 %v1292, %v2173
    %v2330 = vadd.f32 %v1101, %v2161
    %v2331 = vadd.f32 %v1103, %v2165
    %v2332 = vadd.f32 %v1294, %v2169
    %v2333 = vadd.f32 %v1296, %v2173
    %v2334 = vadd.f32 %v1107, %v2177
    %v2335 = vadd.f32 %v1109, %v2181
    %v2336 = vadd.f32 %v1300, %v2185
    %v2337 = vadd.f32 %v1302, %v2189
    %v2338 = vadd.f32 %v1111, %v2177
    %v2339 = vadd.f32 %v1113, %v2181
    %v2340 = vadd.f32 %v1304, %v2185
    %v2341 = vadd.f32 %v1306, %v2189
    %v2342 = vadd.f32 %v1117, %v2177
    %v2343 = vadd.f32 %v1119, %v2181
    %v2344 = vadd.f32 %v1310, %v2185
    %v2345 = vadd.f32 %v1312, %v2189
    %v2346 = vadd.f32 %v1121, %v2177
    %v2347 = vadd.f32 %v1123, %v2181
    %v2348 = vadd.f32 %v1314, %v2185
    %v2349 = vadd.f32 %v1316, %v2189
    %v2350 = vadd.f32 %v1127, %v2193
    %v2351 = vadd.f32 %v1129, %v2197
    %v2352 = vadd.f32 %v1320, %v2201
    %v2353 = vadd.f32 %v1322, %v2205
    %v2354 = vadd.f32 %v1131, %v2193
    %v2355 = vadd.f32 %v1133, %v2197
    %v2356 = vadd.f32 %v1324, %v2201
    %v2357 = vadd.f32 %v1326, %v2205
    %v2358 = vadd.f32 %v1137, %v2193
    %v2359 = vadd.f32 %v1139, %v2197
    %v2360 = vadd.f32 %v1330, %v2201
    %v2361 = vadd.f32 %v1332, %v2205
    %v2362 = vadd.f32 %v1141, %v2193
    %v2363 = vadd.f32 %v1143, %v2197
    %v2364 = vadd.f32 %v1334, %v2201
    %v2365 = vadd.f32 %v1336, %v2205
    %v2366 = vadd.f32 %v1147, %v2209
    %v2367 = vadd.f32 %v1149, %v2213
    %v2368 = vadd.f32 %v1340, %v2217
    %v2369 = vadd.f32 %v1342, %v2221
    %v2370 = vadd.f32 %v1151, %v2209
    %v2371 = vadd.f32 %v1153, %v2213
    %v2372 = vadd.f32 %v1344, %v2217
    %v2373 = vadd.f32 %v1346, %v2221
    %v2374 = vadd.f32 %v1157, %v2209
    %v2375 = vadd.f32 %v1159, %v2213
    %v2376 = vadd.f32 %v1350, %v2217
    %v2377 = vadd.f32 %v1352, %v2221
    %v2378 = vadd.f32 %v1161, %v2209
    %v2379 = vadd.f32 %v1163, %v2213
    %v2380 = vadd.f32 %v1354, %v2217
    %v2381 = vadd.f32 %v1356, %v2221
    %v2382 = vadd.f32 %v1167, %v2225
    %v2383 = vadd.f32 %v1169, %v2229
    %v2384 = vadd.f32 %v1360, %v2233
    %v2385 = vadd.f32 %v1362, %v2237
    %v2386 = vadd.f32 %v1171, %v2225
    %v2387 = vadd.f32 %v1173, %v2229
    %v2388 = vadd.f32 %v1364, %v2233
    %v2389 = vadd.f32 %v1366, %v2237
    %v2390 = vadd.f32 %v1177, %v2225
    %v2391 = vadd.f32 %v1179, %v2229
    %v2392 = vadd.f32 %v1370, %v2233
    %v2393 = vadd.f32 %v1372, %v2237
    %v2394 = vadd.f32 %v1181, %v2225
    %v2395 = vadd.f32 %v1183, %v2229
    %v2396 = vadd.f32 %v1374, %v2233
    %v2397 = vadd.f32 %v1376, %v2237
    %v2399 = vlaneseq
    %v2400 = vshrl.u32 %v2399, 7
    %v2401 = vsub.s32 0, %v2400
    %v2402 = vrot.slane %v177, %v2401
    %v2403 = vlaneseq
    %v2404 = vshrl.u32 %v2403, 7
    %v2405 = vsub.s32 1, %v2404
    %v2406 = vrot.slane %v177, %v2405
    %v2407 = vlaneseq
    %v2408 = vshrl.u32 %v2407, 7
    %v2409 = vsub.s32 2, %v2408
    %v2410 = vrot.slane %v177, %v2409
    %v2411 = vlaneseq
    %v2412 = vshrl.u32 %v2411, 7
    %v2413 = vsub.s32 3, %v2412
    %v2414 = vrot.slane %v177, %v2413
    %v2419 = vadd.f32 %v2270, %v2402
    %v2420 = vadd.f32 %v2271, %v2406
    %v2421 = vadd.f32 %v2272, %v2410
    %v2422 = vadd.f32 %v2273, %v2414
    %v2423 = vadd.f32 %v2274, %v2402
    %v2424 = vadd.f32 %v2275, %v2406
    %v2425 = vadd.f32 %v2276, %v2410
    %v2426 = vadd.f32 %v2277, %v2414
    %v2427 = vadd.f32 %v2278, %v2402
    %v2428 = vadd.f32 %v2279, %v2406
    %v2429 = vadd.f32 %v2280, %v2410
    %v2430 = vadd.f32 %v2281, %v2414
    %v2431 = vadd.f32 %v2282, %v2402
    %v2432 = vadd.f32 %v2283, %v2406
    %v2433 = vadd.f32 %v2284, %v2410
    %v2434 = vadd.f32 %v2285, %v2414
    %v2435 = vadd.f32 %v2286, %v2402
    %v2436 = vadd.f32 %v2287, %v2406
    %v2437 = vadd.f32 %v2288, %v2410
    %v2438 = vadd.f32 %v2289, %v2414
    %v2439 = vadd.f32 %v2290, %v2402
    %v2440 = vadd.f32 %v2291, %v2406
    %v2441 = vadd.f32 %v2292, %v2410
    %v2442 = vadd.f32 %v2293, %v2414
    %v2443 = vadd.f32 %v2294, %v2402
    %v2444 = vadd.f32 %v2295, %v2406
    %v2445 = vadd.f32 %v2296, %v2410
    %v2446 = vadd.f32 %v2297, %v2414
    %v2447 = vadd.f32 %v2298, %v2402
    %v2448 = vadd.f32 %v2299, %v2406
    %v2449 = vadd.f32 %v2300, %v2410
    %v2450 = vadd.f32 %v2301, %v2414
    %v2451 = vadd.f32 %v2302, %v2402
    %v2452 = vadd.f32 %v2303, %v2406
    %v2453 = vadd.f32 %v2304, %v2410
    %v2454 = vadd.f32 %v2305, %v2414
    %v2455 = vadd.f32 %v2306, %v2402
    %v2456 = vadd.f32 %v2307, %v2406
    %v2457 = vadd.f32 %v2308, %v2410
    %v2458 = vadd.f32 %v2309, %v2414
    %v2459 = vadd.f32 %v2310, %v2402
    %v2460 = vadd.f32 %v2311, %v2406
    %v2461 = vadd.f32 %v2312, %v2410
    %v2462 = vadd.f32 %v2313, %v2414
    %v2463 = vadd.f32 %v2314, %v2402
    %v2464 = vadd.f32 %v2315, %v2406
    %v2465 = vadd.f32 %v2316, %v2410
    %v2466 = vadd.f32 %v2317, %v2414
    %v2467 = vadd.f32 %v2318, %v2402
    %v2468 = vadd.f32 %v2319, %v2406
    %v2469 = vadd.f32 %v2320, %v2410
    %v2470 = vadd.f32 %v2321, %v2414
    %v2471 = vadd.f32 %v2322, %v2402
    %v2472 = vadd.f32 %v2323, %v2406
    %v2473 = vadd.f32 %v2324, %v2410
    %v2474 = vadd.f32 %v2325, %v2414
    %v2475 = vadd.f32 %v2326, %v2402
    %v2476 = vadd.f32 %v2327, %v2406
    %v2477 = vadd.f32 %v2328, %v2410
    %v2478 = vadd.f32 %v2329, %v2414
    %v2479 = vadd.f32 %v2330, %v2402
    %v2480 = vadd.f32 %v2331, %v2406
    %v2481 = vadd.f32 %v2332, %v2410
    %v2482 = vadd.f32 %v2333, %v2414
    %v2483 = vadd.f32 %v2334, %v2402
    %v2484 = vadd.f32 %v2335, %v2406
    %v2485 = vadd.f32 %v2336, %v2410
    %v2486 = vadd.f32 %v2337, %v2414
    %v2487 = vadd.f32 %v2338, %v2402
    %v2488 = vadd.f32 %v2339, %v2406
    %v2489 = vadd.f32 %v2340, %v2410
    %v2490 = vadd.f32 %v2341, %v2414
    %v2491 = vadd.f32 %v2342, %v2402
    %v2492 = vadd.f32 %v2343, %v2406
    %v2493 = vadd.f32 %v2344, %v2410
    %v2494 = vadd.f32 %v2345, %v2414
    %v2495 = vadd.f32 %v2346, %v2402
    %v2496 = vadd.f32 %v2347, %v2406
    %v2497 = vadd.f32 %v2348, %v2410
    %v2498 = vadd.f32 %v2349, %v2414
    %v2499 = vadd.f32 %v2350, %v2402
    %v2500 = vadd.f32 %v2351, %v2406
    %v2501 = vadd.f32 %v2352, %v2410
    %v2502 = vadd.f32 %v2353, %v2414
    %v2503 = vadd.f32 %v2354, %v2402
    %v2504 = vadd.f32 %v2355, %v2406
    %v2505 = vadd.f32 %v2356, %v2410
    %v2506 = vadd.f32 %v2357, %v2414
    %v2507 = vadd.f32 %v2358, %v2402
    %v2508 = vadd.f32 %v2359, %v2406
    %v2509 = vadd.f32 %v2360, %v2410
    %v2510 = vadd.f32 %v2361, %v2414
    %v2511 = vadd.f32 %v2362, %v2402
    %v2512 = vadd.f32 %v2363, %v2406
    %v2513 = vadd.f32 %v2364, %v2410
    %v2514 = vadd.f32 %v2365, %v2414
    %v2515 = vadd.f32 %v2366, %v2402
    %v2516 = vadd.f32 %v2367, %v2406
    %v2517 = vadd.f32 %v2368, %v2410
    %v2518 = vadd.f32 %v2369, %v2414
    %v2519 = vadd.f32 %v2370, %v2402
    %v2520 = vadd.f32 %v2371, %v2406
    %v2521 = vadd.f32 %v2372, %v2410
    %v2522 = vadd.f32 %v2373, %v2414
    %v2523 = vadd.f32 %v2374, %v2402
    %v2524 = vadd.f32 %v2375, %v2406
    %v2525 = vadd.f32 %v2376, %v2410
    %v2526 = vadd.f32 %v2377, %v2414
    %v2527 = vadd.f32 %v2378, %v2402
    %v2528 = vadd.f32 %v2379, %v2406
    %v2529 = vadd.f32 %v2380, %v2410
    %v2530 = vadd.f32 %v2381, %v2414
    %v2531 = vadd.f32 %v2382, %v2402
    %v2532 = vadd.f32 %v2383, %v2406
    %v2533 = vadd.f32 %v2384, %v2410
    %v2534 = vadd.f32 %v2385, %v2414
    %v2535 = vadd.f32 %v2386, %v2402
    %v2536 = vadd.f32 %v2387, %v2406
    %v2537 = vadd.f32 %v2388, %v2410
    %v2538 = vadd.f32 %v2389, %v2414
    %v2539 = vadd.f32 %v2390, %v2402
    %v2540 = vadd.f32 %v2391, %v2406
    %v2541 = vadd.f32 %v2392, %v2410
    %v2542 = vadd.f32 %v2393, %v2414
    %v2543 = vadd.f32 %v2394, %v2402
    %v2544 = vadd.f32 %v2395, %v2406
    %v2545 = vadd.f32 %v2396, %v2410
    %v2546 = vadd.f32 %v2397, %v2414
    %v2547 = vmax.f32 %v2419, 0.0
    %v2548 = vmax.f32 %v2420, 0.0
    %v2549 = vmax.f32 %v2421, 0.0
    %v2550 = vmax.f32 %v2422, 0.0
    %v2551 = vmax.f32 %v2423, 0.0
    %v2552 = vmax.f32 %v2424, 0.0
    %v2553 = vmax.f32 %v2425, 0.0
    %v2554 = vmax.f32 %v2426, 0.0
    %v2555 = vmax.f32 %v2427, 0.0
    %v2556 = vmax.f32 %v2428, 0.0
    %v2557 = vmax.f32 %v2429, 0.0
    %v2558 = vmax.f32 %v2430, 0.0
    %v2559 = vmax.f32 %v2431, 0.0
    %v2560 = vmax.f32 %v2432, 0.0
    %v2561 = vmax.f32 %v2433, 0.0
    %v2562 = vmax.f32 %v2434, 0.0
    %v2563 = vmax.f32 %v2435, 0.0
    %v2564 = vmax.f32 %v2436, 0.0
    %v2565 = vmax.f32 %v2437, 0.0
    %v2566 = vmax.f32 %v2438, 0.0
    %v2567 = vmax.f32 %v2439, 0.0
    %v2568 = vmax.f32 %v2440, 0.0
    %v2569 = vmax.f32 %v2441, 0.0
    %v2570 = vmax.f32 %v2442, 0.0
    %v2571 = vmax.f32 %v2443, 0.0
    %v2572 = vmax.f32 %v2444, 0.0
    %v2573 = vmax.f32 %v2445, 0.0
    %v2574 = vmax.f32 %v2446, 0.0
    %v2575 = vmax.f32 %v2447, 0.0
    %v2576 = vmax.f32 %v2448, 0.0
    %v2577 = vmax.f32 %v2449, 0.0
    %v2578 = vmax.f32 %v2450, 0.0
    %v2579 = vmax.f32 %v2451, 0.0
    %v2580 = vmax.f32 %v2452, 0.0
    %v2581 = vmax.f32 %v2453, 0.0
    %v2582 = vmax.f32 %v2454, 0.0
    %v2583 = vmax.f32 %v2455, 0.0
    %v2584 = vmax.f32 %v2456, 0.0
    %v2585 = vmax.f32 %v2457, 0.0
    %v2586 = vmax.f32 %v2458, 0.0
    %v2587 = vmax.f32 %v2459, 0.0
    %v2588 = vmax.f32 %v2460, 0.0
    %v2589 = vmax.f32 %v2461, 0.0
    %v2590 = vmax.f32 %v2462, 0.0
    %v2591 = vmax.f32 %v2463, 0.0
    %v2592 = vmax.f32 %v2464, 0.0
    %v2593 = vmax.f32 %v2465, 0.0
    %v2594 = vmax.f32 %v2466, 0.0
    %v2595 = vmax.f32 %v2467, 0.0
    %v2596 = vmax.f32 %v2468, 0.0
    %v2597 = vmax.f32 %v2469, 0.0
    %v2598 = vmax.f32 %v2470, 0.0
    %v2599 = vmax.f32 %v2471, 0.0
    %v2600 = vmax.f32 %v2472, 0.0
    %v2601 = vmax.f32 %v2473, 0.0
    %v2602 = vmax.f32 %v2474, 0.0
    %v2603 = vmax.f32 %v2475, 0.0
    %v2604 = vmax.f32 %v2476, 0.0
    %v2605 = vmax.f32 %v2477, 0.0
    %v2606 = vmax.f32 %v2478, 0.0
    %v2607 = vmax.f32 %v2479, 0.0
    %v2608 = vmax.f32 %v2480, 0.0
    %v2609 = vmax.f32 %v2481, 0.0
    %v2610 = vmax.f32 %v2482, 0.0
    %v2611 = vmax.f32 %v2483, 0.0
    %v2612 = vmax.f32 %v2484, 0.0
    %v2613 = vmax.f32 %v2485, 0.0
    %v2614 = vmax.f32 %v2486, 0.0
    %v2615 = vmax.f32 %v2487, 0.0
    %v2616 = vmax.f32 %v2488, 0.0
    %v2617 = vmax.f32 %v2489, 0.0
    %v2618 = vmax.f32 %v2490, 0.0
    %v2619 = vmax.f32 %v2491, 0.0
    %v2620 = vmax.f32 %v2492, 0.0
    %v2621 = vmax.f32 %v2493, 0.0
    %v2622 = vmax.f32 %v2494, 0.0
    %v2623 = vmax.f32 %v2495, 0.0
    %v2624 = vmax.f32 %v2496, 0.0
    %v2625 = vmax.f32 %v2497, 0.0
    %v2626 = vmax.f32 %v2498, 0.0
    %v2627 = vmax.f32 %v2499, 0.0
    %v2628 = vmax.f32 %v2500, 0.0
    %v2629 = vmax.f32 %v2501, 0.0
    %v2630 = vmax.f32 %v2502, 0.0
    %v2631 = vmax.f32 %v2503, 0.0
    %v2632 = vmax.f32 %v2504, 0.0
    %v2633 = vmax.f32 %v2505, 0.0
    %v2634 = vmax.f32 %v2506, 0.0
    %v2635 = vmax.f32 %v2507, 0.0
    %v2636 = vmax.f32 %v2508, 0.0
    %v2637 = vmax.f32 %v2509, 0.0
    %v2638 = vmax.f32 %v2510, 0.0
    %v2639 = vmax.f32 %v2511, 0.0
    %v2640 = vmax.f32 %v2512, 0.0
    %v2641 = vmax.f32 %v2513, 0.0
    %v2642 = vmax.f32 %v2514, 0.0
    %v2643 = vmax.f32 %v2515, 0.0
    %v2644 = vmax.f32 %v2516, 0.0
    %v2645 = vmax.f32 %v2517, 0.0
    %v2646 = vmax.f32 %v2518, 0.0
    %v2647 = vmax.f32 %v2519, 0.0
    %v2648 = vmax.f32 %v2520, 0.0
    %v2649 = vmax.f32 %v2521, 0.0
    %v2650 = vmax.f32 %v2522, 0.0
    %v2651 = vmax.f32 %v2523, 0.0
    %v2652 = vmax.f32 %v2524, 0.0
    %v2653 = vmax.f32 %v2525, 0.0
    %v2654 = vmax.f32 %v2526, 0.0
    %v2655 = vmax.f32 %v2527, 0.0
    %v2656 = vmax.f32 %v2528, 0.0
    %v2657 = vmax.f32 %v2529, 0.0
    %v2658 = vmax.f32 %v2530, 0.0
    %v2659 = vmax.f32 %v2531, 0.0
    %v2660 = vmax.f32 %v2532, 0.0
    %v2661 = vmax.f32 %v2533, 0.0
    %v2662 = vmax.f32 %v2534, 0.0
    %v2663 = vmax.f32 %v2535, 0.0
    %v2664 = vmax.f32 %v2536, 0.0
    %v2665 = vmax.f32 %v2537, 0.0
    %v2666 = vmax.f32 %v2538, 0.0
    %v2667 = vmax.f32 %v2539, 0.0
    %v2668 = vmax.f32 %v2540, 0.0
    %v2669 = vmax.f32 %v2541, 0.0
    %v2670 = vmax.f32 %v2542, 0.0
    %v2671 = vmax.f32 %v2543, 0.0
    %v2672 = vmax.f32 %v2544, 0.0
    %v2673 = vmax.f32 %v2545, 0.0
    %v2674 = vmax.f32 %v2546, 0.0
    %v2675 = vpack.c.bf16 %v2551, %v2547
    %v2676 = vpack.c.bf16 %v2552, %v2548
    %v2677 = vpack.c.bf16 %v2553, %v2549
    %v2678 = vpack.c.bf16 %v2554, %v2550
    %v2679 = vpack.c.bf16 %v2559, %v2555
    %v2680 = vpack.c.bf16 %v2560, %v2556
    %v2681 = vpack.c.bf16 %v2561, %v2557
    %v2682 = vpack.c.bf16 %v2562, %v2558
    %v2683 = vpack.c.bf16 %v2567, %v2563
    %v2684 = vpack.c.bf16 %v2568, %v2564
    %v2685 = vpack.c.bf16 %v2569, %v2565
    %v2686 = vpack.c.bf16 %v2570, %v2566
    %v2687 = vpack.c.bf16 %v2575, %v2571
    %v2688 = vpack.c.bf16 %v2576, %v2572
    %v2689 = vpack.c.bf16 %v2577, %v2573
    %v2690 = vpack.c.bf16 %v2578, %v2574
    %v2691 = vpack.c.bf16 %v2583, %v2579
    %v2692 = vpack.c.bf16 %v2584, %v2580
    %v2693 = vpack.c.bf16 %v2585, %v2581
    %v2694 = vpack.c.bf16 %v2586, %v2582
    %v2695 = vpack.c.bf16 %v2591, %v2587
    %v2696 = vpack.c.bf16 %v2592, %v2588
    %v2697 = vpack.c.bf16 %v2593, %v2589
    %v2698 = vpack.c.bf16 %v2594, %v2590
    %v2699 = vpack.c.bf16 %v2599, %v2595
    %v2700 = vpack.c.bf16 %v2600, %v2596
    %v2701 = vpack.c.bf16 %v2601, %v2597
    %v2702 = vpack.c.bf16 %v2602, %v2598
    %v2703 = vpack.c.bf16 %v2607, %v2603
    %v2704 = vpack.c.bf16 %v2608, %v2604
    %v2705 = vpack.c.bf16 %v2609, %v2605
    %v2706 = vpack.c.bf16 %v2610, %v2606
    %v2707 = vpack.c.bf16 %v2615, %v2611
    %v2708 = vpack.c.bf16 %v2616, %v2612
    %v2709 = vpack.c.bf16 %v2617, %v2613
    %v2710 = vpack.c.bf16 %v2618, %v2614
    %v2711 = vpack.c.bf16 %v2623, %v2619
    %v2712 = vpack.c.bf16 %v2624, %v2620
    %v2713 = vpack.c.bf16 %v2625, %v2621
    %v2714 = vpack.c.bf16 %v2626, %v2622
    %v2715 = vpack.c.bf16 %v2631, %v2627
    %v2716 = vpack.c.bf16 %v2632, %v2628
    %v2717 = vpack.c.bf16 %v2633, %v2629
    %v2718 = vpack.c.bf16 %v2634, %v2630
    %v2719 = vpack.c.bf16 %v2639, %v2635
    %v2720 = vpack.c.bf16 %v2640, %v2636
    %v2721 = vpack.c.bf16 %v2641, %v2637
    %v2722 = vpack.c.bf16 %v2642, %v2638
    %v2723 = vpack.c.bf16 %v2647, %v2643
    %v2724 = vpack.c.bf16 %v2648, %v2644
    %v2725 = vpack.c.bf16 %v2649, %v2645
    %v2726 = vpack.c.bf16 %v2650, %v2646
    %v2727 = vpack.c.bf16 %v2655, %v2651
    %v2728 = vpack.c.bf16 %v2656, %v2652
    %v2729 = vpack.c.bf16 %v2657, %v2653
    %v2730 = vpack.c.bf16 %v2658, %v2654
    %v2731 = vpack.c.bf16 %v2663, %v2659
    %v2732 = vpack.c.bf16 %v2664, %v2660
    %v2733 = vpack.c.bf16 %v2665, %v2661
    %v2734 = vpack.c.bf16 %v2666, %v2662
    %v2735 = vpack.c.bf16 %v2671, %v2667
    %v2736 = vpack.c.bf16 %v2672, %v2668
    %v2737 = vpack.c.bf16 %v2673, %v2669
    %v2738 = vpack.c.bf16 %v2674, %v2670
    %v2803 = vunpack.c.l.b16 %v178
    %v2804 = vunpack.c.l.b16 %v179
    %v2805 = vunpack.c.l.b16 %v180
    %v2806 = vunpack.c.l.b16 %v181
    %v2807 = vunpack.c.l.b16 %v182
    %v2808 = vunpack.c.l.b16 %v183
    %v2809 = vunpack.c.l.b16 %v184
    %v2810 = vunpack.c.l.b16 %v185
    %v2811 = vunpack.c.l.b16 %v186
    %v2812 = vunpack.c.l.b16 %v187
    %v2813 = vunpack.c.l.b16 %v188
    %v2814 = vunpack.c.l.b16 %v189
    %v2815 = vunpack.c.l.b16 %v190
    %v2816 = vunpack.c.l.b16 %v191
    %v2817 = vunpack.c.l.b16 %v192
    %v2818 = vunpack.c.l.b16 %v193
    %v2819 = vunpack.c.l.b16 %v194
    %v2820 = vunpack.c.l.b16 %v195
    %v2821 = vunpack.c.l.b16 %v196
    %v2822 = vunpack.c.l.b16 %v197
    %v2823 = vunpack.c.l.b16 %v198
    %v2824 = vunpack.c.l.b16 %v199
    %v2825 = vunpack.c.l.b16 %v200
    %v2826 = vunpack.c.l.b16 %v201
    %v2827 = vunpack.c.l.b16 %v202
    %v2828 = vunpack.c.l.b16 %v203
    %v2829 = vunpack.c.l.b16 %v204
    %v2830 = vunpack.c.l.b16 %v205
    %v2831 = vunpack.c.l.b16 %v206
    %v2832 = vunpack.c.l.b16 %v207
    %v2833 = vunpack.c.l.b16 %v208
    %v2834 = vunpack.c.l.b16 %v209
    %v2835 = vunpack.c.l.b16 %v210
    %v2836 = vunpack.c.l.b16 %v211
    %v2837 = vunpack.c.l.b16 %v212
    %v2838 = vunpack.c.l.b16 %v213
    %v2839 = vunpack.c.l.b16 %v214
    %v2840 = vunpack.c.l.b16 %v215
    %v2841 = vunpack.c.l.b16 %v216
    %v2842 = vunpack.c.l.b16 %v217
    %v2843 = vunpack.c.l.b16 %v218
    %v2844 = vunpack.c.l.b16 %v219
    %v2845 = vunpack.c.l.b16 %v220
    %v2846 = vunpack.c.l.b16 %v221
    %v2847 = vunpack.c.l.b16 %v222
    %v2848 = vunpack.c.l.b16 %v223
    %v2849 = vunpack.c.l.b16 %v224
    %v2850 = vunpack.c.l.b16 %v225
    %v2851 = vunpack.c.l.b16 %v226
    %v2852 = vunpack.c.l.b16 %v227
    %v2853 = vunpack.c.l.b16 %v228
    %v2854 = vunpack.c.l.b16 %v229
    %v2855 = vunpack.c.l.b16 %v230
    %v2856 = vunpack.c.l.b16 %v231
    %v2857 = vunpack.c.l.b16 %v232
    %v2858 = vunpack.c.l.b16 %v233
    %v2859 = vunpack.c.l.b16 %v234
    %v2860 = vunpack.c.l.b16 %v235
    %v2861 = vunpack.c.l.b16 %v236
    %v2862 = vunpack.c.l.b16 %v237
    %v2863 = vunpack.c.l.b16 %v238
    %v2864 = vunpack.c.l.b16 %v239
    %v2865 = vunpack.c.l.b16 %v240
    %v2866 = vunpack.c.l.b16 %v241
    %v2867 = vpack.c.b16 %v2804, %v2803
    %v2868 = vpack.c.b16 %v2806, %v2805
    %v2869 = vpack.c.b16 %v2808, %v2807
    %v2870 = vpack.c.b16 %v2810, %v2809
    %v2871 = vpack.c.b16 %v2812, %v2811
    %v2872 = vpack.c.b16 %v2814, %v2813
    %v2873 = vpack.c.b16 %v2816, %v2815
    %v2874 = vpack.c.b16 %v2818, %v2817
    %v2875 = vpack.c.b16 %v2820, %v2819
    %v2876 = vpack.c.b16 %v2822, %v2821
    %v2877 = vpack.c.b16 %v2824, %v2823
    %v2878 = vpack.c.b16 %v2826, %v2825
    %v2879 = vpack.c.b16 %v2828, %v2827
    %v2880 = vpack.c.b16 %v2830, %v2829
    %v2881 = vpack.c.b16 %v2832, %v2831
    %v2882 = vpack.c.b16 %v2834, %v2833
    %v2883 = vpack.c.b16 %v2836, %v2835
    %v2884 = vpack.c.b16 %v2838, %v2837
    %v2885 = vpack.c.b16 %v2840, %v2839
    %v2886 = vpack.c.b16 %v2842, %v2841
    %v2887 = vpack.c.b16 %v2844, %v2843
    %v2888 = vpack.c.b16 %v2846, %v2845
    %v2889 = vpack.c.b16 %v2848, %v2847
    %v2890 = vpack.c.b16 %v2850, %v2849
    %v2891 = vpack.c.b16 %v2852, %v2851
    %v2892 = vpack.c.b16 %v2854, %v2853
    %v2893 = vpack.c.b16 %v2856, %v2855
    %v2894 = vpack.c.b16 %v2858, %v2857
    %v2895 = vpack.c.b16 %v2860, %v2859
    %v2896 = vpack.c.b16 %v2862, %v2861
    %v2897 = vpack.c.b16 %v2864, %v2863
    %v2898 = vpack.c.b16 %v2866, %v2865
    %2931 = vmatprep.subr.bf16.mxu0 0
    %2932 = vmatpush1.bf16.msra.mxu0 %v2867
    %2933 = vmatprep.subr.bf16.mxu0 0
    %2934 = vmatpush1.bf16.msra.mxu0 %v2868
    %2935 = vmatprep.subr.bf16.mxu0 0
    %2936 = vmatpush1.bf16.msra.mxu0 %v2869
    %2937 = vmatprep.subr.bf16.mxu0 0
    %2938 = vmatpush1.bf16.msra.mxu0 %v2870
    %2939 = vmatprep.subr.bf16.mxu0 0
    %2940 = vmatpush1.bf16.msra.mxu0 %v2871
    %2941 = vmatprep.subr.bf16.mxu0 0
    %2942 = vmatpush1.bf16.msra.mxu0 %v2872
    %2943 = vmatprep.subr.bf16.mxu0 0
    %2944 = vmatpush1.bf16.msra.mxu0 %v2873
    %2945 = vmatprep.subr.bf16.mxu0 0
    %2946 = vmatpush1.bf16.msra.mxu0 %v2874
    %2947 = vmatprep.subr.bf16.mxu0 0
    %2948 = vmatpush1.bf16.msra.mxu0 %v2875
    %2949 = vmatprep.subr.bf16.mxu0 0
    %2950 = vmatpush1.bf16.msra.mxu0 %v2876
    %2951 = vmatprep.subr.bf16.mxu0 0
    %2952 = vmatpush1.bf16.msra.mxu0 %v2877
    %2953 = vmatprep.subr.bf16.mxu0 0
    %2954 = vmatpush1.bf16.msra.mxu0 %v2878
    %2955 = vmatprep.subr.bf16.mxu0 0
    %2956 = vmatpush1.bf16.msra.mxu0 %v2879
    %2957 = vmatprep.subr.bf16.mxu0 0
    %2958 = vmatpush1.bf16.msra.mxu0 %v2880
    %2959 = vmatprep.subr.bf16.mxu0 0
    %2960 = vmatpush1.bf16.msra.mxu0 %v2881
    %2961 = vmatprep.subr.bf16.mxu0 0
    %2962 = vmatpush1.bf16.msra.mxu0 %v2882
    %2963 = vmatprep.mubr.bf16.mxu0 %v2676
    %2964 = vmatmul.mubr.bf16.gmra.mrb[0].mxu0 %v2675
    %v2965 = vpop.f32.mrb[0].mxu0
    %v2966 = vadd.f32 0.0, %v2965
    %v2967 = vpop.f32.mrb[0].mxu0
    %v2968 = vpop.f32.mrb[0].mxu0
    %v2969 = vadd.f32 0.0, %v2968
    %v2970 = vpop.f32.mrb[0].mxu0
    %2971 = vmatprep.mubr.bf16.mxu0 %v2680
    %2972 = vmatmul.mubr.bf16.gmra.mrb[0].mxu0 %v2679
    %v2973 = vpop.f32.mrb[0].mxu0
    %v2974 = vadd.f32 0.0, %v2973
    %v2975 = vpop.f32.mrb[0].mxu0
    %v2976 = vpop.f32.mrb[0].mxu0
    %v2977 = vadd.f32 0.0, %v2976
    %v2978 = vpop.f32.mrb[0].mxu0
    %2979 = vmatprep.mubr.bf16.mxu0 %v2684
    %2980 = vmatmul.mubr.bf16.gmra.mrb[0].mxu0 %v2683
    %v2981 = vpop.f32.mrb[0].mxu0
    %v2982 = vadd.f32 0.0, %v2981
    %v2983 = vpop.f32.mrb[0].mxu0
    %v2984 = vpop.f32.mrb[0].mxu0
    %v2985 = vadd.f32 0.0, %v2984
    %v2986 = vpop.f32.mrb[0].mxu0
    %2987 = vmatprep.mubr.bf16.mxu0 %v2688
    %2988 = vmatmul.mubr.bf16.gmra.mrb[0].mxu0 %v2687
    %v2989 = vpop.f32.mrb[0].mxu0
    %v2990 = vadd.f32 0.0, %v2989
    %v2991 = vpop.f32.mrb[0].mxu0
    %v2992 = vpop.f32.mrb[0].mxu0
    %v2993 = vadd.f32 0.0, %v2992
    %v2994 = vpop.f32.mrb[0].mxu0
    %2995 = vmatprep.mubr.bf16.mxu0 %v2692
    %2996 = vmatmul.mubr.bf16.gmra.mrb[0].mxu0 %v2691
    %v2997 = vpop.f32.mrb[0].mxu0
    %v2998 = vadd.f32 0.0, %v2997
    %v2999 = vpop.f32.mrb[0].mxu0
    %v3000 = vpop.f32.mrb[0].mxu0
    %v3001 = vadd.f32 0.0, %v3000
    %v3002 = vpop.f32.mrb[0].mxu0
    %3003 = vmatprep.mubr.bf16.mxu0 %v2696
    %3004 = vmatmul.mubr.bf16.gmra.mrb[0].mxu0 %v2695
    %v3005 = vpop.f32.mrb[0].mxu0
    %v3006 = vadd.f32 0.0, %v3005
    %v3007 = vpop.f32.mrb[0].mxu0
    %v3008 = vpop.f32.mrb[0].mxu0
    %v3009 = vadd.f32 0.0, %v3008
    %v3010 = vpop.f32.mrb[0].mxu0
    %3011 = vmatprep.mubr.bf16.mxu0 %v2700
    %3012 = vmatmul.mubr.bf16.gmra.mrb[0].mxu0 %v2699
    %v3013 = vpop.f32.mrb[0].mxu0
    %v3014 = vadd.f32 0.0, %v3013
    %v3015 = vpop.f32.mrb[0].mxu0
    %v3016 = vpop.f32.mrb[0].mxu0
    %v3017 = vadd.f32 0.0, %v3016
    %v3018 = vpop.f32.mrb[0].mxu0
    %3019 = vmatprep.mubr.bf16.mxu0 %v2704
    %3020 = vmatmul.mubr.bf16.gmra.mrb[0].mxu0 %v2703
    %v3021 = vpop.f32.mrb[0].mxu0
    %v3022 = vadd.f32 0.0, %v3021
    %v3023 = vpop.f32.mrb[0].mxu0
    %v3024 = vpop.f32.mrb[0].mxu0
    %v3025 = vadd.f32 0.0, %v3024
    %v3026 = vpop.f32.mrb[0].mxu0
    %3027 = vmatprep.mubr.bf16.mxu0 %v2708
    %3028 = vmatmul.mubr.bf16.gmra.mrb[0].mxu0 %v2707
    %v3029 = vpop.f32.mrb[0].mxu0
    %v3030 = vadd.f32 0.0, %v3029
    %v3031 = vpop.f32.mrb[0].mxu0
    %v3032 = vpop.f32.mrb[0].mxu0
    %v3033 = vadd.f32 0.0, %v3032
    %v3034 = vpop.f32.mrb[0].mxu0
    %3035 = vmatprep.mubr.bf16.mxu0 %v2712
    %3036 = vmatmul.mubr.bf16.gmra.mrb[0].mxu0 %v2711
    %v3037 = vpop.f32.mrb[0].mxu0
    %v3038 = vadd.f32 0.0, %v3037
    %v3039 = vpop.f32.mrb[0].mxu0
    %v3040 = vpop.f32.mrb[0].mxu0
    %v3041 = vadd.f32 0.0, %v3040
    %v3042 = vpop.f32.mrb[0].mxu0
    %3043 = vmatprep.mubr.bf16.mxu0 %v2716
    %3044 = vmatmul.mubr.bf16.gmra.mrb[0].mxu0 %v2715
    %v3045 = vpop.f32.mrb[0].mxu0
    %v3046 = vadd.f32 0.0, %v3045
    %v3047 = vpop.f32.mrb[0].mxu0
    %v3048 = vpop.f32.mrb[0].mxu0
    %v3049 = vadd.f32 0.0, %v3048
    %v3050 = vpop.f32.mrb[0].mxu0
    %3051 = vmatprep.mubr.bf16.mxu0 %v2720
    %3052 = vmatmul.mubr.bf16.gmra.mrb[0].mxu0 %v2719
    %v3053 = vpop.f32.mrb[0].mxu0
    %v3054 = vadd.f32 0.0, %v3053
    %v3055 = vpop.f32.mrb[0].mxu0
    %v3056 = vpop.f32.mrb[0].mxu0
    %v3057 = vadd.f32 0.0, %v3056
    %v3058 = vpop.f32.mrb[0].mxu0
    %3059 = vmatprep.mubr.bf16.mxu0 %v2724
    %3060 = vmatmul.mubr.bf16.gmra.mrb[0].mxu0 %v2723
    %v3061 = vpop.f32.mrb[0].mxu0
    %v3062 = vadd.f32 0.0, %v3061
    %v3063 = vpop.f32.mrb[0].mxu0
    %v3064 = vpop.f32.mrb[0].mxu0
    %v3065 = vadd.f32 0.0, %v3064
    %v3066 = vpop.f32.mrb[0].mxu0
    %3067 = vmatprep.mubr.bf16.mxu0 %v2728
    %3068 = vmatmul.mubr.bf16.gmra.mrb[0].mxu0 %v2727
    %v3069 = vpop.f32.mrb[0].mxu0
    %v3070 = vadd.f32 0.0, %v3069
    %v3071 = vpop.f32.mrb[0].mxu0
    %v3072 = vpop.f32.mrb[0].mxu0
    %v3073 = vadd.f32 0.0, %v3072
    %v3074 = vpop.f32.mrb[0].mxu0
    %3075 = vmatprep.mubr.bf16.mxu0 %v2732
    %3076 = vmatmul.mubr.bf16.gmra.mrb[0].mxu0 %v2731
    %v3077 = vpop.f32.mrb[0].mxu0
    %v3078 = vadd.f32 0.0, %v3077
    %v3079 = vpop.f32.mrb[0].mxu0
    %v3080 = vpop.f32.mrb[0].mxu0
    %v3081 = vadd.f32 0.0, %v3080
    %v3082 = vpop.f32.mrb[0].mxu0
    %3083 = vmatprep.mubr.bf16.mxu0 %v2736
    %3084 = vmatmul.mubr.bf16.gmra.mrb[0].mxu0 %v2735
    %v3085 = vpop.f32.mrb[0].mxu0
    %v3086 = vadd.f32 0.0, %v3085
    %v3087 = vpop.f32.mrb[0].mxu0
    %v3088 = vpop.f32.mrb[0].mxu0
    %v3089 = vadd.f32 0.0, %v3088
    %v3090 = vpop.f32.mrb[0].mxu0
    %3091 = vdwg.mxu0
    %3092 = vmatprep.subr.bf16.mxu0 0
    %3093 = vmatpush1.bf16.msra.mxu0 %v2883
    %3094 = vmatprep.subr.bf16.mxu0 0
    %3095 = vmatpush1.bf16.msra.mxu0 %v2884
    %3096 = vmatprep.subr.bf16.mxu0 0
    %3097 = vmatpush1.bf16.msra.mxu0 %v2885
    %3098 = vmatprep.subr.bf16.mxu0 0
    %3099 = vmatpush1.bf16.msra.mxu0 %v2886
    %3100 = vmatprep.subr.bf16.mxu0 0
    %3101 = vmatpush1.bf16.msra.mxu0 %v2887
    %3102 = vmatprep.subr.bf16.mxu0 0
    %3103 = vmatpush1.bf16.msra.mxu0 %v2888
    %3104 = vmatprep.subr.bf16.mxu0 0
    %3105 = vmatpush1.bf16.msra.mxu0 %v2889
    %3106 = vmatprep.subr.bf16.mxu0 0
    %3107 = vmatpush1.bf16.msra.mxu0 %v2890
    %3108 = vmatprep.subr.bf16.mxu0 0
    %3109 = vmatpush1.bf16.msra.mxu0 %v2891
    %3110 = vmatprep.subr.bf16.mxu0 0
    %3111 = vmatpush1.bf16.msra.mxu0 %v2892
    %3112 = vmatprep.subr.bf16.mxu0 0
    %3113 = vmatpush1.bf16.msra.mxu0 %v2893
    %3114 = vmatprep.subr.bf16.mxu0 0
    %3115 = vmatpush1.bf16.msra.mxu0 %v2894
    %3116 = vmatprep.subr.bf16.mxu0 0
    %3117 = vmatpush1.bf16.msra.mxu0 %v2895
    %3118 = vmatprep.subr.bf16.mxu0 0
    %3119 = vmatpush1.bf16.msra.mxu0 %v2896
    %3120 = vmatprep.subr.bf16.mxu0 0
    %3121 = vmatpush1.bf16.msra.mxu0 %v2897
    %3122 = vmatprep.subr.bf16.mxu0 0
    %3123 = vmatpush1.bf16.msra.mxu0 %v2898
    %3124 = vmatprep.mubr.bf16.mxu0 %v2678
    %3125 = vmatmul.mubr.bf16.gmra.mrb[0].mxu0 %v2677
    %v3126 = vpop.f32.mrb[0].mxu0
    %v3127 = vadd.f32 %v2966, %v3126
    %v3128 = vpop.f32.mrb[0].mxu0
    %v3129 = vpop.f32.mrb[0].mxu0
    %v3130 = vadd.f32 %v2969, %v3129
    %v3131 = vpop.f32.mrb[0].mxu0
    %3132 = vmatprep.mubr.bf16.mxu0 %v2682
    %3133 = vmatmul.mubr.bf16.gmra.mrb[0].mxu0 %v2681
    %v3134 = vpop.f32.mrb[0].mxu0
    %v3135 = vadd.f32 %v2974, %v3134
    %v3136 = vpop.f32.mrb[0].mxu0
    %v3137 = vpop.f32.mrb[0].mxu0
    %v3138 = vadd.f32 %v2977, %v3137
    %v3139 = vpop.f32.mrb[0].mxu0
    %3140 = vmatprep.mubr.bf16.mxu0 %v2686
    %3141 = vmatmul.mubr.bf16.gmra.mrb[0].mxu0 %v2685
    %v3142 = vpop.f32.mrb[0].mxu0
    %v3143 = vadd.f32 %v2982, %v3142
    %v3144 = vpop.f32.mrb[0].mxu0
    %v3145 = vpop.f32.mrb[0].mxu0
    %v3146 = vadd.f32 %v2985, %v3145
    %v3147 = vpop.f32.mrb[0].mxu0
    %3148 = vmatprep.mubr.bf16.mxu0 %v2690
    %3149 = vmatmul.mubr.bf16.gmra.mrb[0].mxu0 %v2689
    %v3150 = vpop.f32.mrb[0].mxu0
    %v3151 = vadd.f32 %v2990, %v3150
    %v3152 = vpop.f32.mrb[0].mxu0
    %v3153 = vpop.f32.mrb[0].mxu0
    %v3154 = vadd.f32 %v2993, %v3153
    %v3155 = vpop.f32.mrb[0].mxu0
    %3156 = vmatprep.mubr.bf16.mxu0 %v2694
    %3157 = vmatmul.mubr.bf16.gmra.mrb[0].mxu0 %v2693
    %v3158 = vpop.f32.mrb[0].mxu0
    %v3159 = vadd.f32 %v2998, %v3158
    %v3160 = vpop.f32.mrb[0].mxu0
    %v3161 = vpop.f32.mrb[0].mxu0
    %v3162 = vadd.f32 %v3001, %v3161
    %v3163 = vpop.f32.mrb[0].mxu0
    %3164 = vmatprep.mubr.bf16.mxu0 %v2698
    %3165 = vmatmul.mubr.bf16.gmra.mrb[0].mxu0 %v2697
    %v3166 = vpop.f32.mrb[0].mxu0
    %v3167 = vadd.f32 %v3006, %v3166
    %v3168 = vpop.f32.mrb[0].mxu0
    %v3169 = vpop.f32.mrb[0].mxu0
    %v3170 = vadd.f32 %v3009, %v3169
    %v3171 = vpop.f32.mrb[0].mxu0
    %3172 = vmatprep.mubr.bf16.mxu0 %v2702
    %3173 = vmatmul.mubr.bf16.gmra.mrb[0].mxu0 %v2701
    %v3174 = vpop.f32.mrb[0].mxu0
    %v3175 = vadd.f32 %v3014, %v3174
    %v3176 = vpop.f32.mrb[0].mxu0
    %v3177 = vpop.f32.mrb[0].mxu0
    %v3178 = vadd.f32 %v3017, %v3177
    %v3179 = vpop.f32.mrb[0].mxu0
    %3180 = vmatprep.mubr.bf16.mxu0 %v2706
    %3181 = vmatmul.mubr.bf16.gmra.mrb[0].mxu0 %v2705
    %v3182 = vpop.f32.mrb[0].mxu0
    %v3183 = vadd.f32 %v3022, %v3182
    %v3184 = vpop.f32.mrb[0].mxu0
    %v3185 = vpop.f32.mrb[0].mxu0
    %v3186 = vadd.f32 %v3025, %v3185
    %v3187 = vpop.f32.mrb[0].mxu0
    %3188 = vmatprep.mubr.bf16.mxu0 %v2710
    %3189 = vmatmul.mubr.bf16.gmra.mrb[0].mxu0 %v2709
    %v3190 = vpop.f32.mrb[0].mxu0
    %v3191 = vadd.f32 %v3030, %v3190
    %v3192 = vpop.f32.mrb[0].mxu0
    %v3193 = vpop.f32.mrb[0].mxu0
    %v3194 = vadd.f32 %v3033, %v3193
    %v3195 = vpop.f32.mrb[0].mxu0
    %3196 = vmatprep.mubr.bf16.mxu0 %v2714
    %3197 = vmatmul.mubr.bf16.gmra.mrb[0].mxu0 %v2713
    %v3198 = vpop.f32.mrb[0].mxu0
    %v3199 = vadd.f32 %v3038, %v3198
    %v3200 = vpop.f32.mrb[0].mxu0
    %v3201 = vpop.f32.mrb[0].mxu0
    %v3202 = vadd.f32 %v3041, %v3201
    %v3203 = vpop.f32.mrb[0].mxu0
    %3204 = vmatprep.mubr.bf16.mxu0 %v2718
    %3205 = vmatmul.mubr.bf16.gmra.mrb[0].mxu0 %v2717
    %v3206 = vpop.f32.mrb[0].mxu0
    %v3207 = vadd.f32 %v3046, %v3206
    %v3208 = vpop.f32.mrb[0].mxu0
    %v3209 = vpop.f32.mrb[0].mxu0
    %v3210 = vadd.f32 %v3049, %v3209
    %v3211 = vpop.f32.mrb[0].mxu0
    %3212 = vmatprep.mubr.bf16.mxu0 %v2722
    %3213 = vmatmul.mubr.bf16.gmra.mrb[0].mxu0 %v2721
    %v3214 = vpop.f32.mrb[0].mxu0
    %v3215 = vadd.f32 %v3054, %v3214
    %v3216 = vpop.f32.mrb[0].mxu0
    %v3217 = vpop.f32.mrb[0].mxu0
    %v3218 = vadd.f32 %v3057, %v3217
    %v3219 = vpop.f32.mrb[0].mxu0
    %3220 = vmatprep.mubr.bf16.mxu0 %v2726
    %3221 = vmatmul.mubr.bf16.gmra.mrb[0].mxu0 %v2725
    %v3222 = vpop.f32.mrb[0].mxu0
    %v3223 = vadd.f32 %v3062, %v3222
    %v3224 = vpop.f32.mrb[0].mxu0
    %v3225 = vpop.f32.mrb[0].mxu0
    %v3226 = vadd.f32 %v3065, %v3225
    %v3227 = vpop.f32.mrb[0].mxu0
    %3228 = vmatprep.mubr.bf16.mxu0 %v2730
    %3229 = vmatmul.mubr.bf16.gmra.mrb[0].mxu0 %v2729
    %v3230 = vpop.f32.mrb[0].mxu0
    %v3231 = vadd.f32 %v3070, %v3230
    %v3232 = vpop.f32.mrb[0].mxu0
    %v3233 = vpop.f32.mrb[0].mxu0
    %v3234 = vadd.f32 %v3073, %v3233
    %v3235 = vpop.f32.mrb[0].mxu0
    %3236 = vmatprep.mubr.bf16.mxu0 %v2734
    %3237 = vmatmul.mubr.bf16.gmra.mrb[0].mxu0 %v2733
    %v3238 = vpop.f32.mrb[0].mxu0
    %v3239 = vadd.f32 %v3078, %v3238
    %v3240 = vpop.f32.mrb[0].mxu0
    %v3241 = vpop.f32.mrb[0].mxu0
    %v3242 = vadd.f32 %v3081, %v3241
    %v3243 = vpop.f32.mrb[0].mxu0
    %3244 = vmatprep.mubr.bf16.mxu0 %v2738
    %3245 = vmatmul.mubr.bf16.gmra.mrb[0].mxu0 %v2737
    %v3246 = vpop.f32.mrb[0].mxu0
    %v3247 = vadd.f32 %v3086, %v3246
    %v3248 = vpop.f32.mrb[0].mxu0
    %v3249 = vpop.f32.mrb[0].mxu0
    %v3250 = vadd.f32 %v3089, %v3249
    %v3251 = vpop.f32.mrb[0].mxu0
    %3252 = vdwg.mxu0
    %v3253 = vmax.f32 %v3127, %v3130
    %v3254 = vmax.f32 %v3253, %v3135
    %v3255 = vmax.f32 %v3254, %v3138
    %v3256 = vrot.slane %v3255, 4
    %v3257 = vmax.f32 %v3255, %v3256
    %v3258 = vrot.slane %v3257, 2
    %v3259 = vmax.f32 %v3257, %v3258
    %v3260 = vrot.slane %v3259, 1
    %v3261 = vmax.f32 %v3259, %v3260
    %v3262 = vmax.f32 %v3143, %v3146
    %v3263 = vmax.f32 %v3262, %v3151
    %v3264 = vmax.f32 %v3263, %v3154
    %v3265 = vrot.slane %v3264, 4
    %v3266 = vmax.f32 %v3264, %v3265
    %v3267 = vrot.slane %v3266, 2
    %v3268 = vmax.f32 %v3266, %v3267
    %v3269 = vrot.slane %v3268, 1
    %v3270 = vmax.f32 %v3268, %v3269
    %v3271 = vmax.f32 %v3159, %v3162
    %v3272 = vmax.f32 %v3271, %v3167
    %v3273 = vmax.f32 %v3272, %v3170
    %v3274 = vrot.slane %v3273, 4
    %v3275 = vmax.f32 %v3273, %v3274
    %v3276 = vrot.slane %v3275, 2
    %v3277 = vmax.f32 %v3275, %v3276
    %v3278 = vrot.slane %v3277, 1
    %v3279 = vmax.f32 %v3277, %v3278
    %v3280 = vmax.f32 %v3175, %v3178
    %v3281 = vmax.f32 %v3280, %v3183
    %v3282 = vmax.f32 %v3281, %v3186
    %v3283 = vrot.slane %v3282, 4
    %v3284 = vmax.f32 %v3282, %v3283
    %v3285 = vrot.slane %v3284, 2
    %v3286 = vmax.f32 %v3284, %v3285
    %v3287 = vrot.slane %v3286, 1
    %v3288 = vmax.f32 %v3286, %v3287
    %v3289 = vmax.f32 %v3191, %v3194
    %v3290 = vmax.f32 %v3289, %v3199
    %v3291 = vmax.f32 %v3290, %v3202
    %v3292 = vrot.slane %v3291, 4
    %v3293 = vmax.f32 %v3291, %v3292
    %v3294 = vrot.slane %v3293, 2
    %v3295 = vmax.f32 %v3293, %v3294
    %v3296 = vrot.slane %v3295, 1
    %v3297 = vmax.f32 %v3295, %v3296
    %v3298 = vmax.f32 %v3207, %v3210
    %v3299 = vmax.f32 %v3298, %v3215
    %v3300 = vmax.f32 %v3299, %v3218
    %v3301 = vrot.slane %v3300, 4
    %v3302 = vmax.f32 %v3300, %v3301
    %v3303 = vrot.slane %v3302, 2
    %v3304 = vmax.f32 %v3302, %v3303
    %v3305 = vrot.slane %v3304, 1
    %v3306 = vmax.f32 %v3304, %v3305
    %v3307 = vmax.f32 %v3223, %v3226
    %v3308 = vmax.f32 %v3307, %v3231
    %v3309 = vmax.f32 %v3308, %v3234
    %v3310 = vrot.slane %v3309, 4
    %v3311 = vmax.f32 %v3309, %v3310
    %v3312 = vrot.slane %v3311, 2
    %v3313 = vmax.f32 %v3311, %v3312
    %v3314 = vrot.slane %v3313, 1
    %v3315 = vmax.f32 %v3313, %v3314
    %v3316 = vmax.f32 %v3239, %v3242
    %v3317 = vmax.f32 %v3316, %v3247
    %v3318 = vmax.f32 %v3317, %v3250
    %v3319 = vrot.slane %v3318, 4
    %v3320 = vmax.f32 %v3318, %v3319
    %v3321 = vrot.slane %v3320, 2
    %v3322 = vmax.f32 %v3320, %v3321
    %v3323 = vrot.slane %v3322, 1
    %v3324 = vmax.f32 %v3322, %v3323
    %v3326 = vlaneseq
    %v3327 = vshrl.u32 %v3326, 7
    %v3328 = vsub.s32 0, %v3327
    %v3329 = vrot.slane %v242, %v3328
    %v3331 = vadd.f32 %v3261, %v3329
    %v3332 = vadd.f32 %v3270, %v3329
    %v3333 = vadd.f32 %v3279, %v3329
    %v3334 = vadd.f32 %v3288, %v3329
    %v3335 = vadd.f32 %v3297, %v3329
    %v3336 = vadd.f32 %v3306, %v3329
    %v3337 = vadd.f32 %v3315, %v3329
    %v3338 = vadd.f32 %v3324, %v3329
    %v3347 = vrot.slane %v3332, 7
    %v3348 = vsel %vm1598, %v3347, %v3331
    %v3349 = vrot.slane %v3333, 6
    %v3350 = vsel %vm1601, %v3349, %v3348
    %v3351 = vrot.slane %v3334, 5
    %v3352 = vsel %vm1604, %v3351, %v3350
    %v3353 = vrot.slane %v3335, 4
    %v3354 = vsel %vm1607, %v3353, %v3352
    %v3355 = vrot.slane %v3336, 3
    %v3356 = vsel %vm1610, %v3355, %v3354
    %v3357 = vrot.slane %v3337, 2
    %v3358 = vsel %vm1613, %v3357, %v3356
    %v3359 = vrot.slane %v3338, 1
    %v3360 = vsel %vm1616, %v3359, %v3358
    %3362 = vst [vmem:[#allocation7] sm:$0xff] %v3360
    // Predicated region
    $region46: #{tpu_custom_call.1} parent=1 // pred_check
      _
    $region47: #{tpu_custom_call.1} parent=1 // pred_check_branch
      %3364 = sbr.rel (0) target = $region49
    $region48: #{tpu_custom_call.1} parent=1 // pred_region
      %s3366 = ssub.s32 128, 128
      %3367 = vsyncadd [#allocation4], %s3366
      %s3369 = sshll.u32 [#allocation7], 4
      %s3370 = int_to_ptr.vmem [resolvable:$true] %s3369
      %3372 = dma.vmem_to_hbm [thread:$0]  %s3370, 128, %s9, [#allocation4]
    $region49: #{tpu_custom_call.1} parent=1 // pred_fallthru
      _
    // Predicated region
    $region50: #{tpu_custom_call.1} parent=1 // pred_check
      _
    $region51: #{tpu_custom_call.1} parent=1 // pred_check_branch
      %3374 = sbr.rel (0) target = $region53
    $region52: #{tpu_custom_call.1} parent=1 // pred_region
      %3375 = dma.done [#allocation4], 128
    $region53: #{tpu_custom_call.1} parent=1 // pred_fallthru
      _
    %3376 = vsyncpa [#allocation3], 1
    %3377 = vsyncpa [#allocation6], 1
    %3378 = vsyncpa [#allocation4], 1

</llo_original>
